<compile_context>
chip_gen: v7x
topology: tpu7x:2x2x1
jax: 0.10.0
libtpu: 0.0.40
codegen_flags: <defaults>
</compile_context>

<pallas_src>
import functools

import jax
import jax.numpy as jnp
from jax import lax
from jax.experimental import pallas as pl
from jax.experimental.pallas import tpu as pltpu


def _round_up(x, m):
    return (x + m - 1) // m * m


def _cdiv(a, b):
    return (a + b - 1) // b


# ---------------------------------------------------------------------------
# Kernel body
# ---------------------------------------------------------------------------
def _mlp_kernel(x_ref, wg_ref, wu_ref, wd_ref, o_ref, acc_ref):
    """One (split s, row-tile i, intermediate-tile k) grid step.

    Grid = (n_split, n_row, nk_sub); k (intermediate axis) is the reduction
    axis ("arbitrary", last).  The (tm, H) output tile stays resident in the
    f32 VMEM accumulator across the k sweep and is written once at the end.
    """
    k = pl.program_id(2)

    @pl.when(k == 0)
    def _init():
        acc_ref[...] = jnp.zeros_like(acc_ref)

    # f32 inputs need full-precision MXU passes; bf16 is native (single pass).
    prec = lax.Precision.HIGHEST if x_ref.dtype == jnp.float32 else None

    x = x_ref[...]                                                    # (tm, H)
    gate = jnp.dot(x, wg_ref[...], precision=prec,
                   preferred_element_type=jnp.float32)                # (tm, ti)
    up = jnp.dot(x, wu_ref[...], precision=prec,
                 preferred_element_type=jnp.float32)                  # (tm, ti)
    h = (gate * jax.nn.sigmoid(gate)) * up                            # SiLU(gate)*up, f32
    acc_ref[...] += jnp.dot(h.astype(wd_ref.dtype), wd_ref[...],
                            precision=prec,
                            preferred_element_type=jnp.float32)       # (tm, H)

    @pl.when(k == pl.num_programs(2) - 1)
    def _store():
        o_ref[...] = acc_ref[...].astype(o_ref.dtype)


# ---------------------------------------------------------------------------
# Per-chip sizing
# ---------------------------------------------------------------------------
def _chip_config():
    """(tm, ti, usable-VMEM-bytes) defaults keyed off the device generation.

    tm is sized so the weight stream (re-read once per row tile) does not
    bound the MXU:
      v5e ~197 TF/s / 0.82 TB/s -> ~240 FLOPs/byte -> tm ~512
      v6e ~918 TF/s / 1.3  TB/s -> ~700 FLOPs/byte -> tm ~1024
      v7x ~996 TF/s / 1.6  TB/s -> ~620 FLOPs/byte -> tm ~768 (64 MiB VMEM/TC)
    """
    kind = ""
    try:
        kind = jax.devices()[0].device_kind.lower()
    except Exception:
        pass
    if "v7" in kind:
        return 768, 256, 58 * 1024 * 1024
    if "v6" in kind:
        return 1024, 512, 110 * 1024 * 1024
    if "v5" in kind:
        return 512, 512, 110 * 1024 * 1024
    # Unknown generation: conservative sizes that fit a 64 MiB VMEM.
    return 512, 256, 58 * 1024 * 1024


def _vmem_bytes(tm, ti, H, a_isz, w_isz):
    """Estimated VMEM footprint of one pipelined grid step (incl. temporaries)."""
    return (2 * tm * H * a_isz            # x tile, double-buffered
            + 2 * 2 * H * ti * w_isz      # gate + up weight tiles, double-buffered
            + 2 * ti * H * w_isz          # down weight tile, double-buffered
            + 2 * tm * H * a_isz          # output tile, double-buffered
            + tm * H * 4                  # resident f32 accumulator scratch
            + tm * ti * (3 * 4 + w_isz)   # f32 gate/up/h temporaries + h cast
            + (2 << 20))                  # compiler-internal scratch headroom


def _pick_tiles(M, H, I, a_isz, w_isz, tm, ti, vmem_cap):
    # Row tile: multiple of 16 (full bf16 sublane packing), never larger than
    # M rounded up to 16.
    tm = max(16, min(_round_up(tm, 16), _round_up(M, 16)))
    # Intermediate tile: multiple of 256 (256-wide MXU).  Prefer a value that
    # divides I exactly so the weights never need a per-call padding copy.
    if I >= 256:
        ti_max = max(256, min(_round_up(ti, 256), _round_up(I, 256)))
        ti = ti_max
        t = ti_max
        while t >= 256:
            if I % t == 0:
                ti = t
                break
            t -= 256
    else:
        ti = _round_up(I, 128)
    # Shrink until the estimate fits the chip's usable VMEM: tm first (costs
    # only re-streamed weights), then ti.
    while tm > 16 and _vmem_bytes(tm, ti, H, a_isz, w_isz) > vmem_cap:
        tm = max(16, _round_up(tm // 2, 16))
    while ti > 256 and _vmem_bytes(tm, ti, H, a_isz, w_isz) > vmem_cap:
        ti = max(256, _round_up(ti // 2, 256))
    return tm, ti


# ---------------------------------------------------------------------------
# pallas_call wrapper
# ---------------------------------------------------------------------------
@functools.partial(jax.jit, static_argnames=("tm", "ti", "n_split", "vmem_cap"))
def _mlp_call(x2, w_gate, w_up, w_down, *, tm, ti, n_split, vmem_cap):
    M, H = x2.shape
    I = w_gate.shape[1]

    # Pad I to a multiple of ti * n_split (no-op for standard Llama sizes since
    # _pick_tiles prefers ti | I).  Zero columns/rows contribute
    # silu(0) * 0 = 0 to the down projection, so the result is exact.
    I_pad = _round_up(I, ti * n_split)
    if I_pad != I:
        w_gate = jnp.pad(w_gate, ((0, 0), (0, I_pad - I)))
        w_up = jnp.pad(w_up, ((0, 0), (0, I_pad - I)))
        w_down = jnp.pad(w_down, ((0, I_pad - I), (0, 0)))
    nk = I_pad // ti
    nk_sub = nk // n_split
    n_row = _cdiv(M, tm)   # last row tile may be ragged; OOB rows are dropped

    a_isz = jnp.dtype(x2.dtype).itemsize
    w_isz = jnp.dtype(w_gate.dtype).itemsize
    cost = pl.CostEstimate(
        flops=6 * M * H * I_pad,                        # 3 matmuls
        transcendentals=M * I_pad,                      # sigmoid
        bytes_accessed=((1 + n_split) * M * H * a_isz   # x read + partial outs
                        + n_row * 3 * H * I_pad * w_isz),
    )

    # If a profile shows exposed weight DMA on v5e/v6e at large tm, the three
    # weight BlockSpecs can take pipeline_mode=pl.Buffered(3) (skip on v7x).
    out = pl.pallas_call(
        _mlp_kernel,
        out_shape=jax.ShapeDtypeStruct((n_split, M, H), x2.dtype),
        grid_spec=pltpu.PrefetchScalarGridSpec(
            num_scalar_prefetch=0,
            grid=(n_split, n_row, nk_sub),
            in_specs=[
                pl.BlockSpec((tm, H), lambda s, i, k: (i, 0)),               # x rows
                pl.BlockSpec((H, ti), lambda s, i, k: (0, s * nk_sub + k)),  # gate w
                pl.BlockSpec((H, ti), lambda s, i, k: (0, s * nk_sub + k)),  # up w
                pl.BlockSpec((ti, H), lambda s, i, k: (s * nk_sub + k, 0)),  # down w
            ],
            out_specs=pl.BlockSpec((None, tm, H), lambda s, i, k: (s, i, 0)),
            scratch_shapes=[pltpu.VMEM((tm, H), jnp.float32)],
        ),
        compiler_params=pltpu.CompilerParams(
            dimension_semantics=("parallel", "parallel", "arbitrary"),
            vmem_limit_bytes=int(vmem_cap)),
        cost_estimate=cost,
    )(x2, w_gate, w_up, w_down)

    if n_split == 1:
        return out[0]
    # Sum the per-split partial outputs (only taken when M <= tm, so cheap).
    return out.astype(jnp.float32).sum(axis=0).astype(x2.dtype)


def llama_mlp(x, w_gate, w_up, w_down, *, tm=None, ti=None, n_split=None):
    """x: [B, S, H]; w_gate/w_up: [H, I]; w_down: [I, H]  ->  [B, S, H].

    tm / ti / n_split default to per-chip values (see _chip_config); override
    for tuning.  n_split > 1 splits the reduction across a leading "parallel"
    grid axis (decode-sized M on multi-TensorCore chips such as v7x).
    """
    B, S, H = x.shape
    I = w_gate.shape[1]
    M = B * S

    tm_d, ti_d, vmem_cap = _chip_config()
    tm = tm_d if tm is None else tm
    ti = ti_d if ti is None else ti
    a_isz = jnp.dtype(x.dtype).itemsize
    w_isz = jnp.dtype(w_gate.dtype).itemsize
    tm, ti = _pick_tiles(M, H, I, a_isz, w_isz, tm, ti, vmem_cap)

    if n_split is None:
        n_row = _cdiv(M, tm)
        nk = _round_up(I, ti) // ti
        # Decode / small-M: give a second TensorCore work by splitting the
        # reduction into two partial outputs (only when it costs no extra
        # weight padding, i.e. nk even).
        n_split = 2 if (n_row == 1 and nk >= 2 and nk % 2 == 0) else 1

    # TODO(synk): config.mlp_bias=True (bias terms) not implemented; standard
    # Llama uses mlp_bias=False.
    out2 = _mlp_call(x.reshape(M, H), w_gate, w_up, w_down,
                     tm=tm, ti=ti, n_split=n_split, vmem_cap=vmem_cap)
    return out2.reshape(B, S, H)


def _reference(x, wg, wu, wd):
    xf = x.astype(jnp.float32)
    gate = jnp.einsum("bsh,hi->bsi", xf, wg.astype(jnp.float32))
    up = jnp.einsum("bsh,hi->bsi", xf, wu.astype(jnp.float32))
    h = jax.nn.silu(gate) * up
    return jnp.einsum("bsi,ih->bsh", h, wd.astype(jnp.float32))


if __name__ == "__main__":
    key = jax.random.PRNGKey(0)

    # --- test 1: f32, small shapes, default per-chip tiles ---
    B, S, H, I = 2, 8, 256, 512
    kx, kg, ku, kd = jax.random.split(key, 4)
    x = jax.random.normal(kx, (B, S, H), dtype=jnp.float32)
    w_gate = jax.random.normal(kg, (H, I), dtype=jnp.float32) * (1.0 / H ** 0.5)
    w_up = jax.random.normal(ku, (H, I), dtype=jnp.float32) * (1.0 / H ** 0.5)
    w_down = jax.random.normal(kd, (I, H), dtype=jnp.float32) * (1.0 / I ** 0.5)

    out = jax.block_until_ready(llama_mlp(x, w_gate, w_up, w_down))
    ref = _reference(x, w_gate, w_up, w_down)
    assert out.shape == (B, S, H)
    assert jnp.allclose(out, ref, atol=1e-2, rtol=1e-2), "f32 mismatch vs reference"

    # --- test 2: bf16, ragged M (112 rows, tm=64) and padded I (640 -> 768) ---
    B2, S2, H2, I2 = 2, 56, 256, 640
    k0, k1, k2, k3 = jax.random.split(jax.random.PRNGKey(1), 4)
    xb = jax.random.normal(k0, (B2, S2, H2), jnp.float32).astype(jnp.bfloat16)
    wgb = (jax.random.normal(k1, (H2, I2), jnp.float32) * (1.0 / H2 ** 0.5)).astype(jnp.bfloat16)
    wub = (jax.random.normal(k2, (H2, I2), jnp.float32) * (1.0 / H2 ** 0.5)).astype(jnp.bfloat16)
    wdb = (jax.random.normal(k3, (I2, H2), jnp.float32) * (1.0 / I2 ** 0.5)).astype(jnp.bfloat16)

    outb = jax.block_until_ready(llama_mlp(xb, wgb, wub, wdb, tm=64, ti=256))
    refb = _reference(xb, wgb, wub, wdb)
    assert outb.shape == (B2, S2, H2)
    assert jnp.allclose(outb.astype(jnp.float32), refb, atol=7e-2, rtol=7e-2), \
        "bf16 mismatch vs reference"

    # --- test 3: f32, decode-like M with the split-reduction path (n_split=2) ---
    B3, S3, H3, I3 = 1, 16, 256, 1024
    k4, k5, k6, k7 = jax.random.split(jax.random.PRNGKey(2), 4)
    xs = jax.random.normal(k4, (B3, S3, H3), dtype=jnp.float32)
    wgs = jax.random.normal(k5, (H3, I3), dtype=jnp.float32) * (1.0 / H3 ** 0.5)
    wus = jax.random.normal(k6, (H3, I3), dtype=jnp.float32) * (1.0 / H3 ** 0.5)
    wds = jax.random.normal(k7, (I3, H3), dtype=jnp.float32) * (1.0 / I3 ** 0.5)

    outs = jax.block_until_ready(llama_mlp(xs, wgs, wus, wds, ti=256))
    refs = _reference(xs, wgs, wus, wds)
    assert outs.shape == (B3, S3, H3)
    assert jnp.allclose(outs, refs, atol=1e-2, rtol=1e-2), "split-path mismatch vs reference"

    print("KERNEL_OK")
</pallas_src>

<mosaic_0001>
module attributes {stable_mosaic.version = 11 : i64} {
  func.func @_mlp_kernel(%arg0: i32, %arg1: i32, %arg2: i32, %arg3: memref<16x256xf32, #tpu.memory_space<vmem>>, %arg4: memref<256x256xf32, #tpu.memory_space<vmem>>, %arg5: memref<256x256xf32, #tpu.memory_space<vmem>>, %arg6: memref<256x256xf32, #tpu.memory_space<vmem>>, %arg7: memref<1x16x256xf32, #tpu.memory_space<vmem>>, %arg8: memref<16x256xf32, #tpu.memory_space<vmem>>) attributes {dimension_semantics = [#tpu.dimension_semantics<parallel>, #tpu.dimension_semantics<parallel>, #tpu.dimension_semantics<arbitrary>], iteration_bounds = array<i64: 2, 1, 1>, scalar_prefetch = 0 : i64, scratch_operands = 1 : i64, tpu.core_type = #tpu.core_type<tc>, window_params = [{transform_indices = @transform_0, window_bounds = array<i64: 16, 256>}, {transform_indices = @transform_1, window_bounds = array<i64: 256, 256>}, {transform_indices = @transform_2, window_bounds = array<i64: 256, 256>}, {transform_indices = @transform_3, window_bounds = array<i64: 256, 256>}, {transform_indices = @transform_4, window_bounds = array<i64: 1, 16, 256>}]} {
    %c0_i32 = arith.constant 0 : i32
    %0 = arith.cmpi eq, %arg2, %c0_i32 : i32
    %1 = arith.extui %0 : i1 to i32
    %c0_i32_0 = arith.constant 0 : i32
    %2 = arith.cmpi ne, %1, %c0_i32_0 : i32
    scf.if %2 {
      %cst_17 = arith.constant 0.000000e+00 : f32
      %23 = vector.broadcast %cst_17 : f32 to vector<16x256xf32>
      %c0_18 = arith.constant 0 : index
      %c0_19 = arith.constant 0 : index
      %24 = vector.load %arg8[%c0_18, %c0_19] : memref<16x256xf32, #tpu.memory_space<vmem>>, vector<16x256xf32>
      tpu.vector_store %arg8[%c0_18, %c0_19], %23 {strides = array<i32>} : memref<16x256xf32, #tpu.memory_space<vmem>>, vector<16x256xf32>,
    } else {
    }
    %c0 = arith.constant 0 : index
    %c0_1 = arith.constant 0 : index
    %3 = vector.load %arg3[%c0, %c0_1] : memref<16x256xf32, #tpu.memory_space<vmem>>, vector<16x256xf32>
    %c0_2 = arith.constant 0 : index
    %c0_3 = arith.constant 0 : index
    %4 = vector.load %arg4[%c0_2, %c0_3] : memref<256x256xf32, #tpu.memory_space<vmem>>, vector<256x256xf32>
    %cst = arith.constant dense<0.000000e+00> : vector<16x256xf32>
    %5 = tpu.matmul %3, %4, %cst {dimension_numbers = #tpu.dot_dimension_numbers<[1], [0], [0], [1], [0, 0, 1, 1], [], []>, precision = #tpu.contract_precision<fp32>} : vector<16x256xf32>, vector<256x256xf32>, vector<16x256xf32> -> vector<16x256xf32>
    %c0_4 = arith.constant 0 : index
    %c0_5 = arith.constant 0 : index
    %6 = vector.load %arg5[%c0_4, %c0_5] : memref<256x256xf32, #tpu.memory_space<vmem>>, vector<256x256xf32>
    %cst_6 = arith.constant dense<0.000000e+00> : vector<16x256xf32>
    %7 = tpu.matmul %3, %6, %cst_6 {dimension_numbers = #tpu.dot_dimension_numbers<[1], [0], [0], [1], [0, 0, 1, 1], [], []>, precision = #tpu.contract_precision<fp32>} : vector<16x256xf32>, vector<256x256xf32>, vector<16x256xf32> -> vector<16x256xf32>
    %8 = arith.negf %5 : vector<16x256xf32>
    %9 = math.exp %8 : vector<16x256xf32>
    %cst_7 = arith.constant 1.000000e+00 : f32
    %10 = vector.broadcast %cst_7 : f32 to vector<16x256xf32>
    %11 = arith.addf %10, %9 : vector<16x256xf32>
    %12 = arith.divf %10, %11 : vector<16x256xf32>
    %13 = arith.mulf %5, %12 : vector<16x256xf32>
    %14 = arith.mulf %13, %7 : vector<16x256xf32>
    %c0_8 = arith.constant 0 : index
    %c0_9 = arith.constant 0 : index
    %15 = vector.load %arg8[%c0_8, %c0_9] : memref<16x256xf32, #tpu.memory_space<vmem>>, vector<16x256xf32>
    %c0_10 = arith.constant 0 : index
    %c0_11 = arith.constant 0 : index
    %16 = vector.load %arg6[%c0_10, %c0_11] : memref<256x256xf32, #tpu.memory_space<vmem>>, vector<256x256xf32>
    %cst_12 = arith.constant dense<0.000000e+00> : vector<16x256xf32>
    %17 = tpu.matmul %14, %16, %cst_12 {dimension_numbers = #tpu.dot_dimension_numbers<[1], [0], [0], [1], [0, 0, 1, 1], [], []>, precision = #tpu.contract_precision<fp32>} : vector<16x256xf32>, vector<256x256xf32>, vector<16x256xf32> -> vector<16x256xf32>
    %18 = arith.addf %15, %17 : vector<16x256xf32>
    %c0_13 = arith.constant 0 : index
    %c0_14 = arith.constant 0 : index
    %19 = vector.load %arg8[%c0_13, %c0_14] : memref<16x256xf32, #tpu.memory_space<vmem>>, vector<16x256xf32>
    tpu.vector_store %arg8[%c0_13, %c0_14], %18 {strides = array<i32>} : memref<16x256xf32, #tpu.memory_space<vmem>>, vector<16x256xf32>,
    %c0_i32_15 = arith.constant 0 : i32
    %20 = arith.cmpi eq, %arg2, %c0_i32_15 : i32
    %21 = arith.extui %20 : i1 to i32
    %c0_i32_16 = arith.constant 0 : i32
    %22 = arith.cmpi ne, %21, %c0_i32_16 : i32
    scf.if %22 {
      %c0_17 = arith.constant 0 : index
      %c0_18 = arith.constant 0 : index
      %23 = vector.load %arg8[%c0_17, %c0_18] : memref<16x256xf32, #tpu.memory_space<vmem>>, vector<16x256xf32>
      %c0_19 = arith.constant 0 : index
      %c0_20 = arith.constant 0 : index
      %c0_21 = arith.constant 0 : index
      %24 = vector.load %arg7[%c0_19, %c0_20, %c0_21] : memref<1x16x256xf32, #tpu.memory_space<vmem>>, vector<1x16x256xf32>
      %25 = vector.shape_cast %24 : vector<1x16x256xf32> to vector<16x256xf32>
      %26 = vector.shape_cast %23 : vector<16x256xf32> to vector<1x16x256xf32>
      tpu.vector_store %arg7[%c0_19, %c0_20, %c0_21], %26 {strides = array<i32>} : memref<1x16x256xf32, #tpu.memory_space<vmem>>, vector<1x16x256xf32>,
    } else {
    }
    return
  }
  func.func @transform_0(%arg0: i32, %arg1: i32, %arg2: i32) -> (i32, i32) {
    %c0_i32 = arith.constant 0 : i32
    %c0_i32_0 = arith.constant 0 : i32
    return %arg1, %c0_i32 : i32, i32
  }
  func.func @transform_1(%arg0: i32, %arg1: i32, %arg2: i32) -> (i32, i32) {
    %c1_i32 = arith.constant 1 : i32
    %0 = arith.muli %arg0, %c1_i32 : i32
    %1 = arith.addi %0, %arg2 : i32
    %c0_i32 = arith.constant 0 : i32
    %c0_i32_0 = arith.constant 0 : i32
    return %c0_i32, %1 : i32, i32
  }
  func.func @transform_2(%arg0: i32, %arg1: i32, %arg2: i32) -> (i32, i32) {
    %c1_i32 = arith.constant 1 : i32
    %0 = arith.muli %arg0, %c1_i32 : i32
    %1 = arith.addi %0, %arg2 : i32
    %c0_i32 = arith.constant 0 : i32
    %c0_i32_0 = arith.constant 0 : i32
    return %c0_i32, %1 : i32, i32
  }
  func.func @transform_3(%arg0: i32, %arg1: i32, %arg2: i32) -> (i32, i32) {
    %c1_i32 = arith.constant 1 : i32
    %0 = arith.muli %arg0, %c1_i32 : i32
    %1 = arith.addi %0, %arg2 : i32
    %c0_i32 = arith.constant 0 : i32
    %c0_i32_0 = arith.constant 0 : i32
    return %1, %c0_i32 : i32, i32
  }
  func.func @transform_4(%arg0: i32, %arg1: i32, %arg2: i32) -> (i32, i32, i32) {
    %c0_i32 = arith.constant 0 : i32
    %c0_i32_0 = arith.constant 0 : i32
    return %arg0, %arg1, %c0_i32 : i32, i32, i32
  }
}

</mosaic_0001>

<llo_original>
// kernel: _mlp_call.1
$region0: #{_mlp_call.1}
  #allocation0 [shape = 'u32[]', space=smem, size = 0x4, offset = 0x4, fixed_abs, tag = 'smem constant byte address 0x4 - core index']
  #allocation1 [shape = 'u32[144,128]{1,0:T(1,128)}', space=vmem, size = 0x12000, scoped, tag = 'internal scratch']
  #allocation2 [shape = 'f32[16,256]{1,0:T(8,128)}', space=vmem, size = 0x4000, scoped, tag = 'scratch operand']
  %s0 = inlined_call_operand.hbm [shape: f32[16,256], index: 0, kind: input, shape index: {}]
  %s1 = inlined_call_operand.hbm [shape: f32[256,512], index: 1, kind: input, shape index: {}]
  %s2 = inlined_call_operand.hbm [shape: f32[256,512], index: 2, kind: input, shape index: {}]
  %s3 = inlined_call_operand.hbm [shape: f32[512,256], index: 3, kind: input, shape index: {}]
  %s4 = inlined_call_operand.vmem [shape: f32[2,16,256], index: 4, kind: output, shape index: {}]
  %s5 = sld [smem:[#allocation0]]
  $region73: #{_mlp_call.1} parent=0
    _
  %s7 = ssub.s32 1, %s5
  %s8 = scalar_select 0, %s7, %s5
  $region1: #{_mlp_call.1} parent=0
    #allocation3 [shape = 'u8[16384]{0}', space=vmem, size = 0x4000, scoped, tag = 'input window, operand 0, single buffered']
    #allocation4 [shape = 's32[2]{0}', space=sflag, size = 0x8, scoped, tag = 'scoped memory for _mlp_call.1']
    #allocation5 [shape = 'u8[524288]{0}', space=vmem, size = 0x80000, scoped, tag = 'input window, operand 1']
    #allocation6 [shape = 's32[2]{0}', space=sflag, size = 0x8, scoped, tag = 'scoped memory for _mlp_call.1']
    #allocation7 [shape = 'u8[524288]{0}', space=vmem, size = 0x80000, scoped, tag = 'input window, operand 2']
    #allocation8 [shape = 'u8[524288]{0}', space=vmem, size = 0x80000, scoped, tag = 'input window, operand 3']
    #allocation9 [shape = 's32[2]{0}', space=sflag, size = 0x8, scoped, tag = 'scoped memory for _mlp_call.1']
    %9 = vsyncpa [#allocation4], 0
    %10 = vsyncpa [#allocation6], 0
    %s11 = scalar_lea.sflag [#allocation6], 1
    %12 = vsyncpa %s11, 0
    %13 = vsyncpa [#allocation9], 0
    %s14 = scalar_lea.sflag [#allocation9], 1
    %15 = vsyncpa %s14, 0
    loop: start=0, step=1, limit=4
    $region2: #{_mlp_call.1} parent=1 // loop_pre_header
      _
    $region3: #{_mlp_call.1} parent=1 // loop_header
      %s17 = sphi 0, %s21
      %p18 = scmp.ge.s32.totalorder %s17, 4
      %s24 = sphi 0, %s43
      %s25 = sphi 0, %s39
      %s26 = sphi 0, %s35
      %s27 = sphi 0, %s24
      %s28 = sphi 0, %s25
      %s29 = sphi 0, %s26
      %s30 = sphi 0, %s27
      %s31 = sphi 0, %s28
      %s32 = sphi 0, %s29
      %s46 = sphi 0, %s48
      %s49 = sphi 0, %s46
      %s50 = sphi 0, %s49
      %s66 = sphi 0, %s50
      %s74 = sphi 0, %s76
      %s77 = sphi 0, %s74
      %s78 = sphi 0, %s77
      %s94 = sphi 0, %s78
      %s102 = sphi 0, %s104
      %s105 = sphi 0, %s102
      %s106 = sphi 0, %s105
      %s122 = sphi 0, %s106
      %s130 = sphi 0, %s132
      %s133 = sphi 0, %s130
      %s134 = sphi 0, %s133
      %s150 = sphi 0, %s134
      %s158 = sphi 0, %s160
      %s161 = sphi 0, %s158
      %s162 = sphi 0, %s161
      %s178 = sphi 0, %s162
    $region4: #{_mlp_call.1} parent=1 // loop_header_branch
      %20 = sbr.rel (%p18) target = $region8
    $region5: #{_mlp_call.1} parent=1 // loop_body
      %s22 = ssub.s32 %s17, 1
      %s23 = ssub.s32 %s17, 2
      %s33 = sadd.s32 1, %s26
      %p34 = scmp.ge.s32.totalorder %s33, 1
      %s35 = scalar_select %p34, 0, %s33
      %s36 = sadd.s32 1, %s25
      %s37 = scalar_select %p34, %s36, %s25
      %p38 = scmp.ge.s32.totalorder %s37, 1
      %s39 = scalar_select %p38, 0, %s37
      %s40 = sadd.s32 1, %s24
      %s41 = scalar_select %p38, %s40, %s24
      %p42 = scmp.ge.s32.totalorder %s41, 2
      %s43 = scalar_select %p42, 0, %s41
      %s44 = ssub.s32 %s25, %s39
      %p45 = scmp.eq.s32.totalorder %s44, 0
      %s47 = sadd.s32 %s46, 1
      %s48 = scalar_select %p45, %s46, %s47
      %p51 = pneg %p45
      %p52 = scmp.eq.s32.totalorder %s17, 1
      %p53 = por %p51, %p52
      %p54 = scmp.ne.s32.totalorder %s46, %s49
      %p55 = scmp.eq.s32.totalorder %s17, 0
      %p56 = por %p54, %p55
      %p57 = scmp.ne.s32.totalorder %s46, %s49
      %p58 = scmp.eq.s32.totalorder %s22, 1
      %p59 = por %p57, %p58
      %p60 = scmp.ne.s32.totalorder %s49, %s50
      %p61 = scmp.eq.s32.totalorder %s22, 0
      %p62 = por %p60, %p61
      %p63 = scmp.ne.s32.totalorder %s49, %s50
      %p64 = scmp.eq.s32.totalorder %s23, 1
      %p65 = por %p63, %p64
      %p67 = scmp.ne.s32.totalorder %s50, %s66
      %p68 = scmp.eq.s32.totalorder %s23, 0
      %p69 = por %p67, %p68
      %s70 = sadd.s32 %s24, %s26
      %s71 = sadd.s32 %s43, %s35
      %s72 = ssub.s32 %s70, %s71
      %p73 = scmp.eq.s32.totalorder %s72, 0
      %s75 = sadd.s32 %s74, 1
      %s76 = scalar_select %p73, %s74, %s75
      %p79 = pneg %p73
      %p80 = scmp.eq.s32.totalorder %s17, 1
      %p81 = por %p79, %p80
      %p82 = scmp.ne.s32.totalorder %s74, %s77
      %p83 = scmp.eq.s32.totalorder %s17, 0
      %p84 = por %p82, %p83
      %p85 = scmp.ne.s32.totalorder %s74, %s77
      %p86 = scmp.eq.s32.totalorder %s22, 1
      %p87 = por %p85, %p86
      %p88 = scmp.ne.s32.totalorder %s77, %s78
      %p89 = scmp.eq.s32.totalorder %s22, 0
      %p90 = por %p88, %p89
      %p91 = scmp.ne.s32.totalorder %s77, %s78
      %p92 = scmp.eq.s32.totalorder %s23, 1
      %p93 = por %p91, %p92
      %p95 = scmp.ne.s32.totalorder %s78, %s94
      %p96 = scmp.eq.s32.totalorder %s23, 0
      %p97 = por %p95, %p96
      %s98 = sadd.s32 %s24, %s26
      %s99 = sadd.s32 %s43, %s35
      %s100 = ssub.s32 %s98, %s99
      %p101 = scmp.eq.s32.totalorder %s100, 0
      %s103 = sadd.s32 %s102, 1
      %s104 = scalar_select %p101, %s102, %s103
      %p107 = pneg %p101
      %p108 = scmp.eq.s32.totalorder %s17, 1
      %p109 = por %p107, %p108
      %p110 = scmp.ne.s32.totalorder %s102, %s105
      %p111 = scmp.eq.s32.totalorder %s17, 0
      %p112 = por %p110, %p111
      %p113 = scmp.ne.s32.totalorder %s102, %s105
      %p114 = scmp.eq.s32.totalorder %s22, 1
      %p115 = por %p113, %p114
      %p116 = scmp.ne.s32.totalorder %s105, %s106
      %p117 = scmp.eq.s32.totalorder %s22, 0
      %p118 = por %p116, %p117
      %p119 = scmp.ne.s32.totalorder %s105, %s106
      %p120 = scmp.eq.s32.totalorder %s23, 1
      %p121 = por %p119, %p120
      %p123 = scmp.ne.s32.totalorder %s106, %s122
      %p124 = scmp.eq.s32.totalorder %s23, 0
      %p125 = por %p123, %p124
      %s126 = sadd.s32 %s24, %s26
      %s127 = sadd.s32 %s43, %s35
      %s128 = ssub.s32 %s126, %s127
      %p129 = scmp.eq.s32.totalorder %s128, 0
      %s131 = sadd.s32 %s130, 1
      %s132 = scalar_select %p129, %s130, %s131
      %p135 = pneg %p129
      %p136 = scmp.eq.s32.totalorder %s17, 1
      %p137 = por %p135, %p136
      %p138 = scmp.ne.s32.totalorder %s130, %s133
      %p139 = scmp.eq.s32.totalorder %s17, 0
      %p140 = por %p138, %p139
      %p141 = scmp.ne.s32.totalorder %s130, %s133
      %p142 = scmp.eq.s32.totalorder %s22, 1
      %p143 = por %p141, %p142
      %p144 = scmp.ne.s32.totalorder %s133, %s134
      %p145 = scmp.eq.s32.totalorder %s22, 0
      %p146 = por %p144, %p145
      %p147 = scmp.ne.s32.totalorder %s133, %s134
      %p148 = scmp.eq.s32.totalorder %s23, 1
      %p149 = por %p147, %p148
      %p151 = scmp.ne.s32.totalorder %s134, %s150
      %p152 = scmp.eq.s32.totalorder %s23, 0
      %p153 = por %p151, %p152
      %s154 = ssub.s32 %s24, %s43
      %s155 = ssub.s32 %s25, %s39
      %s156 = sor.u32 %s154, %s155
      %p157 = scmp.eq.s32.totalorder %s156, 0
      %s159 = sadd.s32 %s158, 1
      %s160 = scalar_select %p157, %s158, %s159
      %p163 = pneg %p157
      %p164 = scmp.eq.s32.totalorder %s17, 1
      %p165 = por %p163, %p164
      %p166 = scmp.ne.s32.totalorder %s158, %s161
      %p167 = scmp.eq.s32.totalorder %s17, 0
      %p168 = por %p166, %p167
      %p169 = scmp.ne.s32.totalorder %s158, %s161
      %p170 = scmp.eq.s32.totalorder %s22, 1
      %p171 = por %p169, %p170
      %p172 = scmp.ne.s32.totalorder %s161, %s162
      %p173 = scmp.eq.s32.totalorder %s22, 0
      %p174 = por %p172, %p173
      %p175 = scmp.ne.s32.totalorder %s161, %s162
      %p176 = scmp.eq.s32.totalorder %s23, 1
      %p177 = por %p175, %p176
      %p179 = scmp.ne.s32.totalorder %s162, %s178
      %p180 = scmp.eq.s32.totalorder %s23, 0
      %p181 = por %p179, %p180
      %p182 = scmp.le.s32.totalorder 1, %s17
      %p183 = scmp.lt.s32.totalorder %s17, 3
      %p184 = pnand %p182, %p183
      %p185 = pneg %p184
      // Predicated region
      $region9: #{_mlp_call.1} parent=5 // pred_check
        _
      $region10: #{_mlp_call.1} parent=5 // pred_check_branch
        %187 = sbr.rel (%p184) target = $region12
      $region11: #{_mlp_call.1} parent=5 // pred_region
        %s188 = ssub.s32 %s17, 1
        // Predicated region
        $region13: #{_mlp_call.1} parent=11 // pred_check
          %p189 = pneg %p62
        $region14: #{_mlp_call.1} parent=11 // pred_check_branch
          %191 = sbr.rel (%p189) target = $region16
        $region15: #{_mlp_call.1} parent=11 // pred_region
          %s192 = smul.u32 2, %s28
          %s194 = ssub.s32 512, 512
          %195 = vsyncadd [#allocation4], %s194
          %s196 = smul.addr %s192, 2
          %s197 = smul.addr %s196, 128
          %s198 = scalar_lea.hbm %s0, %s197
          %s199 = sshll.u32 [#allocation3], 4
          %s200 = int_to_ptr.vmem [resolvable:$true] %s199
          %205 = dma.hbm_to_vmem [thread:$0]  %s198, 512, %s200, [#allocation4], 256, 256, 16
        $region16: #{_mlp_call.1} parent=11 // pred_fallthru
          _
      $region12: #{_mlp_call.1} parent=5 // pred_fallthru
        _
      %p206 = scmp.lt.s32.totalorder %s17, 2
      // Predicated region
      $region17: #{_mlp_call.1} parent=5 // pred_check
        %p207 = pneg %p206
      $region18: #{_mlp_call.1} parent=5 // pred_check_branch
        %209 = sbr.rel (%p207) target = $region20
      $region19: #{_mlp_call.1} parent=5 // pred_region
        // Predicated region
        $region21: #{_mlp_call.1} parent=19 // pred_check
          %p210 = pneg %p84
        $region22: #{_mlp_call.1} parent=19 // pred_check_branch
          %212 = sbr.rel (%p210) target = $region24
        $region23: #{_mlp_call.1} parent=19 // pred_region
          %s213 = sand.u32 %s17, 1
          %s214 = scalar_lea.sflag [#allocation6], %s213
          %s215 = sand.u32 %s74, 1
          %s216 = smul.addr %s215, 512
          %s217 = scalar_lea.vmem [#allocation5], %s216
          %s218 = sadd.s32 %s24, %s26
          %s219 = smul.u32 2, %s218
          %s221 = ssub.s32 8192, 8192
          %222 = vsyncadd %s214, %s221
          %s223 = smul.addr %s219, 128
          %s224 = scalar_lea.hbm %s1, %s223
          %s225 = sshll.u32 %s217, 4
          %s226 = int_to_ptr.vmem [resolvable:$true] %s225
          %231 = dma.hbm_to_vmem [thread:$0]  %s224, 8192, %s226, %s214, 512, 256, 16
        $region24: #{_mlp_call.1} parent=19 // pred_fallthru
          _
        // Predicated region
        $region25: #{_mlp_call.1} parent=19 // pred_check
          %p232 = pneg %p112
        $region26: #{_mlp_call.1} parent=19 // pred_check_branch
          %234 = sbr.rel (%p232) target = $region28
        $region27: #{_mlp_call.1} parent=19 // pred_region
          %s235 = sand.u32 %s17, 1
          %s236 = scalar_lea.sflag [#allocation6], %s235
          %s237 = sand.u32 %s102, 1
          %s238 = smul.addr %s237, 512
          %s239 = scalar_lea.vmem [#allocation7], %s238
          %s240 = sadd.s32 %s24, %s26
          %s241 = smul.u32 2, %s240
          %s243 = ssub.s32 8192, 8192
          %244 = vsyncadd %s236, %s243
          %s245 = smul.addr %s241, 128
          %s246 = scalar_lea.hbm %s2, %s245
          %s247 = sshll.u32 %s239, 4
          %s248 = int_to_ptr.vmem [resolvable:$true] %s247
          %253 = dma.hbm_to_vmem [thread:$0]  %s246, 8192, %s248, %s236, 512, 256, 16
        $region28: #{_mlp_call.1} parent=19 // pred_fallthru
          _
        // Predicated region
        $region29: #{_mlp_call.1} parent=19 // pred_check
          %p254 = pneg %p140
        $region30: #{_mlp_call.1} parent=19 // pred_check_branch
          %256 = sbr.rel (%p254) target = $region32
        $region31: #{_mlp_call.1} parent=19 // pred_region
          %s257 = sand.u32 %s130, 1
          %s258 = scalar_lea.sflag [#allocation9], %s257
          %s259 = sand.u32 %s130, 1
          %s260 = smul.addr %s259, 512
          %s261 = scalar_lea.vmem [#allocation8], %s260
          %s262 = sadd.s32 %s24, %s26
          %s263 = smul.u32 32, %s262
          %s265 = ssub.s32 8192, 8192
          %266 = vsyncadd %s258, %s265
          %s267 = smul.addr %s263, 2
          %s268 = smul.addr %s267, 128
          %s269 = scalar_lea.hbm %s3, %s268
          %s270 = sshll.u32 %s261, 4
          %s271 = int_to_ptr.vmem [resolvable:$true] %s270
          %276 = dma.hbm_to_vmem [thread:$0]  %s269, 8192, %s271, %s258, 256, 256, 16
        $region32: #{_mlp_call.1} parent=19 // pred_fallthru
          _
      $region20: #{_mlp_call.1} parent=5 // pred_fallthru
        _
      %p277 = scmp.le.s32.totalorder 1, %s17
      %p278 = scmp.lt.s32.totalorder %s17, 3
      %p279 = pnand %p277, %p278
      %p280 = pneg %p279
      // Predicated region
      $region33: #{_mlp_call.1} parent=5 // pred_check
        _
      $region34: #{_mlp_call.1} parent=5 // pred_check_branch
        %282 = sbr.rel (%p279) target = $region36
      $region35: #{_mlp_call.1} parent=5 // pred_region
        %s283 = ssub.s32 %s17, 1
        // Predicated region
        $region37: #{_mlp_call.1} parent=35 // pred_check
          %p284 = pneg %p62
        $region38: #{_mlp_call.1} parent=35 // pred_check_branch
          %286 = sbr.rel (%p284) target = $region40
        $region39: #{_mlp_call.1} parent=35 // pred_region
          %287 = dma.done [#allocation4], 512
        $region40: #{_mlp_call.1} parent=35 // pred_fallthru
          _
        %s288 = sand.u32 %s22, 1
        %s289 = scalar_lea.sflag [#allocation6], %s288
        %s290 = sand.u32 %s77, 1
        %s291 = smul.addr %s290, 512
        %s292 = scalar_lea.vmem [#allocation5], %s291
        // Predicated region
        $region41: #{_mlp_call.1} parent=35 // pred_check
          %p293 = pneg %p90
        $region42: #{_mlp_call.1} parent=35 // pred_check_branch
          %295 = sbr.rel (%p293) target = $region44
        $region43: #{_mlp_call.1} parent=35 // pred_region
          %296 = dma.done %s289, 8192
        $region44: #{_mlp_call.1} parent=35 // pred_fallthru
          _
        %s297 = sand.u32 %s22, 1
        %s298 = scalar_lea.sflag [#allocation6], %s297
        %s299 = sand.u32 %s105, 1
        %s300 = smul.addr %s299, 512
        %s301 = scalar_lea.vmem [#allocation7], %s300
        // Predicated region
        $region45: #{_mlp_call.1} parent=35 // pred_check
          %p302 = pneg %p118
        $region46: #{_mlp_call.1} parent=35 // pred_check_branch
          %304 = sbr.rel (%p302) target = $region48
        $region47: #{_mlp_call.1} parent=35 // pred_region
          %305 = dma.done %s298, 8192
        $region48: #{_mlp_call.1} parent=35 // pred_fallthru
          _
        %s306 = sand.u32 %s133, 1
        %s307 = scalar_lea.sflag [#allocation9], %s306
        %s308 = sand.u32 %s133, 1
        %s309 = smul.addr %s308, 512
        %s310 = scalar_lea.vmem [#allocation8], %s309
        // Predicated region
        $region49: #{_mlp_call.1} parent=35 // pred_check
          %p311 = pneg %p146
        $region50: #{_mlp_call.1} parent=35 // pred_check_branch
          %313 = sbr.rel (%p311) target = $region52
        $region51: #{_mlp_call.1} parent=35 // pred_region
          %314 = dma.done %s307, 8192
        $region52: #{_mlp_call.1} parent=35 // pred_fallthru
          _
        %p315 = pneg %p62
        %p316 = pneg %p59
        %s317 = sand.u32 %s22, 1
        %s318 = scalar_lea.sflag [#allocation6], %s317
        %s319 = sand.u32 %s77, 1
        %s320 = smul.addr %s319, 512
        %s321 = scalar_lea.vmem [#allocation5], %s320
        %p322 = pneg %p90
        %p323 = pneg %p87
        %s324 = sand.u32 %s22, 1
        %s325 = scalar_lea.sflag [#allocation6], %s324
        %s326 = sand.u32 %s105, 1
        %s327 = smul.addr %s326, 512
        %s328 = scalar_lea.vmem [#allocation7], %s327
        %p329 = pneg %p118
        %p330 = pneg %p115
        %s331 = sand.u32 %s133, 1
        %s332 = scalar_lea.sflag [#allocation9], %s331
        %s333 = sand.u32 %s133, 1
        %s334 = smul.addr %s333, 512
        %s335 = scalar_lea.vmem [#allocation8], %s334
        %p336 = pneg %p146
        %p337 = pneg %p143
        %p338 = pneg %p174
        %p339 = pneg %p171
        %s340 = smul.u32 2, %s28
        %p341 = scmp.lt.s32.totalorder %s27, 1
        %s342 = scalar_select %p341, %s27, 1
        %p343 = scmp.lt.s32.totalorder %s340, 1
        %s344 = scalar_select %p343, %s340, 1
        %s345 = smul.addr %s344, 2
        %s346 = smul.addr %s342, 4
        %s347 = sadd.s32 %s345, %s346
        %s348 = smul.addr %s347, 8
        %s349 = scalar_lea.vmem %s4, %s348
        %s350 = smul.u32 2, %s28
        %s351 = sadd.s32 %s27, %s29
        %s352 = smul.u32 2, %s351
        %s353 = sadd.s32 %s27, %s29
        %s354 = smul.u32 2, %s353
        %s355 = sadd.s32 %s27, %s29
        %s356 = smul.u32 32, %s355
        %s357 = smul.u32 2, %s28
        %p358 = scmp.lt.s32.totalorder %s27, 1
        %s359 = scalar_select %p358, %s27, 1
        %p360 = scmp.lt.s32.totalorder %s357, 1
        %s361 = scalar_select %p360, %s357, 1
        %s362 = smul.addr %s361, 2
        %s363 = smul.addr %s359, 4
        %s364 = sadd.s32 %s362, %s363
        %s365 = smul.addr %s364, 8
        %s366 = scalar_lea.vmem %s4, %s365
        %s367 = smul.u32 2, %s28
        %p368 = scmp.eq.s32.totalorder %s29, 0
        // Predicated region
        $region53: #{_mlp_call.1} parent=35 // pred_check
          %p369 = pneg %p368
        $region54: #{_mlp_call.1} parent=35 // pred_check_branch
          %371 = sbr.rel (%p369) target = $region56
        $region55: #{_mlp_call.1} parent=35 // pred_region
          %372 = vst [vmem:[#allocation2] sm:$0xff] 0.0
          %373 = vst [vmem:[#allocation2 + $0x8] sm:$0xff] 0.0
          %374 = vst [vmem:[#allocation2 + $0x10] sm:$0xff] 0.0
          %375 = vst [vmem:[#allocation2 + $0x18] sm:$0xff] 0.0
        $region56: #{_mlp_call.1} parent=35 // pred_fallthru
          _
        %v376 = vld [vmem:[#allocation3] sm:$0xff]
        %v377 = vld [vmem:[#allocation3 + $0x8] sm:$0xff]
        %v378 = vld [vmem:[#allocation3 + $0x10] sm:$0xff]
        %v379 = vld [vmem:[#allocation3 + $0x18] sm:$0xff]
        %v380 = vld [vmem:[%s292] sm:$0xff]
        %v381 = vld [vmem:[%s292 + $0x8] sm:$0xff]
        %v382 = vld [vmem:[%s292 + $0x10] sm:$0xff]
        %v383 = vld [vmem:[%s292 + $0x18] sm:$0xff]
        %v384 = vld [vmem:[%s292 + $0x20] sm:$0xff]
        %v385 = vld [vmem:[%s292 + $0x28] sm:$0xff]
        %v386 = vld [vmem:[%s292 + $0x30] sm:$0xff]
        %v387 = vld [vmem:[%s292 + $0x38] sm:$0xff]
        %v388 = vld [vmem:[%s292 + $0x40] sm:$0xff]
        %v389 = vld [vmem:[%s292 + $0x48] sm:$0xff]
        %v390 = vld [vmem:[%s292 + $0x50] sm:$0xff]
        %v391 = vld [vmem:[%s292 + $0x58] sm:$0xff]
        %v392 = vld [vmem:[%s292 + $0x60] sm:$0xff]
        %v393 = vld [vmem:[%s292 + $0x68] sm:$0xff]
        %v394 = vld [vmem:[%s292 + $0x70] sm:$0xff]
        %v395 = vld [vmem:[%s292 + $0x78] sm:$0xff]
        %v396 = vld [vmem:[%s292 + $0x80] sm:$0xff]
        %v397 = vld [vmem:[%s292 + $0x88] sm:$0xff]
        %v398 = vld [vmem:[%s292 + $0x90] sm:$0xff]
        %v399 = vld [vmem:[%s292 + $0x98] sm:$0xff]
        %v400 = vld [vmem:[%s292 + $0xa0] sm:$0xff]
        %v401 = vld [vmem:[%s292 + $0xa8] sm:$0xff]
        %v402 = vld [vmem:[%s292 + $0xb0] sm:$0xff]
        %v403 = vld [vmem:[%s292 + $0xb8] sm:$0xff]
        %v404 = vld [vmem:[%s292 + $0xc0] sm:$0xff]
        %v405 = vld [vmem:[%s292 + $0xc8] sm:$0xff]
        %v406 = vld [vmem:[%s292 + $0xd0] sm:$0xff]
        %v407 = vld [vmem:[%s292 + $0xd8] sm:$0xff]
        %v408 = vld [vmem:[%s292 + $0xe0] sm:$0xff]
        %v409 = vld [vmem:[%s292 + $0xe8] sm:$0xff]
        %v410 = vld [vmem:[%s292 + $0xf0] sm:$0xff]
        %v411 = vld [vmem:[%s292 + $0xf8] sm:$0xff]
        %v412 = vld [vmem:[%s292 + $0x100] sm:$0xff]
        %v413 = vld [vmem:[%s292 + $0x108] sm:$0xff]
        %v414 = vld [vmem:[%s292 + $0x110] sm:$0xff]
        %v415 = vld [vmem:[%s292 + $0x118] sm:$0xff]
        %v416 = vld [vmem:[%s292 + $0x120] sm:$0xff]
        %v417 = vld [vmem:[%s292 + $0x128] sm:$0xff]
        %v418 = vld [vmem:[%s292 + $0x130] sm:$0xff]
        %v419 = vld [vmem:[%s292 + $0x138] sm:$0xff]
        %v420 = vld [vmem:[%s292 + $0x140] sm:$0xff]
        %v421 = vld [vmem:[%s292 + $0x148] sm:$0xff]
        %v422 = vld [vmem:[%s292 + $0x150] sm:$0xff]
        %v423 = vld [vmem:[%s292 + $0x158] sm:$0xff]
        %v424 = vld [vmem:[%s292 + $0x160] sm:$0xff]
        %v425 = vld [vmem:[%s292 + $0x168] sm:$0xff]
        %v426 = vld [vmem:[%s292 + $0x170] sm:$0xff]
        %v427 = vld [vmem:[%s292 + $0x178] sm:$0xff]
        %v428 = vld [vmem:[%s292 + $0x180] sm:$0xff]
        %v429 = vld [vmem:[%s292 + $0x188] sm:$0xff]
        %v430 = vld [vmem:[%s292 + $0x190] sm:$0xff]
        %v431 = vld [vmem:[%s292 + $0x198] sm:$0xff]
        %v432 = vld [vmem:[%s292 + $0x1a0] sm:$0xff]
        %v433 = vld [vmem:[%s292 + $0x1a8] sm:$0xff]
        %v434 = vld [vmem:[%s292 + $0x1b0] sm:$0xff]
        %v435 = vld [vmem:[%s292 + $0x1b8] sm:$0xff]
        %v436 = vld [vmem:[%s292 + $0x1c0] sm:$0xff]
        %v437 = vld [vmem:[%s292 + $0x1c8] sm:$0xff]
        %v438 = vld [vmem:[%s292 + $0x1d0] sm:$0xff]
        %v439 = vld [vmem:[%s292 + $0x1d8] sm:$0xff]
        %v440 = vld [vmem:[%s292 + $0x1e0] sm:$0xff]
        %v441 = vld [vmem:[%s292 + $0x1e8] sm:$0xff]
        %v442 = vld [vmem:[%s292 + $0x1f0] sm:$0xff]
        %v443 = vld [vmem:[%s292 + $0x1f8] sm:$0xff]
        %v444 = vand.u32 %v381, 4294901760
        %445 = vmatprep.subr.mxu0 %v444
        %v446 = vand.u32 %v380, 4294901760
        %447 = vmatpush1.msra.mxu0 %v446
        %v448 = vand.u32 %v383, 4294901760
        %449 = vmatprep.subr.mxu0 %v448
        %v450 = vand.u32 %v382, 4294901760
        %451 = vmatpush1.msra.mxu0 %v450
        %v452 = vand.u32 %v385, 4294901760
        %453 = vmatprep.subr.mxu0 %v452
        %v454 = vand.u32 %v384, 4294901760
        %455 = vmatpush1.msra.mxu0 %v454
        %v456 = vand.u32 %v387, 4294901760
        %457 = vmatprep.subr.mxu0 %v456
        %v458 = vand.u32 %v386, 4294901760
        %459 = vmatpush1.msra.mxu0 %v458
        %v460 = vand.u32 %v389, 4294901760
        %461 = vmatprep.subr.mxu0 %v460
        %v462 = vand.u32 %v388, 4294901760
        %463 = vmatpush1.msra.mxu0 %v462
        %v464 = vand.u32 %v391, 4294901760
        %465 = vmatprep.subr.mxu0 %v464
        %v466 = vand.u32 %v390, 4294901760
        %467 = vmatpush1.msra.mxu0 %v466
        %v468 = vand.u32 %v393, 4294901760
        %469 = vmatprep.subr.mxu0 %v468
        %v470 = vand.u32 %v392, 4294901760
        %471 = vmatpush1.msra.mxu0 %v470
        %v472 = vand.u32 %v395, 4294901760
        %473 = vmatprep.subr.mxu0 %v472
        %v474 = vand.u32 %v394, 4294901760
        %475 = vmatpush1.msra.mxu0 %v474
        %v476 = vand.u32 %v397, 4294901760
        %477 = vmatprep.subr.mxu0 %v476
        %v478 = vand.u32 %v396, 4294901760
        %479 = vmatpush1.msra.mxu0 %v478
        %v480 = vand.u32 %v399, 4294901760
        %481 = vmatprep.subr.mxu0 %v480
        %v482 = vand.u32 %v398, 4294901760
        %483 = vmatpush1.msra.mxu0 %v482
        %v484 = vand.u32 %v401, 4294901760
        %485 = vmatprep.subr.mxu0 %v484
        %v486 = vand.u32 %v400, 4294901760
        %487 = vmatpush1.msra.mxu0 %v486
        %v488 = vand.u32 %v403, 4294901760
        %489 = vmatprep.subr.mxu0 %v488
        %v490 = vand.u32 %v402, 4294901760
        %491 = vmatpush1.msra.mxu0 %v490
        %v492 = vand.u32 %v405, 4294901760
        %493 = vmatprep.subr.mxu0 %v492
        %v494 = vand.u32 %v404, 4294901760
        %495 = vmatpush1.msra.mxu0 %v494
        %v496 = vand.u32 %v407, 4294901760
        %497 = vmatprep.subr.mxu0 %v496
        %v498 = vand.u32 %v406, 4294901760
        %499 = vmatpush1.msra.mxu0 %v498
        %v500 = vand.u32 %v409, 4294901760
        %501 = vmatprep.subr.mxu0 %v500
        %v502 = vand.u32 %v408, 4294901760
        %503 = vmatpush1.msra.mxu0 %v502
        %v504 = vand.u32 %v411, 4294901760
        %505 = vmatprep.subr.mxu0 %v504
        %v506 = vand.u32 %v410, 4294901760
        %507 = vmatpush1.msra.mxu0 %v506
        %v508 = vand.u32 %v413, 4294901760
        %509 = vmatprep.subr.mxu0 %v508
        %v510 = vand.u32 %v412, 4294901760
        %511 = vmatpush1.msra.mxu0 %v510
        %v512 = vand.u32 %v415, 4294901760
        %513 = vmatprep.subr.mxu0 %v512
        %v514 = vand.u32 %v414, 4294901760
        %515 = vmatpush1.msra.mxu0 %v514
        %v516 = vand.u32 %v417, 4294901760
        %517 = vmatprep.subr.mxu0 %v516
        %v518 = vand.u32 %v416, 4294901760
        %519 = vmatpush1.msra.mxu0 %v518
        %v520 = vand.u32 %v419, 4294901760
        %521 = vmatprep.subr.mxu0 %v520
        %v522 = vand.u32 %v418, 4294901760
        %523 = vmatpush1.msra.mxu0 %v522
        %v524 = vand.u32 %v421, 4294901760
        %525 = vmatprep.subr.mxu0 %v524
        %v526 = vand.u32 %v420, 4294901760
        %527 = vmatpush1.msra.mxu0 %v526
        %v528 = vand.u32 %v423, 4294901760
        %529 = vmatprep.subr.mxu0 %v528
        %v530 = vand.u32 %v422, 4294901760
        %531 = vmatpush1.msra.mxu0 %v530
        %v532 = vand.u32 %v425, 4294901760
        %533 = vmatprep.subr.mxu0 %v532
        %v534 = vand.u32 %v424, 4294901760
        %535 = vmatpush1.msra.mxu0 %v534
        %v536 = vand.u32 %v427, 4294901760
        %537 = vmatprep.subr.mxu0 %v536
        %v538 = vand.u32 %v426, 4294901760
        %539 = vmatpush1.msra.mxu0 %v538
        %v540 = vand.u32 %v429, 4294901760
        %541 = vmatprep.subr.mxu0 %v540
        %v542 = vand.u32 %v428, 4294901760
        %543 = vmatpush1.msra.mxu0 %v542
        %v544 = vand.u32 %v431, 4294901760
        %545 = vmatprep.subr.mxu0 %v544
        %v546 = vand.u32 %v430, 4294901760
        %547 = vmatpush1.msra.mxu0 %v546
        %v548 = vand.u32 %v433, 4294901760
        %549 = vmatprep.subr.mxu0 %v548
        %v550 = vand.u32 %v432, 4294901760
        %551 = vmatpush1.msra.mxu0 %v550
        %v552 = vand.u32 %v435, 4294901760
        %553 = vmatprep.subr.mxu0 %v552
        %v554 = vand.u32 %v434, 4294901760
        %555 = vmatpush1.msra.mxu0 %v554
        %v556 = vand.u32 %v437, 4294901760
        %557 = vmatprep.subr.mxu0 %v556
        %v558 = vand.u32 %v436, 4294901760
        %559 = vmatpush1.msra.mxu0 %v558
        %v560 = vand.u32 %v439, 4294901760
        %561 = vmatprep.subr.mxu0 %v560
        %v562 = vand.u32 %v438, 4294901760
        %563 = vmatpush1.msra.mxu0 %v562
        %v564 = vand.u32 %v441, 4294901760
        %565 = vmatprep.subr.mxu0 %v564
        %v566 = vand.u32 %v440, 4294901760
        %567 = vmatpush1.msra.mxu0 %v566
        %v568 = vand.u32 %v443, 4294901760
        %569 = vmatprep.subr.mxu0 %v568
        %v570 = vand.u32 %v442, 4294901760
        %571 = vmatpush1.msra.mxu0 %v570
        %v572 = vand.u32 %v377, 4294901760
        %v573 = vsub.f32 %v377, %v572
        %v574 = vand.u32 %v573, 4294901760
        %v575 = vsub.f32 %v573, %v574
        %v576 = vand.u32 %v575, 4294901760
        %577 = vmatprep.mubr.f32.mxu0 %v576
        %v578 = vand.u32 %v376, 4294901760
        %v579 = vsub.f32 %v376, %v578
        %v580 = vand.u32 %v579, 4294901760
        %v581 = vsub.f32 %v579, %v580
        %v582 = vand.u32 %v581, 4294901760
        %583 = vmatmul.mubr.f32.gmra.mrb[0].mxu0 %v582
        %v584 = vpop.f32.mrb[0].mxu0
        %v585 = vadd.f32 0.0, %v584
        %v586 = vpop.f32.mrb[0].mxu0
        %v587 = vadd.f32 0.0, %v586
        %v588 = vand.u32 %v379, 4294901760
        %v589 = vsub.f32 %v379, %v588
        %v590 = vand.u32 %v589, 4294901760
        %v591 = vsub.f32 %v589, %v590
        %v592 = vand.u32 %v591, 4294901760
        %593 = vmatprep.mubr.f32.mxu0 %v592
        %v594 = vand.u32 %v378, 4294901760
        %v595 = vsub.f32 %v378, %v594
        %v596 = vand.u32 %v595, 4294901760
        %v597 = vsub.f32 %v595, %v596
        %v598 = vand.u32 %v597, 4294901760
        %599 = vmatmul.mubr.f32.gmra.mrb[0].mxu0 %v598
        %v600 = vpop.f32.mrb[0].mxu0
        %v601 = vadd.f32 0.0, %v600
        %v602 = vpop.f32.mrb[0].mxu0
        %v603 = vadd.f32 0.0, %v602
        %604 = vdwg.mxu0
        %v605 = vand.u32 %v381, 4294901760
        %v606 = vsub.f32 %v381, %v605
        %v607 = vand.u32 %v606, 4294901760
        %v608 = vsub.f32 %v606, %v607
        %v609 = vand.u32 %v608, 4294901760
        %610 = vmatprep.subr.mxu0 %v609
        %v611 = vand.u32 %v380, 4294901760
        %v612 = vsub.f32 %v380, %v611
        %v613 = vand.u32 %v612, 4294901760
        %v614 = vsub.f32 %v612, %v613
        %v615 = vand.u32 %v614, 4294901760
        %616 = vmatpush1.msra.mxu0 %v615
        %v617 = vand.u32 %v383, 4294901760
        %v618 = vsub.f32 %v383, %v617
        %v619 = vand.u32 %v618, 4294901760
        %v620 = vsub.f32 %v618, %v619
        %v621 = vand.u32 %v620, 4294901760
        %622 = vmatprep.subr.mxu0 %v621
        %v623 = vand.u32 %v382, 4294901760
        %v624 = vsub.f32 %v382, %v623
        %v625 = vand.u32 %v624, 4294901760
        %v626 = vsub.f32 %v624, %v625
        %v627 = vand.u32 %v626, 4294901760
        %628 = vmatpush1.msra.mxu0 %v627
        %v629 = vand.u32 %v385, 4294901760
        %v630 = vsub.f32 %v385, %v629
        %v631 = vand.u32 %v630, 4294901760
        %v632 = vsub.f32 %v630, %v631
        %v633 = vand.u32 %v632, 4294901760
        %634 = vmatprep.subr.mxu0 %v633
        %v635 = vand.u32 %v384, 4294901760
        %v636 = vsub.f32 %v384, %v635
        %v637 = vand.u32 %v636, 4294901760
        %v638 = vsub.f32 %v636, %v637
        %v639 = vand.u32 %v638, 4294901760
        %640 = vmatpush1.msra.mxu0 %v639
        %v641 = vand.u32 %v387, 4294901760
        %v642 = vsub.f32 %v387, %v641
        %v643 = vand.u32 %v642, 4294901760
        %v644 = vsub.f32 %v642, %v643
        %v645 = vand.u32 %v644, 4294901760
        %646 = vmatprep.subr.mxu0 %v645
        %v647 = vand.u32 %v386, 4294901760
        %v648 = vsub.f32 %v386, %v647
        %v649 = vand.u32 %v648, 4294901760
        %v650 = vsub.f32 %v648, %v649
        %v651 = vand.u32 %v650, 4294901760
        %652 = vmatpush1.msra.mxu0 %v651
        %v653 = vand.u32 %v389, 4294901760
        %v654 = vsub.f32 %v389, %v653
        %v655 = vand.u32 %v654, 4294901760
        %v656 = vsub.f32 %v654, %v655
        %v657 = vand.u32 %v656, 4294901760
        %658 = vmatprep.subr.mxu0 %v657
        %v659 = vand.u32 %v388, 4294901760
        %v660 = vsub.f32 %v388, %v659
        %v661 = vand.u32 %v660, 4294901760
        %v662 = vsub.f32 %v660, %v661
        %v663 = vand.u32 %v662, 4294901760
        %664 = vmatpush1.msra.mxu0 %v663
        %v665 = vand.u32 %v391, 4294901760
        %v666 = vsub.f32 %v391, %v665
        %v667 = vand.u32 %v666, 4294901760
        %v668 = vsub.f32 %v666, %v667
        %v669 = vand.u32 %v668, 4294901760
        %670 = vmatprep.subr.mxu0 %v669
        %v671 = vand.u32 %v390, 4294901760
        %v672 = vsub.f32 %v390, %v671
        %v673 = vand.u32 %v672, 4294901760
        %v674 = vsub.f32 %v672, %v673
        %v675 = vand.u32 %v674, 4294901760
        %676 = vmatpush1.msra.mxu0 %v675
        %v677 = vand.u32 %v393, 4294901760
        %v678 = vsub.f32 %v393, %v677
        %v679 = vand.u32 %v678, 4294901760
        %v680 = vsub.f32 %v678, %v679
        %v681 = vand.u32 %v680, 4294901760
        %682 = vmatprep.subr.mxu0 %v681
        %v683 = vand.u32 %v392, 4294901760
        %v684 = vsub.f32 %v392, %v683
        %v685 = vand.u32 %v684, 4294901760
        %v686 = vsub.f32 %v684, %v685
        %v687 = vand.u32 %v686, 4294901760
        %688 = vmatpush1.msra.mxu0 %v687
        %v689 = vand.u32 %v395, 4294901760
        %v690 = vsub.f32 %v395, %v689
        %v691 = vand.u32 %v690, 4294901760
        %v692 = vsub.f32 %v690, %v691
        %v693 = vand.u32 %v692, 4294901760
        %694 = vmatprep.subr.mxu0 %v693
        %v695 = vand.u32 %v394, 4294901760
        %v696 = vsub.f32 %v394, %v695
        %v697 = vand.u32 %v696, 4294901760
        %v698 = vsub.f32 %v696, %v697
        %v699 = vand.u32 %v698, 4294901760
        %700 = vmatpush1.msra.mxu0 %v699
        %v701 = vand.u32 %v397, 4294901760
        %v702 = vsub.f32 %v397, %v701
        %v703 = vand.u32 %v702, 4294901760
        %v704 = vsub.f32 %v702, %v703
        %v705 = vand.u32 %v704, 4294901760
        %706 = vmatprep.subr.mxu0 %v705
        %v707 = vand.u32 %v396, 4294901760
        %v708 = vsub.f32 %v396, %v707
        %v709 = vand.u32 %v708, 4294901760
        %v710 = vsub.f32 %v708, %v709
        %v711 = vand.u32 %v710, 4294901760
        %712 = vmatpush1.msra.mxu0 %v711
        %v713 = vand.u32 %v399, 4294901760
        %v714 = vsub.f32 %v399, %v713
        %v715 = vand.u32 %v714, 4294901760
        %v716 = vsub.f32 %v714, %v715
        %v717 = vand.u32 %v716, 4294901760
        %718 = vmatprep.subr.mxu0 %v717
        %v719 = vand.u32 %v398, 4294901760
        %v720 = vsub.f32 %v398, %v719
        %v721 = vand.u32 %v720, 4294901760
        %v722 = vsub.f32 %v720, %v721
        %v723 = vand.u32 %v722, 4294901760
        %724 = vmatpush1.msra.mxu0 %v723
        %v725 = vand.u32 %v401, 4294901760
        %v726 = vsub.f32 %v401, %v725
        %v727 = vand.u32 %v726, 4294901760
        %v728 = vsub.f32 %v726, %v727
        %v729 = vand.u32 %v728, 4294901760
        %730 = vmatprep.subr.mxu0 %v729
        %v731 = vand.u32 %v400, 4294901760
        %v732 = vsub.f32 %v400, %v731
        %v733 = vand.u32 %v732, 4294901760
        %v734 = vsub.f32 %v732, %v733
        %v735 = vand.u32 %v734, 4294901760
        %736 = vmatpush1.msra.mxu0 %v735
        %v737 = vand.u32 %v403, 4294901760
        %v738 = vsub.f32 %v403, %v737
        %v739 = vand.u32 %v738, 4294901760
        %v740 = vsub.f32 %v738, %v739
        %v741 = vand.u32 %v740, 4294901760
        %742 = vmatprep.subr.mxu0 %v741
        %v743 = vand.u32 %v402, 4294901760
        %v744 = vsub.f32 %v402, %v743
        %v745 = vand.u32 %v744, 4294901760
        %v746 = vsub.f32 %v744, %v745
        %v747 = vand.u32 %v746, 4294901760
        %748 = vmatpush1.msra.mxu0 %v747
        %v749 = vand.u32 %v405, 4294901760
        %v750 = vsub.f32 %v405, %v749
        %v751 = vand.u32 %v750, 4294901760
        %v752 = vsub.f32 %v750, %v751
        %v753 = vand.u32 %v752, 4294901760
        %754 = vmatprep.subr.mxu0 %v753
        %v755 = vand.u32 %v404, 4294901760
        %v756 = vsub.f32 %v404, %v755
        %v757 = vand.u32 %v756, 4294901760
        %v758 = vsub.f32 %v756, %v757
        %v759 = vand.u32 %v758, 4294901760
        %760 = vmatpush1.msra.mxu0 %v759
        %v761 = vand.u32 %v407, 4294901760
        %v762 = vsub.f32 %v407, %v761
        %v763 = vand.u32 %v762, 4294901760
        %v764 = vsub.f32 %v762, %v763
        %v765 = vand.u32 %v764, 4294901760
        %766 = vmatprep.subr.mxu0 %v765
        %v767 = vand.u32 %v406, 4294901760
        %v768 = vsub.f32 %v406, %v767
        %v769 = vand.u32 %v768, 4294901760
        %v770 = vsub.f32 %v768, %v769
        %v771 = vand.u32 %v770, 4294901760
        %772 = vmatpush1.msra.mxu0 %v771
        %v773 = vand.u32 %v409, 4294901760
        %v774 = vsub.f32 %v409, %v773
        %v775 = vand.u32 %v774, 4294901760
        %v776 = vsub.f32 %v774, %v775
        %v777 = vand.u32 %v776, 4294901760
        %778 = vmatprep.subr.mxu0 %v777
        %v779 = vand.u32 %v408, 4294901760
        %v780 = vsub.f32 %v408, %v779
        %v781 = vand.u32 %v780, 4294901760
        %v782 = vsub.f32 %v780, %v781
        %v783 = vand.u32 %v782, 4294901760
        %784 = vmatpush1.msra.mxu0 %v783
        %v785 = vand.u32 %v411, 4294901760
        %v786 = vsub.f32 %v411, %v785
        %v787 = vand.u32 %v786, 4294901760
        %v788 = vsub.f32 %v786, %v787
        %v789 = vand.u32 %v788, 4294901760
        %790 = vmatprep.subr.mxu0 %v789
        %v791 = vand.u32 %v410, 4294901760
        %v792 = vsub.f32 %v410, %v791
        %v793 = vand.u32 %v792, 4294901760
        %v794 = vsub.f32 %v792, %v793
        %v795 = vand.u32 %v794, 4294901760
        %796 = vmatpush1.msra.mxu0 %v795
        %v797 = vand.u32 %v413, 4294901760
        %v798 = vsub.f32 %v413, %v797
        %v799 = vand.u32 %v798, 4294901760
        %v800 = vsub.f32 %v798, %v799
        %v801 = vand.u32 %v800, 4294901760
        %802 = vmatprep.subr.mxu0 %v801
        %v803 = vand.u32 %v412, 4294901760
        %v804 = vsub.f32 %v412, %v803
        %v805 = vand.u32 %v804, 4294901760
        %v806 = vsub.f32 %v804, %v805
        %v807 = vand.u32 %v806, 4294901760
        %808 = vmatpush1.msra.mxu0 %v807
        %v809 = vand.u32 %v415, 4294901760
        %v810 = vsub.f32 %v415, %v809
        %v811 = vand.u32 %v810, 4294901760
        %v812 = vsub.f32 %v810, %v811
        %v813 = vand.u32 %v812, 4294901760
        %814 = vmatprep.subr.mxu0 %v813
        %v815 = vand.u32 %v414, 4294901760
        %v816 = vsub.f32 %v414, %v815
        %v817 = vand.u32 %v816, 4294901760
        %v818 = vsub.f32 %v816, %v817
        %v819 = vand.u32 %v818, 4294901760
        %820 = vmatpush1.msra.mxu0 %v819
        %v821 = vand.u32 %v417, 4294901760
        %v822 = vsub.f32 %v417, %v821
        %v823 = vand.u32 %v822, 4294901760
        %v824 = vsub.f32 %v822, %v823
        %v825 = vand.u32 %v824, 4294901760
        %826 = vmatprep.subr.mxu0 %v825
        %v827 = vand.u32 %v416, 4294901760
        %v828 = vsub.f32 %v416, %v827
        %v829 = vand.u32 %v828, 4294901760
        %v830 = vsub.f32 %v828, %v829
        %v831 = vand.u32 %v830, 4294901760
        %832 = vmatpush1.msra.mxu0 %v831
        %v833 = vand.u32 %v419, 4294901760
        %v834 = vsub.f32 %v419, %v833
        %v835 = vand.u32 %v834, 4294901760
        %v836 = vsub.f32 %v834, %v835
        %v837 = vand.u32 %v836, 4294901760
        %838 = vmatprep.subr.mxu0 %v837
        %v839 = vand.u32 %v418, 4294901760
        %v840 = vsub.f32 %v418, %v839
        %v841 = vand.u32 %v840, 4294901760
        %v842 = vsub.f32 %v840, %v841
        %v843 = vand.u32 %v842, 4294901760
        %844 = vmatpush1.msra.mxu0 %v843
        %v845 = vand.u32 %v421, 4294901760
        %v846 = vsub.f32 %v421, %v845
        %v847 = vand.u32 %v846, 4294901760
        %v848 = vsub.f32 %v846, %v847
        %v849 = vand.u32 %v848, 4294901760
        %850 = vmatprep.subr.mxu0 %v849
        %v851 = vand.u32 %v420, 4294901760
        %v852 = vsub.f32 %v420, %v851
        %v853 = vand.u32 %v852, 4294901760
        %v854 = vsub.f32 %v852, %v853
        %v855 = vand.u32 %v854, 4294901760
        %856 = vmatpush1.msra.mxu0 %v855
        %v857 = vand.u32 %v423, 4294901760
        %v858 = vsub.f32 %v423, %v857
        %v859 = vand.u32 %v858, 4294901760
        %v860 = vsub.f32 %v858, %v859
        %v861 = vand.u32 %v860, 4294901760
        %862 = vmatprep.subr.mxu0 %v861
        %v863 = vand.u32 %v422, 4294901760
        %v864 = vsub.f32 %v422, %v863
        %v865 = vand.u32 %v864, 4294901760
        %v866 = vsub.f32 %v864, %v865
        %v867 = vand.u32 %v866, 4294901760
        %868 = vmatpush1.msra.mxu0 %v867
        %v869 = vand.u32 %v425, 4294901760
        %v870 = vsub.f32 %v425, %v869
        %v871 = vand.u32 %v870, 4294901760
        %v872 = vsub.f32 %v870, %v871
        %v873 = vand.u32 %v872, 4294901760
        %874 = vmatprep.subr.mxu0 %v873
        %v875 = vand.u32 %v424, 4294901760
        %v876 = vsub.f32 %v424, %v875
        %v877 = vand.u32 %v876, 4294901760
        %v878 = vsub.f32 %v876, %v877
        %v879 = vand.u32 %v878, 4294901760
        %880 = vmatpush1.msra.mxu0 %v879
        %v881 = vand.u32 %v427, 4294901760
        %v882 = vsub.f32 %v427, %v881
        %v883 = vand.u32 %v882, 4294901760
        %v884 = vsub.f32 %v882, %v883
        %v885 = vand.u32 %v884, 4294901760
        %886 = vmatprep.subr.mxu0 %v885
        %v887 = vand.u32 %v426, 4294901760
        %v888 = vsub.f32 %v426, %v887
        %v889 = vand.u32 %v888, 4294901760
        %v890 = vsub.f32 %v888, %v889
        %v891 = vand.u32 %v890, 4294901760
        %892 = vmatpush1.msra.mxu0 %v891
        %v893 = vand.u32 %v429, 4294901760
        %v894 = vsub.f32 %v429, %v893
        %v895 = vand.u32 %v894, 4294901760
        %v896 = vsub.f32 %v894, %v895
        %v897 = vand.u32 %v896, 4294901760
        %898 = vmatprep.subr.mxu0 %v897
        %v899 = vand.u32 %v428, 4294901760
        %v900 = vsub.f32 %v428, %v899
        %v901 = vand.u32 %v900, 4294901760
        %v902 = vsub.f32 %v900, %v901
        %v903 = vand.u32 %v902, 4294901760
        %904 = vmatpush1.msra.mxu0 %v903
        %v905 = vand.u32 %v431, 4294901760
        %v906 = vsub.f32 %v431, %v905
        %v907 = vand.u32 %v906, 4294901760
        %v908 = vsub.f32 %v906, %v907
        %v909 = vand.u32 %v908, 4294901760
        %910 = vmatprep.subr.mxu0 %v909
        %v911 = vand.u32 %v430, 4294901760
        %v912 = vsub.f32 %v430, %v911
        %v913 = vand.u32 %v912, 4294901760
        %v914 = vsub.f32 %v912, %v913
        %v915 = vand.u32 %v914, 4294901760
        %916 = vmatpush1.msra.mxu0 %v915
        %v917 = vand.u32 %v433, 4294901760
        %v918 = vsub.f32 %v433, %v917
        %v919 = vand.u32 %v918, 4294901760
        %v920 = vsub.f32 %v918, %v919
        %v921 = vand.u32 %v920, 4294901760
        %922 = vmatprep.subr.mxu0 %v921
        %v923 = vand.u32 %v432, 4294901760
        %v924 = vsub.f32 %v432, %v923
        %v925 = vand.u32 %v924, 4294901760
        %v926 = vsub.f32 %v924, %v925
        %v927 = vand.u32 %v926, 4294901760
        %928 = vmatpush1.msra.mxu0 %v927
        %v929 = vand.u32 %v435, 4294901760
        %v930 = vsub.f32 %v435, %v929
        %v931 = vand.u32 %v930, 4294901760
        %v932 = vsub.f32 %v930, %v931
        %v933 = vand.u32 %v932, 4294901760
        %934 = vmatprep.subr.mxu0 %v933
        %v935 = vand.u32 %v434, 4294901760
        %v936 = vsub.f32 %v434, %v935
        %v937 = vand.u32 %v936, 4294901760
        %v938 = vsub.f32 %v936, %v937
        %v939 = vand.u32 %v938, 4294901760
        %940 = vmatpush1.msra.mxu0 %v939
        %v941 = vand.u32 %v437, 4294901760
        %v942 = vsub.f32 %v437, %v941
        %v943 = vand.u32 %v942, 4294901760
        %v944 = vsub.f32 %v942, %v943
        %v945 = vand.u32 %v944, 4294901760
        %946 = vmatprep.subr.mxu0 %v945
        %v947 = vand.u32 %v436, 4294901760
        %v948 = vsub.f32 %v436, %v947
        %v949 = vand.u32 %v948, 4294901760
        %v950 = vsub.f32 %v948, %v949
        %v951 = vand.u32 %v950, 4294901760
        %952 = vmatpush1.msra.mxu0 %v951
        %v953 = vand.u32 %v439, 4294901760
        %v954 = vsub.f32 %v439, %v953
        %v955 = vand.u32 %v954, 4294901760
        %v956 = vsub.f32 %v954, %v955
        %v957 = vand.u32 %v956, 4294901760
        %958 = vmatprep.subr.mxu0 %v957
        %v959 = vand.u32 %v438, 4294901760
        %v960 = vsub.f32 %v438, %v959
        %v961 = vand.u32 %v960, 4294901760
        %v962 = vsub.f32 %v960, %v961
        %v963 = vand.u32 %v962, 4294901760
        %964 = vmatpush1.msra.mxu0 %v963
        %v965 = vand.u32 %v441, 4294901760
        %v966 = vsub.f32 %v441, %v965
        %v967 = vand.u32 %v966, 4294901760
        %v968 = vsub.f32 %v966, %v967
        %v969 = vand.u32 %v968, 4294901760
        %970 = vmatprep.subr.mxu0 %v969
        %v971 = vand.u32 %v440, 4294901760
        %v972 = vsub.f32 %v440, %v971
        %v973 = vand.u32 %v972, 4294901760
        %v974 = vsub.f32 %v972, %v973
        %v975 = vand.u32 %v974, 4294901760
        %976 = vmatpush1.msra.mxu0 %v975
        %v977 = vand.u32 %v443, 4294901760
        %v978 = vsub.f32 %v443, %v977
        %v979 = vand.u32 %v978, 4294901760
        %v980 = vsub.f32 %v978, %v979
        %v981 = vand.u32 %v980, 4294901760
        %982 = vmatprep.subr.mxu0 %v981
        %v983 = vand.u32 %v442, 4294901760
        %v984 = vsub.f32 %v442, %v983
        %v985 = vand.u32 %v984, 4294901760
        %v986 = vsub.f32 %v984, %v985
        %v987 = vand.u32 %v986, 4294901760
        %988 = vmatpush1.msra.mxu0 %v987
        %v989 = vand.u32 %v377, 4294901760
        %990 = vmatprep.mubr.f32.mxu0 %v989
        %v991 = vand.u32 %v376, 4294901760
        %992 = vmatmul.mubr.f32.gmra.mrb[0].mxu0 %v991
        %v993 = vpop.f32.mrb[0].mxu0
        %v994 = vadd.f32 %v585, %v993
        %v995 = vpop.f32.mrb[0].mxu0
        %v996 = vadd.f32 %v587, %v995
        %v997 = vand.u32 %v379, 4294901760
        %998 = vmatprep.mubr.f32.mxu0 %v997
        %v999 = vand.u32 %v378, 4294901760
        %1000 = vmatmul.mubr.f32.gmra.mrb[0].mxu0 %v999
        %v1001 = vpop.f32.mrb[0].mxu0
        %v1002 = vadd.f32 %v601, %v1001
        %v1003 = vpop.f32.mrb[0].mxu0
        %v1004 = vadd.f32 %v603, %v1003
        %1005 = vdwg.mxu0
        %v1006 = vand.u32 %v381, 4294901760
        %v1007 = vsub.f32 %v381, %v1006
        %1008 = vmatprep.subr.mxu0 %v1007
        %v1009 = vand.u32 %v380, 4294901760
        %v1010 = vsub.f32 %v380, %v1009
        %1011 = vmatpush1.msra.mxu0 %v1010
        %v1012 = vand.u32 %v383, 4294901760
        %v1013 = vsub.f32 %v383, %v1012
        %1014 = vmatprep.subr.mxu0 %v1013
        %v1015 = vand.u32 %v382, 4294901760
        %v1016 = vsub.f32 %v382, %v1015
        %1017 = vmatpush1.msra.mxu0 %v1016
        %v1018 = vand.u32 %v385, 4294901760
        %v1019 = vsub.f32 %v385, %v1018
        %1020 = vmatprep.subr.mxu0 %v1019
        %v1021 = vand.u32 %v384, 4294901760
        %v1022 = vsub.f32 %v384, %v1021
        %1023 = vmatpush1.msra.mxu0 %v1022
        %v1024 = vand.u32 %v387, 4294901760
        %v1025 = vsub.f32 %v387, %v1024
        %1026 = vmatprep.subr.mxu0 %v1025
        %v1027 = vand.u32 %v386, 4294901760
        %v1028 = vsub.f32 %v386, %v1027
        %1029 = vmatpush1.msra.mxu0 %v1028
        %v1030 = vand.u32 %v389, 4294901760
        %v1031 = vsub.f32 %v389, %v1030
        %1032 = vmatprep.subr.mxu0 %v1031
        %v1033 = vand.u32 %v388, 4294901760
        %v1034 = vsub.f32 %v388, %v1033
        %1035 = vmatpush1.msra.mxu0 %v1034
        %v1036 = vand.u32 %v391, 4294901760
        %v1037 = vsub.f32 %v391, %v1036
        %1038 = vmatprep.subr.mxu0 %v1037
        %v1039 = vand.u32 %v390, 4294901760
        %v1040 = vsub.f32 %v390, %v1039
        %1041 = vmatpush1.msra.mxu0 %v1040
        %v1042 = vand.u32 %v393, 4294901760
        %v1043 = vsub.f32 %v393, %v1042
        %1044 = vmatprep.subr.mxu0 %v1043
        %v1045 = vand.u32 %v392, 4294901760
        %v1046 = vsub.f32 %v392, %v1045
        %1047 = vmatpush1.msra.mxu0 %v1046
        %v1048 = vand.u32 %v395, 4294901760
        %v1049 = vsub.f32 %v395, %v1048
        %1050 = vmatprep.subr.mxu0 %v1049
        %v1051 = vand.u32 %v394, 4294901760
        %v1052 = vsub.f32 %v394, %v1051
        %1053 = vmatpush1.msra.mxu0 %v1052
        %v1054 = vand.u32 %v397, 4294901760
        %v1055 = vsub.f32 %v397, %v1054
        %1056 = vmatprep.subr.mxu0 %v1055
        %v1057 = vand.u32 %v396, 4294901760
        %v1058 = vsub.f32 %v396, %v1057
        %1059 = vmatpush1.msra.mxu0 %v1058
        %v1060 = vand.u32 %v399, 4294901760
        %v1061 = vsub.f32 %v399, %v1060
        %1062 = vmatprep.subr.mxu0 %v1061
        %v1063 = vand.u32 %v398, 4294901760
        %v1064 = vsub.f32 %v398, %v1063
        %1065 = vmatpush1.msra.mxu0 %v1064
        %v1066 = vand.u32 %v401, 4294901760
        %v1067 = vsub.f32 %v401, %v1066
        %1068 = vmatprep.subr.mxu0 %v1067
        %v1069 = vand.u32 %v400, 4294901760
        %v1070 = vsub.f32 %v400, %v1069
        %1071 = vmatpush1.msra.mxu0 %v1070
        %v1072 = vand.u32 %v403, 4294901760
        %v1073 = vsub.f32 %v403, %v1072
        %1074 = vmatprep.subr.mxu0 %v1073
        %v1075 = vand.u32 %v402, 4294901760
        %v1076 = vsub.f32 %v402, %v1075
        %1077 = vmatpush1.msra.mxu0 %v1076
        %v1078 = vand.u32 %v405, 4294901760
        %v1079 = vsub.f32 %v405, %v1078
        %1080 = vmatprep.subr.mxu0 %v1079
        %v1081 = vand.u32 %v404, 4294901760
        %v1082 = vsub.f32 %v404, %v1081
        %1083 = vmatpush1.msra.mxu0 %v1082
        %v1084 = vand.u32 %v407, 4294901760
        %v1085 = vsub.f32 %v407, %v1084
        %1086 = vmatprep.subr.mxu0 %v1085
        %v1087 = vand.u32 %v406, 4294901760
        %v1088 = vsub.f32 %v406, %v1087
        %1089 = vmatpush1.msra.mxu0 %v1088
        %v1090 = vand.u32 %v409, 4294901760
        %v1091 = vsub.f32 %v409, %v1090
        %1092 = vmatprep.subr.mxu0 %v1091
        %v1093 = vand.u32 %v408, 4294901760
        %v1094 = vsub.f32 %v408, %v1093
        %1095 = vmatpush1.msra.mxu0 %v1094
        %v1096 = vand.u32 %v411, 4294901760
        %v1097 = vsub.f32 %v411, %v1096
        %1098 = vmatprep.subr.mxu0 %v1097
        %v1099 = vand.u32 %v410, 4294901760
        %v1100 = vsub.f32 %v410, %v1099
        %1101 = vmatpush1.msra.mxu0 %v1100
        %v1102 = vand.u32 %v413, 4294901760
        %v1103 = vsub.f32 %v413, %v1102
        %1104 = vmatprep.subr.mxu0 %v1103
        %v1105 = vand.u32 %v412, 4294901760
        %v1106 = vsub.f32 %v412, %v1105
        %1107 = vmatpush1.msra.mxu0 %v1106
        %v1108 = vand.u32 %v415, 4294901760
        %v1109 = vsub.f32 %v415, %v1108
        %1110 = vmatprep.subr.mxu0 %v1109
        %v1111 = vand.u32 %v414, 4294901760
        %v1112 = vsub.f32 %v414, %v1111
        %1113 = vmatpush1.msra.mxu0 %v1112
        %v1114 = vand.u32 %v417, 4294901760
        %v1115 = vsub.f32 %v417, %v1114
        %1116 = vmatprep.subr.mxu0 %v1115
        %v1117 = vand.u32 %v416, 4294901760
        %v1118 = vsub.f32 %v416, %v1117
        %1119 = vmatpush1.msra.mxu0 %v1118
        %v1120 = vand.u32 %v419, 4294901760
        %v1121 = vsub.f32 %v419, %v1120
        %1122 = vmatprep.subr.mxu0 %v1121
        %v1123 = vand.u32 %v418, 4294901760
        %v1124 = vsub.f32 %v418, %v1123
        %1125 = vmatpush1.msra.mxu0 %v1124
        %v1126 = vand.u32 %v421, 4294901760
        %v1127 = vsub.f32 %v421, %v1126
        %1128 = vmatprep.subr.mxu0 %v1127
        %v1129 = vand.u32 %v420, 4294901760
        %v1130 = vsub.f32 %v420, %v1129
        %1131 = vmatpush1.msra.mxu0 %v1130
        %v1132 = vand.u32 %v423, 4294901760
        %v1133 = vsub.f32 %v423, %v1132
        %1134 = vmatprep.subr.mxu0 %v1133
        %v1135 = vand.u32 %v422, 4294901760
        %v1136 = vsub.f32 %v422, %v1135
        %1137 = vmatpush1.msra.mxu0 %v1136
        %v1138 = vand.u32 %v425, 4294901760
        %v1139 = vsub.f32 %v425, %v1138
        %1140 = vmatprep.subr.mxu0 %v1139
        %v1141 = vand.u32 %v424, 4294901760
        %v1142 = vsub.f32 %v424, %v1141
        %1143 = vmatpush1.msra.mxu0 %v1142
        %v1144 = vand.u32 %v427, 4294901760
        %v1145 = vsub.f32 %v427, %v1144
        %1146 = vmatprep.subr.mxu0 %v1145
        %v1147 = vand.u32 %v426, 4294901760
        %v1148 = vsub.f32 %v426, %v1147
        %1149 = vmatpush1.msra.mxu0 %v1148
        %v1150 = vand.u32 %v429, 4294901760
        %v1151 = vsub.f32 %v429, %v1150
        %1152 = vmatprep.subr.mxu0 %v1151
        %v1153 = vand.u32 %v428, 4294901760
        %v1154 = vsub.f32 %v428, %v1153
        %1155 = vmatpush1.msra.mxu0 %v1154
        %v1156 = vand.u32 %v431, 4294901760
        %v1157 = vsub.f32 %v431, %v1156
        %1158 = vmatprep.subr.mxu0 %v1157
        %v1159 = vand.u32 %v430, 4294901760
        %v1160 = vsub.f32 %v430, %v1159
        %1161 = vmatpush1.msra.mxu0 %v1160
        %v1162 = vand.u32 %v433, 4294901760
        %v1163 = vsub.f32 %v433, %v1162
        %1164 = vmatprep.subr.mxu0 %v1163
        %v1165 = vand.u32 %v432, 4294901760
        %v1166 = vsub.f32 %v432, %v1165
        %1167 = vmatpush1.msra.mxu0 %v1166
        %v1168 = vand.u32 %v435, 4294901760
        %v1169 = vsub.f32 %v435, %v1168
        %1170 = vmatprep.subr.mxu0 %v1169
        %v1171 = vand.u32 %v434, 4294901760
        %v1172 = vsub.f32 %v434, %v1171
        %1173 = vmatpush1.msra.mxu0 %v1172
        %v1174 = vand.u32 %v437, 4294901760
        %v1175 = vsub.f32 %v437, %v1174
        %1176 = vmatprep.subr.mxu0 %v1175
        %v1177 = vand.u32 %v436, 4294901760
        %v1178 = vsub.f32 %v436, %v1177
        %1179 = vmatpush1.msra.mxu0 %v1178
        %v1180 = vand.u32 %v439, 4294901760
        %v1181 = vsub.f32 %v439, %v1180
        %1182 = vmatprep.subr.mxu0 %v1181
        %v1183 = vand.u32 %v438, 4294901760
        %v1184 = vsub.f32 %v438, %v1183
        %1185 = vmatpush1.msra.mxu0 %v1184
        %v1186 = vand.u32 %v441, 4294901760
        %v1187 = vsub.f32 %v441, %v1186
        %1188 = vmatprep.subr.mxu0 %v1187
        %v1189 = vand.u32 %v440, 4294901760
        %v1190 = vsub.f32 %v440, %v1189
        %1191 = vmatpush1.msra.mxu0 %v1190
        %v1192 = vand.u32 %v443, 4294901760
        %v1193 = vsub.f32 %v443, %v1192
        %1194 = vmatprep.subr.mxu0 %v1193
        %v1195 = vand.u32 %v442, 4294901760
        %v1196 = vsub.f32 %v442, %v1195
        %1197 = vmatpush1.msra.mxu0 %v1196
        %v1198 = vand.u32 %v377, 4294901760
        %v1199 = vsub.f32 %v377, %v1198
        %1200 = vmatprep.mubr.f32.mxu0 %v1199
        %v1201 = vand.u32 %v376, 4294901760
        %v1202 = vsub.f32 %v376, %v1201
        %1203 = vmatmul.mubr.f32.gmra.mrb[0].mxu0 %v1202
        %v1204 = vpop.f32.mrb[0].mxu0
        %v1205 = vadd.f32 %v994, %v1204
        %v1206 = vpop.f32.mrb[0].mxu0
        %v1207 = vadd.f32 %v996, %v1206
        %v1208 = vand.u32 %v379, 4294901760
        %v1209 = vsub.f32 %v379, %v1208
        %1210 = vmatprep.mubr.f32.mxu0 %v1209
        %v1211 = vand.u32 %v378, 4294901760
        %v1212 = vsub.f32 %v378, %v1211
        %1213 = vmatmul.mubr.f32.gmra.mrb[0].mxu0 %v1212
        %v1214 = vpop.f32.mrb[0].mxu0
        %v1215 = vadd.f32 %v1002, %v1214
        %v1216 = vpop.f32.mrb[0].mxu0
        %v1217 = vadd.f32 %v1004, %v1216
        %1218 = vdwg.mxu0
        %v1219 = vand.u32 %v381, 4294901760
        %1220 = vmatprep.subr.mxu0 %v1219
        %v1221 = vand.u32 %v380, 4294901760
        %1222 = vmatpush1.msra.mxu0 %v1221
        %v1223 = vand.u32 %v383, 4294901760
        %1224 = vmatprep.subr.mxu0 %v1223
        %v1225 = vand.u32 %v382, 4294901760
        %1226 = vmatpush1.msra.mxu0 %v1225
        %v1227 = vand.u32 %v385, 4294901760
        %1228 = vmatprep.subr.mxu0 %v1227
        %v1229 = vand.u32 %v384, 4294901760
        %1230 = vmatpush1.msra.mxu0 %v1229
        %v1231 = vand.u32 %v387, 4294901760
        %1232 = vmatprep.subr.mxu0 %v1231
        %v1233 = vand.u32 %v386, 4294901760
        %1234 = vmatpush1.msra.mxu0 %v1233
        %v1235 = vand.u32 %v389, 4294901760
        %1236 = vmatprep.subr.mxu0 %v1235
        %v1237 = vand.u32 %v388, 4294901760
        %1238 = vmatpush1.msra.mxu0 %v1237
        %v1239 = vand.u32 %v391, 4294901760
        %1240 = vmatprep.subr.mxu0 %v1239
        %v1241 = vand.u32 %v390, 4294901760
        %1242 = vmatpush1.msra.mxu0 %v1241
        %v1243 = vand.u32 %v393, 4294901760
        %1244 = vmatprep.subr.mxu0 %v1243
        %v1245 = vand.u32 %v392, 4294901760
        %1246 = vmatpush1.msra.mxu0 %v1245
        %v1247 = vand.u32 %v395, 4294901760
        %1248 = vmatprep.subr.mxu0 %v1247
        %v1249 = vand.u32 %v394, 4294901760
        %1250 = vmatpush1.msra.mxu0 %v1249
        %v1251 = vand.u32 %v397, 4294901760
        %1252 = vmatprep.subr.mxu0 %v1251
        %v1253 = vand.u32 %v396, 4294901760
        %1254 = vmatpush1.msra.mxu0 %v1253
        %v1255 = vand.u32 %v399, 4294901760
        %1256 = vmatprep.subr.mxu0 %v1255
        %v1257 = vand.u32 %v398, 4294901760
        %1258 = vmatpush1.msra.mxu0 %v1257
        %v1259 = vand.u32 %v401, 4294901760
        %1260 = vmatprep.subr.mxu0 %v1259
        %v1261 = vand.u32 %v400, 4294901760
        %1262 = vmatpush1.msra.mxu0 %v1261
        %v1263 = vand.u32 %v403, 4294901760
        %1264 = vmatprep.subr.mxu0 %v1263
        %v1265 = vand.u32 %v402, 4294901760
        %1266 = vmatpush1.msra.mxu0 %v1265
        %v1267 = vand.u32 %v405, 4294901760
        %1268 = vmatprep.subr.mxu0 %v1267
        %v1269 = vand.u32 %v404, 4294901760
        %1270 = vmatpush1.msra.mxu0 %v1269
        %v1271 = vand.u32 %v407, 4294901760
        %1272 = vmatprep.subr.mxu0 %v1271
        %v1273 = vand.u32 %v406, 4294901760
        %1274 = vmatpush1.msra.mxu0 %v1273
        %v1275 = vand.u32 %v409, 4294901760
        %1276 = vmatprep.subr.mxu0 %v1275
        %v1277 = vand.u32 %v408, 4294901760
        %1278 = vmatpush1.msra.mxu0 %v1277
        %v1279 = vand.u32 %v411, 4294901760
        %1280 = vmatprep.subr.mxu0 %v1279
        %v1281 = vand.u32 %v410, 4294901760
        %1282 = vmatpush1.msra.mxu0 %v1281
        %v1283 = vand.u32 %v413, 4294901760
        %1284 = vmatprep.subr.mxu0 %v1283
        %v1285 = vand.u32 %v412, 4294901760
        %1286 = vmatpush1.msra.mxu0 %v1285
        %v1287 = vand.u32 %v415, 4294901760
        %1288 = vmatprep.subr.mxu0 %v1287
        %v1289 = vand.u32 %v414, 4294901760
        %1290 = vmatpush1.msra.mxu0 %v1289
        %v1291 = vand.u32 %v417, 4294901760
        %1292 = vmatprep.subr.mxu0 %v1291
        %v1293 = vand.u32 %v416, 4294901760
        %1294 = vmatpush1.msra.mxu0 %v1293
        %v1295 = vand.u32 %v419, 4294901760
        %1296 = vmatprep.subr.mxu0 %v1295
        %v1297 = vand.u32 %v418, 4294901760
        %1298 = vmatpush1.msra.mxu0 %v1297
        %v1299 = vand.u32 %v421, 4294901760
        %1300 = vmatprep.subr.mxu0 %v1299
        %v1301 = vand.u32 %v420, 4294901760
        %1302 = vmatpush1.msra.mxu0 %v1301
        %v1303 = vand.u32 %v423, 4294901760
        %1304 = vmatprep.subr.mxu0 %v1303
        %v1305 = vand.u32 %v422, 4294901760
        %1306 = vmatpush1.msra.mxu0 %v1305
        %v1307 = vand.u32 %v425, 4294901760
        %1308 = vmatprep.subr.mxu0 %v1307
        %v1309 = vand.u32 %v424, 4294901760
        %1310 = vmatpush1.msra.mxu0 %v1309
        %v1311 = vand.u32 %v427, 4294901760
        %1312 = vmatprep.subr.mxu0 %v1311
        %v1313 = vand.u32 %v426, 4294901760
        %1314 = vmatpush1.msra.mxu0 %v1313
        %v1315 = vand.u32 %v429, 4294901760
        %1316 = vmatprep.subr.mxu0 %v1315
        %v1317 = vand.u32 %v428, 4294901760
        %1318 = vmatpush1.msra.mxu0 %v1317
        %v1319 = vand.u32 %v431, 4294901760
        %1320 = vmatprep.subr.mxu0 %v1319
        %v1321 = vand.u32 %v430, 4294901760
        %1322 = vmatpush1.msra.mxu0 %v1321
        %v1323 = vand.u32 %v433, 4294901760
        %1324 = vmatprep.subr.mxu0 %v1323
        %v1325 = vand.u32 %v432, 4294901760
        %1326 = vmatpush1.msra.mxu0 %v1325
        %v1327 = vand.u32 %v435, 4294901760
        %1328 = vmatprep.subr.mxu0 %v1327
        %v1329 = vand.u32 %v434, 4294901760
        %1330 = vmatpush1.msra.mxu0 %v1329
        %v1331 = vand.u32 %v437, 4294901760
        %1332 = vmatprep.subr.mxu0 %v1331
        %v1333 = vand.u32 %v436, 4294901760
        %1334 = vmatpush1.msra.mxu0 %v1333
        %v1335 = vand.u32 %v439, 4294901760
        %1336 = vmatprep.subr.mxu0 %v1335
        %v1337 = vand.u32 %v438, 4294901760
        %1338 = vmatpush1.msra.mxu0 %v1337
        %v1339 = vand.u32 %v441, 4294901760
        %1340 = vmatprep.subr.mxu0 %v1339
        %v1341 = vand.u32 %v440, 4294901760
        %1342 = vmatpush1.msra.mxu0 %v1341
        %v1343 = vand.u32 %v443, 4294901760
        %1344 = vmatprep.subr.mxu0 %v1343
        %v1345 = vand.u32 %v442, 4294901760
        %1346 = vmatpush1.msra.mxu0 %v1345
        %v1347 = vand.u32 %v377, 4294901760
        %v1348 = vsub.f32 %v377, %v1347
        %v1349 = vand.u32 %v1348, 4294901760
        %1350 = vmatprep.mubr.f32.mxu0 %v1349
        %v1351 = vand.u32 %v376, 4294901760
        %v1352 = vsub.f32 %v376, %v1351
        %v1353 = vand.u32 %v1352, 4294901760
        %1354 = vmatmul.mubr.f32.gmra.mrb[0].mxu0 %v1353
        %v1355 = vpop.f32.mrb[0].mxu0
        %v1356 = vadd.f32 %v1205, %v1355
        %v1357 = vpop.f32.mrb[0].mxu0
        %v1358 = vadd.f32 %v1207, %v1357
        %v1359 = vand.u32 %v379, 4294901760
        %v1360 = vsub.f32 %v379, %v1359
        %v1361 = vand.u32 %v1360, 4294901760
        %1362 = vmatprep.mubr.f32.mxu0 %v1361
        %v1363 = vand.u32 %v378, 4294901760
        %v1364 = vsub.f32 %v378, %v1363
        %v1365 = vand.u32 %v1364, 4294901760
        %1366 = vmatmul.mubr.f32.gmra.mrb[0].mxu0 %v1365
        %v1367 = vpop.f32.mrb[0].mxu0
        %v1368 = vadd.f32 %v1215, %v1367
        %v1369 = vpop.f32.mrb[0].mxu0
        %v1370 = vadd.f32 %v1217, %v1369
        %1371 = vdwg.mxu0
        %v1372 = vand.u32 %v381, 4294901760
        %v1373 = vsub.f32 %v381, %v1372
        %v1374 = vand.u32 %v1373, 4294901760
        %1375 = vmatprep.subr.mxu0 %v1374
        %v1376 = vand.u32 %v380, 4294901760
        %v1377 = vsub.f32 %v380, %v1376
        %v1378 = vand.u32 %v1377, 4294901760
        %1379 = vmatpush1.msra.mxu0 %v1378
        %v1380 = vand.u32 %v383, 4294901760
        %v1381 = vsub.f32 %v383, %v1380
        %v1382 = vand.u32 %v1381, 4294901760
        %1383 = vmatprep.subr.mxu0 %v1382
        %v1384 = vand.u32 %v382, 4294901760
        %v1385 = vsub.f32 %v382, %v1384
        %v1386 = vand.u32 %v1385, 4294901760
        %1387 = vmatpush1.msra.mxu0 %v1386
        %v1388 = vand.u32 %v385, 4294901760
        %v1389 = vsub.f32 %v385, %v1388
        %v1390 = vand.u32 %v1389, 4294901760
        %1391 = vmatprep.subr.mxu0 %v1390
        %v1392 = vand.u32 %v384, 4294901760
        %v1393 = vsub.f32 %v384, %v1392
        %v1394 = vand.u32 %v1393, 4294901760
        %1395 = vmatpush1.msra.mxu0 %v1394
        %v1396 = vand.u32 %v387, 4294901760
        %v1397 = vsub.f32 %v387, %v1396
        %v1398 = vand.u32 %v1397, 4294901760
        %1399 = vmatprep.subr.mxu0 %v1398
        %v1400 = vand.u32 %v386, 4294901760
        %v1401 = vsub.f32 %v386, %v1400
        %v1402 = vand.u32 %v1401, 4294901760
        %1403 = vmatpush1.msra.mxu0 %v1402
        %v1404 = vand.u32 %v389, 4294901760
        %v1405 = vsub.f32 %v389, %v1404
        %v1406 = vand.u32 %v1405, 4294901760
        %1407 = vmatprep.subr.mxu0 %v1406
        %v1408 = vand.u32 %v388, 4294901760
        %v1409 = vsub.f32 %v388, %v1408
        %v1410 = vand.u32 %v1409, 4294901760
        %1411 = vmatpush1.msra.mxu0 %v1410
        %v1412 = vand.u32 %v391, 4294901760
        %v1413 = vsub.f32 %v391, %v1412
        %v1414 = vand.u32 %v1413, 4294901760
        %1415 = vmatprep.subr.mxu0 %v1414
        %v1416 = vand.u32 %v390, 4294901760
        %v1417 = vsub.f32 %v390, %v1416
        %v1418 = vand.u32 %v1417, 4294901760
        %1419 = vmatpush1.msra.mxu0 %v1418
        %v1420 = vand.u32 %v393, 4294901760
        %v1421 = vsub.f32 %v393, %v1420
        %v1422 = vand.u32 %v1421, 4294901760
        %1423 = vmatprep.subr.mxu0 %v1422
        %v1424 = vand.u32 %v392, 4294901760
        %v1425 = vsub.f32 %v392, %v1424
        %v1426 = vand.u32 %v1425, 4294901760
        %1427 = vmatpush1.msra.mxu0 %v1426
        %v1428 = vand.u32 %v395, 4294901760
        %v1429 = vsub.f32 %v395, %v1428
        %v1430 = vand.u32 %v1429, 4294901760
        %1431 = vmatprep.subr.mxu0 %v1430
        %v1432 = vand.u32 %v394, 4294901760
        %v1433 = vsub.f32 %v394, %v1432
        %v1434 = vand.u32 %v1433, 4294901760
        %1435 = vmatpush1.msra.mxu0 %v1434
        %v1436 = vand.u32 %v397, 4294901760
        %v1437 = vsub.f32 %v397, %v1436
        %v1438 = vand.u32 %v1437, 4294901760
        %1439 = vmatprep.subr.mxu0 %v1438
        %v1440 = vand.u32 %v396, 4294901760
        %v1441 = vsub.f32 %v396, %v1440
        %v1442 = vand.u32 %v1441, 4294901760
        %1443 = vmatpush1.msra.mxu0 %v1442
        %v1444 = vand.u32 %v399, 4294901760
        %v1445 = vsub.f32 %v399, %v1444
        %v1446 = vand.u32 %v1445, 4294901760
        %1447 = vmatprep.subr.mxu0 %v1446
        %v1448 = vand.u32 %v398, 4294901760
        %v1449 = vsub.f32 %v398, %v1448
        %v1450 = vand.u32 %v1449, 4294901760
        %1451 = vmatpush1.msra.mxu0 %v1450
        %v1452 = vand.u32 %v401, 4294901760
        %v1453 = vsub.f32 %v401, %v1452
        %v1454 = vand.u32 %v1453, 4294901760
        %1455 = vmatprep.subr.mxu0 %v1454
        %v1456 = vand.u32 %v400, 4294901760
        %v1457 = vsub.f32 %v400, %v1456
        %v1458 = vand.u32 %v1457, 4294901760
        %1459 = vmatpush1.msra.mxu0 %v1458
        %v1460 = vand.u32 %v403, 4294901760
        %v1461 = vsub.f32 %v403, %v1460
        %v1462 = vand.u32 %v1461, 4294901760
        %1463 = vmatprep.subr.mxu0 %v1462
        %v1464 = vand.u32 %v402, 4294901760
        %v1465 = vsub.f32 %v402, %v1464
        %v1466 = vand.u32 %v1465, 4294901760
        %1467 = vmatpush1.msra.mxu0 %v1466
        %v1468 = vand.u32 %v405, 4294901760
        %v1469 = vsub.f32 %v405, %v1468
        %v1470 = vand.u32 %v1469, 4294901760
        %1471 = vmatprep.subr.mxu0 %v1470
        %v1472 = vand.u32 %v404, 4294901760
        %v1473 = vsub.f32 %v404, %v1472
        %v1474 = vand.u32 %v1473, 4294901760
        %1475 = vmatpush1.msra.mxu0 %v1474
        %v1476 = vand.u32 %v407, 4294901760
        %v1477 = vsub.f32 %v407, %v1476
        %v1478 = vand.u32 %v1477, 4294901760
        %1479 = vmatprep.subr.mxu0 %v1478
        %v1480 = vand.u32 %v406, 4294901760
        %v1481 = vsub.f32 %v406, %v1480
        %v1482 = vand.u32 %v1481, 4294901760
        %1483 = vmatpush1.msra.mxu0 %v1482
        %v1484 = vand.u32 %v409, 4294901760
        %v1485 = vsub.f32 %v409, %v1484
        %v1486 = vand.u32 %v1485, 4294901760
        %1487 = vmatprep.subr.mxu0 %v1486
        %v1488 = vand.u32 %v408, 4294901760
        %v1489 = vsub.f32 %v408, %v1488
        %v1490 = vand.u32 %v1489, 4294901760
        %1491 = vmatpush1.msra.mxu0 %v1490
        %v1492 = vand.u32 %v411, 4294901760
        %v1493 = vsub.f32 %v411, %v1492
        %v1494 = vand.u32 %v1493, 4294901760
        %1495 = vmatprep.subr.mxu0 %v1494
        %v1496 = vand.u32 %v410, 4294901760
        %v1497 = vsub.f32 %v410, %v1496
        %v1498 = vand.u32 %v1497, 4294901760
        %1499 = vmatpush1.msra.mxu0 %v1498
        %v1500 = vand.u32 %v413, 4294901760
        %v1501 = vsub.f32 %v413, %v1500
        %v1502 = vand.u32 %v1501, 4294901760
        %1503 = vmatprep.subr.mxu0 %v1502
        %v1504 = vand.u32 %v412, 4294901760
        %v1505 = vsub.f32 %v412, %v1504
        %v1506 = vand.u32 %v1505, 4294901760
        %1507 = vmatpush1.msra.mxu0 %v1506
        %v1508 = vand.u32 %v415, 4294901760
        %v1509 = vsub.f32 %v415, %v1508
        %v1510 = vand.u32 %v1509, 4294901760
        %1511 = vmatprep.subr.mxu0 %v1510
        %v1512 = vand.u32 %v414, 4294901760
        %v1513 = vsub.f32 %v414, %v1512
        %v1514 = vand.u32 %v1513, 4294901760
        %1515 = vmatpush1.msra.mxu0 %v1514
        %v1516 = vand.u32 %v417, 4294901760
        %v1517 = vsub.f32 %v417, %v1516
        %v1518 = vand.u32 %v1517, 4294901760
        %1519 = vmatprep.subr.mxu0 %v1518
        %v1520 = vand.u32 %v416, 4294901760
        %v1521 = vsub.f32 %v416, %v1520
        %v1522 = vand.u32 %v1521, 4294901760
        %1523 = vmatpush1.msra.mxu0 %v1522
        %v1524 = vand.u32 %v419, 4294901760
        %v1525 = vsub.f32 %v419, %v1524
        %v1526 = vand.u32 %v1525, 4294901760
        %1527 = vmatprep.subr.mxu0 %v1526
        %v1528 = vand.u32 %v418, 4294901760
        %v1529 = vsub.f32 %v418, %v1528
        %v1530 = vand.u32 %v1529, 4294901760
        %1531 = vmatpush1.msra.mxu0 %v1530
        %v1532 = vand.u32 %v421, 4294901760
        %v1533 = vsub.f32 %v421, %v1532
        %v1534 = vand.u32 %v1533, 4294901760
        %1535 = vmatprep.subr.mxu0 %v1534
        %v1536 = vand.u32 %v420, 4294901760
        %v1537 = vsub.f32 %v420, %v1536
        %v1538 = vand.u32 %v1537, 4294901760
        %1539 = vmatpush1.msra.mxu0 %v1538
        %v1540 = vand.u32 %v423, 4294901760
        %v1541 = vsub.f32 %v423, %v1540
        %v1542 = vand.u32 %v1541, 4294901760
        %1543 = vmatprep.subr.mxu0 %v1542
        %v1544 = vand.u32 %v422, 4294901760
        %v1545 = vsub.f32 %v422, %v1544
        %v1546 = vand.u32 %v1545, 4294901760
        %1547 = vmatpush1.msra.mxu0 %v1546
        %v1548 = vand.u32 %v425, 4294901760
        %v1549 = vsub.f32 %v425, %v1548
        %v1550 = vand.u32 %v1549, 4294901760
        %1551 = vmatprep.subr.mxu0 %v1550
        %v1552 = vand.u32 %v424, 4294901760
        %v1553 = vsub.f32 %v424, %v1552
        %v1554 = vand.u32 %v1553, 4294901760
        %1555 = vmatpush1.msra.mxu0 %v1554
        %v1556 = vand.u32 %v427, 4294901760
        %v1557 = vsub.f32 %v427, %v1556
        %v1558 = vand.u32 %v1557, 4294901760
        %1559 = vmatprep.subr.mxu0 %v1558
        %v1560 = vand.u32 %v426, 4294901760
        %v1561 = vsub.f32 %v426, %v1560
        %v1562 = vand.u32 %v1561, 4294901760
        %1563 = vmatpush1.msra.mxu0 %v1562
        %v1564 = vand.u32 %v429, 4294901760
        %v1565 = vsub.f32 %v429, %v1564
        %v1566 = vand.u32 %v1565, 4294901760
        %1567 = vmatprep.subr.mxu0 %v1566
        %v1568 = vand.u32 %v428, 4294901760
        %v1569 = vsub.f32 %v428, %v1568
        %v1570 = vand.u32 %v1569, 4294901760
        %1571 = vmatpush1.msra.mxu0 %v1570
        %v1572 = vand.u32 %v431, 4294901760
        %v1573 = vsub.f32 %v431, %v1572
        %v1574 = vand.u32 %v1573, 4294901760
        %1575 = vmatprep.subr.mxu0 %v1574
        %v1576 = vand.u32 %v430, 4294901760
        %v1577 = vsub.f32 %v430, %v1576
        %v1578 = vand.u32 %v1577, 4294901760
        %1579 = vmatpush1.msra.mxu0 %v1578
        %v1580 = vand.u32 %v433, 4294901760
        %v1581 = vsub.f32 %v433, %v1580
        %v1582 = vand.u32 %v1581, 4294901760
        %1583 = vmatprep.subr.mxu0 %v1582
        %v1584 = vand.u32 %v432, 4294901760
        %v1585 = vsub.f32 %v432, %v1584
        %v1586 = vand.u32 %v1585, 4294901760
        %1587 = vmatpush1.msra.mxu0 %v1586
        %v1588 = vand.u32 %v435, 4294901760
        %v1589 = vsub.f32 %v435, %v1588
        %v1590 = vand.u32 %v1589, 4294901760
        %1591 = vmatprep.subr.mxu0 %v1590
        %v1592 = vand.u32 %v434, 4294901760
        %v1593 = vsub.f32 %v434, %v1592
        %v1594 = vand.u32 %v1593, 4294901760
        %1595 = vmatpush1.msra.mxu0 %v1594
        %v1596 = vand.u32 %v437, 4294901760
        %v1597 = vsub.f32 %v437, %v1596
        %v1598 = vand.u32 %v1597, 4294901760
        %1599 = vmatprep.subr.mxu0 %v1598
        %v1600 = vand.u32 %v436, 4294901760
        %v1601 = vsub.f32 %v436, %v1600
        %v1602 = vand.u32 %v1601, 4294901760
        %1603 = vmatpush1.msra.mxu0 %v1602
        %v1604 = vand.u32 %v439, 4294901760
        %v1605 = vsub.f32 %v439, %v1604
        %v1606 = vand.u32 %v1605, 4294901760
        %1607 = vmatprep.subr.mxu0 %v1606
        %v1608 = vand.u32 %v438, 4294901760
        %v1609 = vsub.f32 %v438, %v1608
        %v1610 = vand.u32 %v1609, 4294901760
        %1611 = vmatpush1.msra.mxu0 %v1610
        %v1612 = vand.u32 %v441, 4294901760
        %v1613 = vsub.f32 %v441, %v1612
        %v1614 = vand.u32 %v1613, 4294901760
        %1615 = vmatprep.subr.mxu0 %v1614
        %v1616 = vand.u32 %v440, 4294901760
        %v1617 = vsub.f32 %v440, %v1616
        %v1618 = vand.u32 %v1617, 4294901760
        %1619 = vmatpush1.msra.mxu0 %v1618
        %v1620 = vand.u32 %v443, 4294901760
        %v1621 = vsub.f32 %v443, %v1620
        %v1622 = vand.u32 %v1621, 4294901760
        %1623 = vmatprep.subr.mxu0 %v1622
        %v1624 = vand.u32 %v442, 4294901760
        %v1625 = vsub.f32 %v442, %v1624
        %v1626 = vand.u32 %v1625, 4294901760
        %1627 = vmatpush1.msra.mxu0 %v1626
        %v1628 = vand.u32 %v377, 4294901760
        %1629 = vmatprep.mubr.f32.mxu0 %v1628
        %v1630 = vand.u32 %v376, 4294901760
        %1631 = vmatmul.mubr.f32.gmra.mrb[0].mxu0 %v1630
        %v1632 = vpop.f32.mrb[0].mxu0
        %v1633 = vadd.f32 %v1356, %v1632
        %v1634 = vpop.f32.mrb[0].mxu0
        %v1635 = vadd.f32 %v1358, %v1634
        %v1636 = vand.u32 %v379, 4294901760
        %1637 = vmatprep.mubr.f32.mxu0 %v1636
        %v1638 = vand.u32 %v378, 4294901760
        %1639 = vmatmul.mubr.f32.gmra.mrb[0].mxu0 %v1638
        %v1640 = vpop.f32.mrb[0].mxu0
        %v1641 = vadd.f32 %v1368, %v1640
        %v1642 = vpop.f32.mrb[0].mxu0
        %v1643 = vadd.f32 %v1370, %v1642
        %1644 = vdwg.mxu0
        %v1645 = vand.u32 %v381, 4294901760
        %1646 = vmatprep.subr.mxu0 %v1645
        %v1647 = vand.u32 %v380, 4294901760
        %1648 = vmatpush1.msra.mxu0 %v1647
        %v1649 = vand.u32 %v383, 4294901760
        %1650 = vmatprep.subr.mxu0 %v1649
        %v1651 = vand.u32 %v382, 4294901760
        %1652 = vmatpush1.msra.mxu0 %v1651
        %v1653 = vand.u32 %v385, 4294901760
        %1654 = vmatprep.subr.mxu0 %v1653
        %v1655 = vand.u32 %v384, 4294901760
        %1656 = vmatpush1.msra.mxu0 %v1655
        %v1657 = vand.u32 %v387, 4294901760
        %1658 = vmatprep.subr.mxu0 %v1657
        %v1659 = vand.u32 %v386, 4294901760
        %1660 = vmatpush1.msra.mxu0 %v1659
        %v1661 = vand.u32 %v389, 4294901760
        %1662 = vmatprep.subr.mxu0 %v1661
        %v1663 = vand.u32 %v388, 4294901760
        %1664 = vmatpush1.msra.mxu0 %v1663
        %v1665 = vand.u32 %v391, 4294901760
        %1666 = vmatprep.subr.mxu0 %v1665
        %v1667 = vand.u32 %v390, 4294901760
        %1668 = vmatpush1.msra.mxu0 %v1667
        %v1669 = vand.u32 %v393, 4294901760
        %1670 = vmatprep.subr.mxu0 %v1669
        %v1671 = vand.u32 %v392, 4294901760
        %1672 = vmatpush1.msra.mxu0 %v1671
        %v1673 = vand.u32 %v395, 4294901760
        %1674 = vmatprep.subr.mxu0 %v1673
        %v1675 = vand.u32 %v394, 4294901760
        %1676 = vmatpush1.msra.mxu0 %v1675
        %v1677 = vand.u32 %v397, 4294901760
        %1678 = vmatprep.subr.mxu0 %v1677
        %v1679 = vand.u32 %v396, 4294901760
        %1680 = vmatpush1.msra.mxu0 %v1679
        %v1681 = vand.u32 %v399, 4294901760
        %1682 = vmatprep.subr.mxu0 %v1681
        %v1683 = vand.u32 %v398, 4294901760
        %1684 = vmatpush1.msra.mxu0 %v1683
        %v1685 = vand.u32 %v401, 4294901760
        %1686 = vmatprep.subr.mxu0 %v1685
        %v1687 = vand.u32 %v400, 4294901760
        %1688 = vmatpush1.msra.mxu0 %v1687
        %v1689 = vand.u32 %v403, 4294901760
        %1690 = vmatprep.subr.mxu0 %v1689
        %v1691 = vand.u32 %v402, 4294901760
        %1692 = vmatpush1.msra.mxu0 %v1691
        %v1693 = vand.u32 %v405, 4294901760
        %1694 = vmatprep.subr.mxu0 %v1693
        %v1695 = vand.u32 %v404, 4294901760
        %1696 = vmatpush1.msra.mxu0 %v1695
        %v1697 = vand.u32 %v407, 4294901760
        %1698 = vmatprep.subr.mxu0 %v1697
        %v1699 = vand.u32 %v406, 4294901760
        %1700 = vmatpush1.msra.mxu0 %v1699
        %v1701 = vand.u32 %v409, 4294901760
        %1702 = vmatprep.subr.mxu0 %v1701
        %v1703 = vand.u32 %v408, 4294901760
        %1704 = vmatpush1.msra.mxu0 %v1703
        %v1705 = vand.u32 %v411, 4294901760
        %1706 = vmatprep.subr.mxu0 %v1705
        %v1707 = vand.u32 %v410, 4294901760
        %1708 = vmatpush1.msra.mxu0 %v1707
        %v1709 = vand.u32 %v413, 4294901760
        %1710 = vmatprep.subr.mxu0 %v1709
        %v1711 = vand.u32 %v412, 4294901760
        %1712 = vmatpush1.msra.mxu0 %v1711
        %v1713 = vand.u32 %v415, 4294901760
        %1714 = vmatprep.subr.mxu0 %v1713
        %v1715 = vand.u32 %v414, 4294901760
        %1716 = vmatpush1.msra.mxu0 %v1715
        %v1717 = vand.u32 %v417, 4294901760
        %1718 = vmatprep.subr.mxu0 %v1717
        %v1719 = vand.u32 %v416, 4294901760
        %1720 = vmatpush1.msra.mxu0 %v1719
        %v1721 = vand.u32 %v419, 4294901760
        %1722 = vmatprep.subr.mxu0 %v1721
        %v1723 = vand.u32 %v418, 4294901760
        %1724 = vmatpush1.msra.mxu0 %v1723
        %v1725 = vand.u32 %v421, 4294901760
        %1726 = vmatprep.subr.mxu0 %v1725
        %v1727 = vand.u32 %v420, 4294901760
        %1728 = vmatpush1.msra.mxu0 %v1727
        %v1729 = vand.u32 %v423, 4294901760
        %1730 = vmatprep.subr.mxu0 %v1729
        %v1731 = vand.u32 %v422, 4294901760
        %1732 = vmatpush1.msra.mxu0 %v1731
        %v1733 = vand.u32 %v425, 4294901760
        %1734 = vmatprep.subr.mxu0 %v1733
        %v1735 = vand.u32 %v424, 4294901760
        %1736 = vmatpush1.msra.mxu0 %v1735
        %v1737 = vand.u32 %v427, 4294901760
        %1738 = vmatprep.subr.mxu0 %v1737
        %v1739 = vand.u32 %v426, 4294901760
        %1740 = vmatpush1.msra.mxu0 %v1739
        %v1741 = vand.u32 %v429, 4294901760
        %1742 = vmatprep.subr.mxu0 %v1741
        %v1743 = vand.u32 %v428, 4294901760
        %1744 = vmatpush1.msra.mxu0 %v1743
        %v1745 = vand.u32 %v431, 4294901760
        %1746 = vmatprep.subr.mxu0 %v1745
        %v1747 = vand.u32 %v430, 4294901760
        %1748 = vmatpush1.msra.mxu0 %v1747
        %v1749 = vand.u32 %v433, 4294901760
        %1750 = vmatprep.subr.mxu0 %v1749
        %v1751 = vand.u32 %v432, 4294901760
        %1752 = vmatpush1.msra.mxu0 %v1751
        %v1753 = vand.u32 %v435, 4294901760
        %1754 = vmatprep.subr.mxu0 %v1753
        %v1755 = vand.u32 %v434, 4294901760
        %1756 = vmatpush1.msra.mxu0 %v1755
        %v1757 = vand.u32 %v437, 4294901760
        %1758 = vmatprep.subr.mxu0 %v1757
        %v1759 = vand.u32 %v436, 4294901760
        %1760 = vmatpush1.msra.mxu0 %v1759
        %v1761 = vand.u32 %v439, 4294901760
        %1762 = vmatprep.subr.mxu0 %v1761
        %v1763 = vand.u32 %v438, 4294901760
        %1764 = vmatpush1.msra.mxu0 %v1763
        %v1765 = vand.u32 %v441, 4294901760
        %1766 = vmatprep.subr.mxu0 %v1765
        %v1767 = vand.u32 %v440, 4294901760
        %1768 = vmatpush1.msra.mxu0 %v1767
        %v1769 = vand.u32 %v443, 4294901760
        %1770 = vmatprep.subr.mxu0 %v1769
        %v1771 = vand.u32 %v442, 4294901760
        %1772 = vmatpush1.msra.mxu0 %v1771
        %v1773 = vand.u32 %v377, 4294901760
        %1774 = vmatprep.mubr.f32.mxu0 %v1773
        %v1775 = vand.u32 %v376, 4294901760
        %1776 = vmatmul.mubr.f32.gmra.mrb[0].mxu0 %v1775
        %v1777 = vpop.f32.mrb[0].mxu0
        %v1778 = vadd.f32 %v1633, %v1777
        %v1779 = vpop.f32.mrb[0].mxu0
        %v1780 = vadd.f32 %v1635, %v1779
        %v1781 = vand.u32 %v379, 4294901760
        %1782 = vmatprep.mubr.f32.mxu0 %v1781
        %v1783 = vand.u32 %v378, 4294901760
        %1784 = vmatmul.mubr.f32.gmra.mrb[0].mxu0 %v1783
        %v1785 = vpop.f32.mrb[0].mxu0
        %v1786 = vadd.f32 %v1641, %v1785
        %v1787 = vpop.f32.mrb[0].mxu0
        %v1788 = vadd.f32 %v1643, %v1787
        %1789 = vdwg.mxu0
        %v1790 = vld [vmem:[%s301] sm:$0xff]
        %v1791 = vld [vmem:[%s301 + $0x8] sm:$0xff]
        %v1792 = vld [vmem:[%s301 + $0x10] sm:$0xff]
        %v1793 = vld [vmem:[%s301 + $0x18] sm:$0xff]
        %v1794 = vld [vmem:[%s301 + $0x20] sm:$0xff]
        %v1795 = vld [vmem:[%s301 + $0x28] sm:$0xff]
        %v1796 = vld [vmem:[%s301 + $0x30] sm:$0xff]
        %v1797 = vld [vmem:[%s301 + $0x38] sm:$0xff]
        %v1798 = vld [vmem:[%s301 + $0x40] sm:$0xff]
        %v1799 = vld [vmem:[%s301 + $0x48] sm:$0xff]
        %v1800 = vld [vmem:[%s301 + $0x50] sm:$0xff]
        %v1801 = vld [vmem:[%s301 + $0x58] sm:$0xff]
        %v1802 = vld [vmem:[%s301 + $0x60] sm:$0xff]
        %v1803 = vld [vmem:[%s301 + $0x68] sm:$0xff]
        %v1804 = vld [vmem:[%s301 + $0x70] sm:$0xff]
        %v1805 = vld [vmem:[%s301 + $0x78] sm:$0xff]
        %v1806 = vld [vmem:[%s301 + $0x80] sm:$0xff]
        %v1807 = vld [vmem:[%s301 + $0x88] sm:$0xff]
        %v1808 = vld [vmem:[%s301 + $0x90] sm:$0xff]
        %v1809 = vld [vmem:[%s301 + $0x98] sm:$0xff]
        %v1810 = vld [vmem:[%s301 + $0xa0] sm:$0xff]
        %v1811 = vld [vmem:[%s301 + $0xa8] sm:$0xff]
        %v1812 = vld [vmem:[%s301 + $0xb0] sm:$0xff]
        %v1813 = vld [vmem:[%s301 + $0xb8] sm:$0xff]
        %v1814 = vld [vmem:[%s301 + $0xc0] sm:$0xff]
        %v1815 = vld [vmem:[%s301 + $0xc8] sm:$0xff]
        %v1816 = vld [vmem:[%s301 + $0xd0] sm:$0xff]
        %v1817 = vld [vmem:[%s301 + $0xd8] sm:$0xff]
        %v1818 = vld [vmem:[%s301 + $0xe0] sm:$0xff]
        %v1819 = vld [vmem:[%s301 + $0xe8] sm:$0xff]
        %v1820 = vld [vmem:[%s301 + $0xf0] sm:$0xff]
        %v1821 = vld [vmem:[%s301 + $0xf8] sm:$0xff]
        %v1822 = vld [vmem:[%s301 + $0x100] sm:$0xff]
        %v1823 = vld [vmem:[%s301 + $0x108] sm:$0xff]
        %v1824 = vld [vmem:[%s301 + $0x110] sm:$0xff]
        %v1825 = vld [vmem:[%s301 + $0x118] sm:$0xff]
        %v1826 = vld [vmem:[%s301 + $0x120] sm:$0xff]
        %v1827 = vld [vmem:[%s301 + $0x128] sm:$0xff]
        %v1828 = vld [vmem:[%s301 + $0x130] sm:$0xff]
        %v1829 = vld [vmem:[%s301 + $0x138] sm:$0xff]
        %v1830 = vld [vmem:[%s301 + $0x140] sm:$0xff]
        %v1831 = vld [vmem:[%s301 + $0x148] sm:$0xff]
        %v1832 = vld [vmem:[%s301 + $0x150] sm:$0xff]
        %v1833 = vld [vmem:[%s301 + $0x158] sm:$0xff]
        %v1834 = vld [vmem:[%s301 + $0x160] sm:$0xff]
        %v1835 = vld [vmem:[%s301 + $0x168] sm:$0xff]
        %v1836 = vld [vmem:[%s301 + $0x170] sm:$0xff]
        %v1837 = vld [vmem:[%s301 + $0x178] sm:$0xff]
        %v1838 = vld [vmem:[%s301 + $0x180] sm:$0xff]
        %v1839 = vld [vmem:[%s301 + $0x188] sm:$0xff]
        %v1840 = vld [vmem:[%s301 + $0x190] sm:$0xff]
        %v1841 = vld [vmem:[%s301 + $0x198] sm:$0xff]
        %v1842 = vld [vmem:[%s301 + $0x1a0] sm:$0xff]
        %v1843 = vld [vmem:[%s301 + $0x1a8] sm:$0xff]
        %v1844 = vld [vmem:[%s301 + $0x1b0] sm:$0xff]
        %v1845 = vld [vmem:[%s301 + $0x1b8] sm:$0xff]
        %v1846 = vld [vmem:[%s301 + $0x1c0] sm:$0xff]
        %v1847 = vld [vmem:[%s301 + $0x1c8] sm:$0xff]
        %v1848 = vld [vmem:[%s301 + $0x1d0] sm:$0xff]
        %v1849 = vld [vmem:[%s301 + $0x1d8] sm:$0xff]
        %v1850 = vld [vmem:[%s301 + $0x1e0] sm:$0xff]
        %v1851 = vld [vmem:[%s301 + $0x1e8] sm:$0xff]
        %v1852 = vld [vmem:[%s301 + $0x1f0] sm:$0xff]
        %v1853 = vld [vmem:[%s301 + $0x1f8] sm:$0xff]
        %v1854 = vand.u32 %v1791, 4294901760
        %1855 = vmatprep.subr.mxu0 %v1854
        %v1856 = vand.u32 %v1790, 4294901760
        %1857 = vmatpush1.msra.mxu0 %v1856
        %v1858 = vand.u32 %v1793, 4294901760
        %1859 = vmatprep.subr.mxu0 %v1858
        %v1860 = vand.u32 %v1792, 4294901760
        %1861 = vmatpush1.msra.mxu0 %v1860
        %v1862 = vand.u32 %v1795, 4294901760
        %1863 = vmatprep.subr.mxu0 %v1862
        %v1864 = vand.u32 %v1794, 4294901760
        %1865 = vmatpush1.msra.mxu0 %v1864
        %v1866 = vand.u32 %v1797, 4294901760
        %1867 = vmatprep.subr.mxu0 %v1866
        %v1868 = vand.u32 %v1796, 4294901760
        %1869 = vmatpush1.msra.mxu0 %v1868
        %v1870 = vand.u32 %v1799, 4294901760
        %1871 = vmatprep.subr.mxu0 %v1870
        %v1872 = vand.u32 %v1798, 4294901760
        %1873 = vmatpush1.msra.mxu0 %v1872
        %v1874 = vand.u32 %v1801, 4294901760
        %1875 = vmatprep.subr.mxu0 %v1874
        %v1876 = vand.u32 %v1800, 4294901760
        %1877 = vmatpush1.msra.mxu0 %v1876
        %v1878 = vand.u32 %v1803, 4294901760
        %1879 = vmatprep.subr.mxu0 %v1878
        %v1880 = vand.u32 %v1802, 4294901760
        %1881 = vmatpush1.msra.mxu0 %v1880
        %v1882 = vand.u32 %v1805, 4294901760
        %1883 = vmatprep.subr.mxu0 %v1882
        %v1884 = vand.u32 %v1804, 4294901760
        %1885 = vmatpush1.msra.mxu0 %v1884
        %v1886 = vand.u32 %v1807, 4294901760
        %1887 = vmatprep.subr.mxu0 %v1886
        %v1888 = vand.u32 %v1806, 4294901760
        %1889 = vmatpush1.msra.mxu0 %v1888
        %v1890 = vand.u32 %v1809, 4294901760
        %1891 = vmatprep.subr.mxu0 %v1890
        %v1892 = vand.u32 %v1808, 4294901760
        %1893 = vmatpush1.msra.mxu0 %v1892
        %v1894 = vand.u32 %v1811, 4294901760
        %1895 = vmatprep.subr.mxu0 %v1894
        %v1896 = vand.u32 %v1810, 4294901760
        %1897 = vmatpush1.msra.mxu0 %v1896
        %v1898 = vand.u32 %v1813, 4294901760
        %1899 = vmatprep.subr.mxu0 %v1898
        %v1900 = vand.u32 %v1812, 4294901760
        %1901 = vmatpush1.msra.mxu0 %v1900
        %v1902 = vand.u32 %v1815, 4294901760
        %1903 = vmatprep.subr.mxu0 %v1902
        %v1904 = vand.u32 %v1814, 4294901760
        %1905 = vmatpush1.msra.mxu0 %v1904
        %v1906 = vand.u32 %v1817, 4294901760
        %1907 = vmatprep.subr.mxu0 %v1906
        %v1908 = vand.u32 %v1816, 4294901760
        %1909 = vmatpush1.msra.mxu0 %v1908
        %v1910 = vand.u32 %v1819, 4294901760
        %1911 = vmatprep.subr.mxu0 %v1910
        %v1912 = vand.u32 %v1818, 4294901760
        %1913 = vmatpush1.msra.mxu0 %v1912
        %v1914 = vand.u32 %v1821, 4294901760
        %1915 = vmatprep.subr.mxu0 %v1914
        %v1916 = vand.u32 %v1820, 4294901760
        %1917 = vmatpush1.msra.mxu0 %v1916
        %v1918 = vand.u32 %v1823, 4294901760
        %1919 = vmatprep.subr.mxu0 %v1918
        %v1920 = vand.u32 %v1822, 4294901760
        %1921 = vmatpush1.msra.mxu0 %v1920
        %v1922 = vand.u32 %v1825, 4294901760
        %1923 = vmatprep.subr.mxu0 %v1922
        %v1924 = vand.u32 %v1824, 4294901760
        %1925 = vmatpush1.msra.mxu0 %v1924
        %v1926 = vand.u32 %v1827, 4294901760
        %1927 = vmatprep.subr.mxu0 %v1926
        %v1928 = vand.u32 %v1826, 4294901760
        %1929 = vmatpush1.msra.mxu0 %v1928
        %v1930 = vand.u32 %v1829, 4294901760
        %1931 = vmatprep.subr.mxu0 %v1930
        %v1932 = vand.u32 %v1828, 4294901760
        %1933 = vmatpush1.msra.mxu0 %v1932
        %v1934 = vand.u32 %v1831, 4294901760
        %1935 = vmatprep.subr.mxu0 %v1934
        %v1936 = vand.u32 %v1830, 4294901760
        %1937 = vmatpush1.msra.mxu0 %v1936
        %v1938 = vand.u32 %v1833, 4294901760
        %1939 = vmatprep.subr.mxu0 %v1938
        %v1940 = vand.u32 %v1832, 4294901760
        %1941 = vmatpush1.msra.mxu0 %v1940
        %v1942 = vand.u32 %v1835, 4294901760
        %1943 = vmatprep.subr.mxu0 %v1942
        %v1944 = vand.u32 %v1834, 4294901760
        %1945 = vmatpush1.msra.mxu0 %v1944
        %v1946 = vand.u32 %v1837, 4294901760
        %1947 = vmatprep.subr.mxu0 %v1946
        %v1948 = vand.u32 %v1836, 4294901760
        %1949 = vmatpush1.msra.mxu0 %v1948
        %v1950 = vand.u32 %v1839, 4294901760
        %1951 = vmatprep.subr.mxu0 %v1950
        %v1952 = vand.u32 %v1838, 4294901760
        %1953 = vmatpush1.msra.mxu0 %v1952
        %v1954 = vand.u32 %v1841, 4294901760
        %1955 = vmatprep.subr.mxu0 %v1954
        %v1956 = vand.u32 %v1840, 4294901760
        %1957 = vmatpush1.msra.mxu0 %v1956
        %v1958 = vand.u32 %v1843, 4294901760
        %1959 = vmatprep.subr.mxu0 %v1958
        %v1960 = vand.u32 %v1842, 4294901760
        %1961 = vmatpush1.msra.mxu0 %v1960
        %v1962 = vand.u32 %v1845, 4294901760
        %1963 = vmatprep.subr.mxu0 %v1962
        %v1964 = vand.u32 %v1844, 4294901760
        %1965 = vmatpush1.msra.mxu0 %v1964
        %v1966 = vand.u32 %v1847, 4294901760
        %1967 = vmatprep.subr.mxu0 %v1966
        %v1968 = vand.u32 %v1846, 4294901760
        %1969 = vmatpush1.msra.mxu0 %v1968
        %v1970 = vand.u32 %v1849, 4294901760
        %1971 = vmatprep.subr.mxu0 %v1970
        %v1972 = vand.u32 %v1848, 4294901760
        %1973 = vmatpush1.msra.mxu0 %v1972
        %v1974 = vand.u32 %v1851, 4294901760
        %1975 = vmatprep.subr.mxu0 %v1974
        %v1976 = vand.u32 %v1850, 4294901760
        %1977 = vmatpush1.msra.mxu0 %v1976
        %v1978 = vand.u32 %v1853, 4294901760
        %1979 = vmatprep.subr.mxu0 %v1978
        %v1980 = vand.u32 %v1852, 4294901760
        %1981 = vmatpush1.msra.mxu0 %v1980
        %v1982 = vand.u32 %v377, 4294901760
        %v1983 = vsub.f32 %v377, %v1982
        %v1984 = vand.u32 %v1983, 4294901760
        %v1985 = vsub.f32 %v1983, %v1984
        %v1986 = vand.u32 %v1985, 4294901760
        %1987 = vmatprep.mubr.f32.mxu0 %v1986
        %v1988 = vand.u32 %v376, 4294901760
        %v1989 = vsub.f32 %v376, %v1988
        %v1990 = vand.u32 %v1989, 4294901760
        %v1991 = vsub.f32 %v1989, %v1990
        %v1992 = vand.u32 %v1991, 4294901760
        %1993 = vmatmul.mubr.f32.gmra.mrb[0].mxu0 %v1992
        %v1994 = vpop.f32.mrb[0].mxu0
        %v1995 = vadd.f32 0.0, %v1994
        %v1996 = vpop.f32.mrb[0].mxu0
        %v1997 = vadd.f32 0.0, %v1996
        %v1998 = vand.u32 %v379, 4294901760
        %v1999 = vsub.f32 %v379, %v1998
        %v2000 = vand.u32 %v1999, 4294901760
        %v2001 = vsub.f32 %v1999, %v2000
        %v2002 = vand.u32 %v2001, 4294901760
        %2003 = vmatprep.mubr.f32.mxu0 %v2002
        %v2004 = vand.u32 %v378, 4294901760
        %v2005 = vsub.f32 %v378, %v2004
        %v2006 = vand.u32 %v2005, 4294901760
        %v2007 = vsub.f32 %v2005, %v2006
        %v2008 = vand.u32 %v2007, 4294901760
        %2009 = vmatmul.mubr.f32.gmra.mrb[0].mxu0 %v2008
        %v2010 = vpop.f32.mrb[0].mxu0
        %v2011 = vadd.f32 0.0, %v2010
        %v2012 = vpop.f32.mrb[0].mxu0
        %v2013 = vadd.f32 0.0, %v2012
        %2014 = vdwg.mxu0
        %v2015 = vand.u32 %v1791, 4294901760
        %v2016 = vsub.f32 %v1791, %v2015
        %v2017 = vand.u32 %v2016, 4294901760
        %v2018 = vsub.f32 %v2016, %v2017
        %v2019 = vand.u32 %v2018, 4294901760
        %2020 = vmatprep.subr.mxu0 %v2019
        %v2021 = vand.u32 %v1790, 4294901760
        %v2022 = vsub.f32 %v1790, %v2021
        %v2023 = vand.u32 %v2022, 4294901760
        %v2024 = vsub.f32 %v2022, %v2023
        %v2025 = vand.u32 %v2024, 4294901760
        %2026 = vmatpush1.msra.mxu0 %v2025
        %v2027 = vand.u32 %v1793, 4294901760
        %v2028 = vsub.f32 %v1793, %v2027
        %v2029 = vand.u32 %v2028, 4294901760
        %v2030 = vsub.f32 %v2028, %v2029
        %v2031 = vand.u32 %v2030, 4294901760
        %2032 = vmatprep.subr.mxu0 %v2031
        %v2033 = vand.u32 %v1792, 4294901760
        %v2034 = vsub.f32 %v1792, %v2033
        %v2035 = vand.u32 %v2034, 4294901760
        %v2036 = vsub.f32 %v2034, %v2035
        %v2037 = vand.u32 %v2036, 4294901760
        %2038 = vmatpush1.msra.mxu0 %v2037
        %v2039 = vand.u32 %v1795, 4294901760
        %v2040 = vsub.f32 %v1795, %v2039
        %v2041 = vand.u32 %v2040, 4294901760
        %v2042 = vsub.f32 %v2040, %v2041
        %v2043 = vand.u32 %v2042, 4294901760
        %2044 = vmatprep.subr.mxu0 %v2043
        %v2045 = vand.u32 %v1794, 4294901760
        %v2046 = vsub.f32 %v1794, %v2045
        %v2047 = vand.u32 %v2046, 4294901760
        %v2048 = vsub.f32 %v2046, %v2047
        %v2049 = vand.u32 %v2048, 4294901760
        %2050 = vmatpush1.msra.mxu0 %v2049
        %v2051 = vand.u32 %v1797, 4294901760
        %v2052 = vsub.f32 %v1797, %v2051
        %v2053 = vand.u32 %v2052, 4294901760
        %v2054 = vsub.f32 %v2052, %v2053
        %v2055 = vand.u32 %v2054, 4294901760
        %2056 = vmatprep.subr.mxu0 %v2055
        %v2057 = vand.u32 %v1796, 4294901760
        %v2058 = vsub.f32 %v1796, %v2057
        %v2059 = vand.u32 %v2058, 4294901760
        %v2060 = vsub.f32 %v2058, %v2059
        %v2061 = vand.u32 %v2060, 4294901760
        %2062 = vmatpush1.msra.mxu0 %v2061
        %v2063 = vand.u32 %v1799, 4294901760
        %v2064 = vsub.f32 %v1799, %v2063
        %v2065 = vand.u32 %v2064, 4294901760
        %v2066 = vsub.f32 %v2064, %v2065
        %v2067 = vand.u32 %v2066, 4294901760
        %2068 = vmatprep.subr.mxu0 %v2067
        %v2069 = vand.u32 %v1798, 4294901760
        %v2070 = vsub.f32 %v1798, %v2069
        %v2071 = vand.u32 %v2070, 4294901760
        %v2072 = vsub.f32 %v2070, %v2071
        %v2073 = vand.u32 %v2072, 4294901760
        %2074 = vmatpush1.msra.mxu0 %v2073
        %v2075 = vand.u32 %v1801, 4294901760
        %v2076 = vsub.f32 %v1801, %v2075
        %v2077 = vand.u32 %v2076, 4294901760
        %v2078 = vsub.f32 %v2076, %v2077
        %v2079 = vand.u32 %v2078, 4294901760
        %2080 = vmatprep.subr.mxu0 %v2079
        %v2081 = vand.u32 %v1800, 4294901760
        %v2082 = vsub.f32 %v1800, %v2081
        %v2083 = vand.u32 %v2082, 4294901760
        %v2084 = vsub.f32 %v2082, %v2083
        %v2085 = vand.u32 %v2084, 4294901760
        %2086 = vmatpush1.msra.mxu0 %v2085
        %v2087 = vand.u32 %v1803, 4294901760
        %v2088 = vsub.f32 %v1803, %v2087
        %v2089 = vand.u32 %v2088, 4294901760
        %v2090 = vsub.f32 %v2088, %v2089
        %v2091 = vand.u32 %v2090, 4294901760
        %2092 = vmatprep.subr.mxu0 %v2091
        %v2093 = vand.u32 %v1802, 4294901760
        %v2094 = vsub.f32 %v1802, %v2093
        %v2095 = vand.u32 %v2094, 4294901760
        %v2096 = vsub.f32 %v2094, %v2095
        %v2097 = vand.u32 %v2096, 4294901760
        %2098 = vmatpush1.msra.mxu0 %v2097
        %v2099 = vand.u32 %v1805, 4294901760
        %v2100 = vsub.f32 %v1805, %v2099
        %v2101 = vand.u32 %v2100, 4294901760
        %v2102 = vsub.f32 %v2100, %v2101
        %v2103 = vand.u32 %v2102, 4294901760
        %2104 = vmatprep.subr.mxu0 %v2103
        %v2105 = vand.u32 %v1804, 4294901760
        %v2106 = vsub.f32 %v1804, %v2105
        %v2107 = vand.u32 %v2106, 4294901760
        %v2108 = vsub.f32 %v2106, %v2107
        %v2109 = vand.u32 %v2108, 4294901760
        %2110 = vmatpush1.msra.mxu0 %v2109
        %v2111 = vand.u32 %v1807, 4294901760
        %v2112 = vsub.f32 %v1807, %v2111
        %v2113 = vand.u32 %v2112, 4294901760
        %v2114 = vsub.f32 %v2112, %v2113
        %v2115 = vand.u32 %v2114, 4294901760
        %2116 = vmatprep.subr.mxu0 %v2115
        %v2117 = vand.u32 %v1806, 4294901760
        %v2118 = vsub.f32 %v1806, %v2117
        %v2119 = vand.u32 %v2118, 4294901760
        %v2120 = vsub.f32 %v2118, %v2119
        %v2121 = vand.u32 %v2120, 4294901760
        %2122 = vmatpush1.msra.mxu0 %v2121
        %v2123 = vand.u32 %v1809, 4294901760
        %v2124 = vsub.f32 %v1809, %v2123
        %v2125 = vand.u32 %v2124, 4294901760
        %v2126 = vsub.f32 %v2124, %v2125
        %v2127 = vand.u32 %v2126, 4294901760
        %2128 = vmatprep.subr.mxu0 %v2127
        %v2129 = vand.u32 %v1808, 4294901760
        %v2130 = vsub.f32 %v1808, %v2129
        %v2131 = vand.u32 %v2130, 4294901760
        %v2132 = vsub.f32 %v2130, %v2131
        %v2133 = vand.u32 %v2132, 4294901760
        %2134 = vmatpush1.msra.mxu0 %v2133
        %v2135 = vand.u32 %v1811, 4294901760
        %v2136 = vsub.f32 %v1811, %v2135
        %v2137 = vand.u32 %v2136, 4294901760
        %v2138 = vsub.f32 %v2136, %v2137
        %v2139 = vand.u32 %v2138, 4294901760
        %2140 = vmatprep.subr.mxu0 %v2139
        %v2141 = vand.u32 %v1810, 4294901760
        %v2142 = vsub.f32 %v1810, %v2141
        %v2143 = vand.u32 %v2142, 4294901760
        %v2144 = vsub.f32 %v2142, %v2143
        %v2145 = vand.u32 %v2144, 4294901760
        %2146 = vmatpush1.msra.mxu0 %v2145
        %v2147 = vand.u32 %v1813, 4294901760
        %v2148 = vsub.f32 %v1813, %v2147
        %v2149 = vand.u32 %v2148, 4294901760
        %v2150 = vsub.f32 %v2148, %v2149
        %v2151 = vand.u32 %v2150, 4294901760
        %2152 = vmatprep.subr.mxu0 %v2151
        %v2153 = vand.u32 %v1812, 4294901760
        %v2154 = vsub.f32 %v1812, %v2153
        %v2155 = vand.u32 %v2154, 4294901760
        %v2156 = vsub.f32 %v2154, %v2155
        %v2157 = vand.u32 %v2156, 4294901760
        %2158 = vmatpush1.msra.mxu0 %v2157
        %v2159 = vand.u32 %v1815, 4294901760
        %v2160 = vsub.f32 %v1815, %v2159
        %v2161 = vand.u32 %v2160, 4294901760
        %v2162 = vsub.f32 %v2160, %v2161
        %v2163 = vand.u32 %v2162, 4294901760
        %2164 = vmatprep.subr.mxu0 %v2163
        %v2165 = vand.u32 %v1814, 4294901760
        %v2166 = vsub.f32 %v1814, %v2165
        %v2167 = vand.u32 %v2166, 4294901760
        %v2168 = vsub.f32 %v2166, %v2167
        %v2169 = vand.u32 %v2168, 4294901760
        %2170 = vmatpush1.msra.mxu0 %v2169
        %v2171 = vand.u32 %v1817, 4294901760
        %v2172 = vsub.f32 %v1817, %v2171
        %v2173 = vand.u32 %v2172, 4294901760
        %v2174 = vsub.f32 %v2172, %v2173
        %v2175 = vand.u32 %v2174, 4294901760
        %2176 = vmatprep.subr.mxu0 %v2175
        %v2177 = vand.u32 %v1816, 4294901760
        %v2178 = vsub.f32 %v1816, %v2177
        %v2179 = vand.u32 %v2178, 4294901760
        %v2180 = vsub.f32 %v2178, %v2179
        %v2181 = vand.u32 %v2180, 4294901760
        %2182 = vmatpush1.msra.mxu0 %v2181
        %v2183 = vand.u32 %v1819, 4294901760
        %v2184 = vsub.f32 %v1819, %v2183
        %v2185 = vand.u32 %v2184, 4294901760
        %v2186 = vsub.f32 %v2184, %v2185
        %v2187 = vand.u32 %v2186, 4294901760
        %2188 = vmatprep.subr.mxu0 %v2187
        %v2189 = vand.u32 %v1818, 4294901760
        %v2190 = vsub.f32 %v1818, %v2189
        %v2191 = vand.u32 %v2190, 4294901760
        %v2192 = vsub.f32 %v2190, %v2191
        %v2193 = vand.u32 %v2192, 4294901760
        %2194 = vmatpush1.msra.mxu0 %v2193
        %v2195 = vand.u32 %v1821, 4294901760
        %v2196 = vsub.f32 %v1821, %v2195
        %v2197 = vand.u32 %v2196, 4294901760
        %v2198 = vsub.f32 %v2196, %v2197
        %v2199 = vand.u32 %v2198, 4294901760
        %2200 = vmatprep.subr.mxu0 %v2199
        %v2201 = vand.u32 %v1820, 4294901760
        %v2202 = vsub.f32 %v1820, %v2201
        %v2203 = vand.u32 %v2202, 4294901760
        %v2204 = vsub.f32 %v2202, %v2203
        %v2205 = vand.u32 %v2204, 4294901760
        %2206 = vmatpush1.msra.mxu0 %v2205
        %v2207 = vand.u32 %v1823, 4294901760
        %v2208 = vsub.f32 %v1823, %v2207
        %v2209 = vand.u32 %v2208, 4294901760
        %v2210 = vsub.f32 %v2208, %v2209
        %v2211 = vand.u32 %v2210, 4294901760
        %2212 = vmatprep.subr.mxu0 %v2211
        %v2213 = vand.u32 %v1822, 4294901760
        %v2214 = vsub.f32 %v1822, %v2213
        %v2215 = vand.u32 %v2214, 4294901760
        %v2216 = vsub.f32 %v2214, %v2215
        %v2217 = vand.u32 %v2216, 4294901760
        %2218 = vmatpush1.msra.mxu0 %v2217
        %v2219 = vand.u32 %v1825, 4294901760
        %v2220 = vsub.f32 %v1825, %v2219
        %v2221 = vand.u32 %v2220, 4294901760
        %v2222 = vsub.f32 %v2220, %v2221
        %v2223 = vand.u32 %v2222, 4294901760
        %2224 = vmatprep.subr.mxu0 %v2223
        %v2225 = vand.u32 %v1824, 4294901760
        %v2226 = vsub.f32 %v1824, %v2225
        %v2227 = vand.u32 %v2226, 4294901760
        %v2228 = vsub.f32 %v2226, %v2227
        %v2229 = vand.u32 %v2228, 4294901760
        %2230 = vmatpush1.msra.mxu0 %v2229
        %v2231 = vand.u32 %v1827, 4294901760
        %v2232 = vsub.f32 %v1827, %v2231
        %v2233 = vand.u32 %v2232, 4294901760
        %v2234 = vsub.f32 %v2232, %v2233
        %v2235 = vand.u32 %v2234, 4294901760
        %2236 = vmatprep.subr.mxu0 %v2235
        %v2237 = vand.u32 %v1826, 4294901760
        %v2238 = vsub.f32 %v1826, %v2237
        %v2239 = vand.u32 %v2238, 4294901760
        %v2240 = vsub.f32 %v2238, %v2239
        %v2241 = vand.u32 %v2240, 4294901760
        %2242 = vmatpush1.msra.mxu0 %v2241
        %v2243 = vand.u32 %v1829, 4294901760
        %v2244 = vsub.f32 %v1829, %v2243
        %v2245 = vand.u32 %v2244, 4294901760
        %v2246 = vsub.f32 %v2244, %v2245
        %v2247 = vand.u32 %v2246, 4294901760
        %2248 = vmatprep.subr.mxu0 %v2247
        %v2249 = vand.u32 %v1828, 4294901760
        %v2250 = vsub.f32 %v1828, %v2249
        %v2251 = vand.u32 %v2250, 4294901760
        %v2252 = vsub.f32 %v2250, %v2251
        %v2253 = vand.u32 %v2252, 4294901760
        %2254 = vmatpush1.msra.mxu0 %v2253
        %v2255 = vand.u32 %v1831, 4294901760
        %v2256 = vsub.f32 %v1831, %v2255
        %v2257 = vand.u32 %v2256, 4294901760
        %v2258 = vsub.f32 %v2256, %v2257
        %v2259 = vand.u32 %v2258, 4294901760
        %2260 = vmatprep.subr.mxu0 %v2259
        %v2261 = vand.u32 %v1830, 4294901760
        %v2262 = vsub.f32 %v1830, %v2261
        %v2263 = vand.u32 %v2262, 4294901760
        %v2264 = vsub.f32 %v2262, %v2263
        %v2265 = vand.u32 %v2264, 4294901760
        %2266 = vmatpush1.msra.mxu0 %v2265
        %v2267 = vand.u32 %v1833, 4294901760
        %v2268 = vsub.f32 %v1833, %v2267
        %v2269 = vand.u32 %v2268, 4294901760
        %v2270 = vsub.f32 %v2268, %v2269
        %v2271 = vand.u32 %v2270, 4294901760
        %2272 = vmatprep.subr.mxu0 %v2271
        %v2273 = vand.u32 %v1832, 4294901760
        %v2274 = vsub.f32 %v1832, %v2273
        %v2275 = vand.u32 %v2274, 4294901760
        %v2276 = vsub.f32 %v2274, %v2275
        %v2277 = vand.u32 %v2276, 4294901760
        %2278 = vmatpush1.msra.mxu0 %v2277
        %v2279 = vand.u32 %v1835, 4294901760
        %v2280 = vsub.f32 %v1835, %v2279
        %v2281 = vand.u32 %v2280, 4294901760
        %v2282 = vsub.f32 %v2280, %v2281
        %v2283 = vand.u32 %v2282, 4294901760
        %2284 = vmatprep.subr.mxu0 %v2283
        %v2285 = vand.u32 %v1834, 4294901760
        %v2286 = vsub.f32 %v1834, %v2285
        %v2287 = vand.u32 %v2286, 4294901760
        %v2288 = vsub.f32 %v2286, %v2287
        %v2289 = vand.u32 %v2288, 4294901760
        %2290 = vmatpush1.msra.mxu0 %v2289
        %v2291 = vand.u32 %v1837, 4294901760
        %v2292 = vsub.f32 %v1837, %v2291
        %v2293 = vand.u32 %v2292, 4294901760
        %v2294 = vsub.f32 %v2292, %v2293
        %v2295 = vand.u32 %v2294, 4294901760
        %2296 = vmatprep.subr.mxu0 %v2295
        %v2297 = vand.u32 %v1836, 4294901760
        %v2298 = vsub.f32 %v1836, %v2297
        %v2299 = vand.u32 %v2298, 4294901760
        %v2300 = vsub.f32 %v2298, %v2299
        %v2301 = vand.u32 %v2300, 4294901760
        %2302 = vmatpush1.msra.mxu0 %v2301
        %v2303 = vand.u32 %v1839, 4294901760
        %v2304 = vsub.f32 %v1839, %v2303
        %v2305 = vand.u32 %v2304, 4294901760
        %v2306 = vsub.f32 %v2304, %v2305
        %v2307 = vand.u32 %v2306, 4294901760
        %2308 = vmatprep.subr.mxu0 %v2307
        %v2309 = vand.u32 %v1838, 4294901760
        %v2310 = vsub.f32 %v1838, %v2309
        %v2311 = vand.u32 %v2310, 4294901760
        %v2312 = vsub.f32 %v2310, %v2311
        %v2313 = vand.u32 %v2312, 4294901760
        %2314 = vmatpush1.msra.mxu0 %v2313
        %v2315 = vand.u32 %v1841, 4294901760
        %v2316 = vsub.f32 %v1841, %v2315
        %v2317 = vand.u32 %v2316, 4294901760
        %v2318 = vsub.f32 %v2316, %v2317
        %v2319 = vand.u32 %v2318, 4294901760
        %2320 = vmatprep.subr.mxu0 %v2319
        %v2321 = vand.u32 %v1840, 4294901760
        %v2322 = vsub.f32 %v1840, %v2321
        %v2323 = vand.u32 %v2322, 4294901760
        %v2324 = vsub.f32 %v2322, %v2323
        %v2325 = vand.u32 %v2324, 4294901760
        %2326 = vmatpush1.msra.mxu0 %v2325
        %v2327 = vand.u32 %v1843, 4294901760
        %v2328 = vsub.f32 %v1843, %v2327
        %v2329 = vand.u32 %v2328, 4294901760
        %v2330 = vsub.f32 %v2328, %v2329
        %v2331 = vand.u32 %v2330, 4294901760
        %2332 = vmatprep.subr.mxu0 %v2331
        %v2333 = vand.u32 %v1842, 4294901760
        %v2334 = vsub.f32 %v1842, %v2333
        %v2335 = vand.u32 %v2334, 4294901760
        %v2336 = vsub.f32 %v2334, %v2335
        %v2337 = vand.u32 %v2336, 4294901760
        %2338 = vmatpush1.msra.mxu0 %v2337
        %v2339 = vand.u32 %v1845, 4294901760
        %v2340 = vsub.f32 %v1845, %v2339
        %v2341 = vand.u32 %v2340, 4294901760
        %v2342 = vsub.f32 %v2340, %v2341
        %v2343 = vand.u32 %v2342, 4294901760
        %2344 = vmatprep.subr.mxu0 %v2343
        %v2345 = vand.u32 %v1844, 4294901760
        %v2346 = vsub.f32 %v1844, %v2345
        %v2347 = vand.u32 %v2346, 4294901760
        %v2348 = vsub.f32 %v2346, %v2347
        %v2349 = vand.u32 %v2348, 4294901760
        %2350 = vmatpush1.msra.mxu0 %v2349
        %v2351 = vand.u32 %v1847, 4294901760
        %v2352 = vsub.f32 %v1847, %v2351
        %v2353 = vand.u32 %v2352, 4294901760
        %v2354 = vsub.f32 %v2352, %v2353
        %v2355 = vand.u32 %v2354, 4294901760
        %2356 = vmatprep.subr.mxu0 %v2355
        %v2357 = vand.u32 %v1846, 4294901760
        %v2358 = vsub.f32 %v1846, %v2357
        %v2359 = vand.u32 %v2358, 4294901760
        %v2360 = vsub.f32 %v2358, %v2359
        %v2361 = vand.u32 %v2360, 4294901760
        %2362 = vmatpush1.msra.mxu0 %v2361
        %v2363 = vand.u32 %v1849, 4294901760
        %v2364 = vsub.f32 %v1849, %v2363
        %v2365 = vand.u32 %v2364, 4294901760
        %v2366 = vsub.f32 %v2364, %v2365
        %v2367 = vand.u32 %v2366, 4294901760
        %2368 = vmatprep.subr.mxu0 %v2367
        %v2369 = vand.u32 %v1848, 4294901760
        %v2370 = vsub.f32 %v1848, %v2369
        %v2371 = vand.u32 %v2370, 4294901760
        %v2372 = vsub.f32 %v2370, %v2371
        %v2373 = vand.u32 %v2372, 4294901760
        %2374 = vmatpush1.msra.mxu0 %v2373
        %v2375 = vand.u32 %v1851, 4294901760
        %v2376 = vsub.f32 %v1851, %v2375
        %v2377 = vand.u32 %v2376, 4294901760
        %v2378 = vsub.f32 %v2376, %v2377
        %v2379 = vand.u32 %v2378, 4294901760
        %2380 = vmatprep.subr.mxu0 %v2379
        %v2381 = vand.u32 %v1850, 4294901760
        %v2382 = vsub.f32 %v1850, %v2381
        %v2383 = vand.u32 %v2382, 4294901760
        %v2384 = vsub.f32 %v2382, %v2383
        %v2385 = vand.u32 %v2384, 4294901760
        %2386 = vmatpush1.msra.mxu0 %v2385
        %v2387 = vand.u32 %v1853, 4294901760
        %v2388 = vsub.f32 %v1853, %v2387
        %v2389 = vand.u32 %v2388, 4294901760
        %v2390 = vsub.f32 %v2388, %v2389
        %v2391 = vand.u32 %v2390, 4294901760
        %2392 = vmatprep.subr.mxu0 %v2391
        %v2393 = vand.u32 %v1852, 4294901760
        %v2394 = vsub.f32 %v1852, %v2393
        %v2395 = vand.u32 %v2394, 4294901760
        %v2396 = vsub.f32 %v2394, %v2395
        %v2397 = vand.u32 %v2396, 4294901760
        %2398 = vmatpush1.msra.mxu0 %v2397
        %v2399 = vand.u32 %v377, 4294901760
        %2400 = vmatprep.mubr.f32.mxu0 %v2399
        %v2401 = vand.u32 %v376, 4294901760
        %2402 = vmatmul.mubr.f32.gmra.mrb[0].mxu0 %v2401
        %v2403 = vpop.f32.mrb[0].mxu0
        %v2404 = vadd.f32 %v1995, %v2403
        %v2405 = vpop.f32.mrb[0].mxu0
        %v2406 = vadd.f32 %v1997, %v2405
        %v2407 = vand.u32 %v379, 4294901760
        %2408 = vmatprep.mubr.f32.mxu0 %v2407
        %v2409 = vand.u32 %v378, 4294901760
        %2410 = vmatmul.mubr.f32.gmra.mrb[0].mxu0 %v2409
        %v2411 = vpop.f32.mrb[0].mxu0
        %v2412 = vadd.f32 %v2011, %v2411
        %v2413 = vpop.f32.mrb[0].mxu0
        %v2414 = vadd.f32 %v2013, %v2413
        %2415 = vdwg.mxu0
        %v2416 = vand.u32 %v1791, 4294901760
        %v2417 = vsub.f32 %v1791, %v2416
        %2418 = vmatprep.subr.mxu0 %v2417
        %v2419 = vand.u32 %v1790, 4294901760
        %v2420 = vsub.f32 %v1790, %v2419
        %2421 = vmatpush1.msra.mxu0 %v2420
        %v2422 = vand.u32 %v1793, 4294901760
        %v2423 = vsub.f32 %v1793, %v2422
        %2424 = vmatprep.subr.mxu0 %v2423
        %v2425 = vand.u32 %v1792, 4294901760
        %v2426 = vsub.f32 %v1792, %v2425
        %2427 = vmatpush1.msra.mxu0 %v2426
        %v2428 = vand.u32 %v1795, 4294901760
        %v2429 = vsub.f32 %v1795, %v2428
        %2430 = vmatprep.subr.mxu0 %v2429
        %v2431 = vand.u32 %v1794, 4294901760
        %v2432 = vsub.f32 %v1794, %v2431
        %2433 = vmatpush1.msra.mxu0 %v2432
        %v2434 = vand.u32 %v1797, 4294901760
        %v2435 = vsub.f32 %v1797, %v2434
        %2436 = vmatprep.subr.mxu0 %v2435
        %v2437 = vand.u32 %v1796, 4294901760
        %v2438 = vsub.f32 %v1796, %v2437
        %2439 = vmatpush1.msra.mxu0 %v2438
        %v2440 = vand.u32 %v1799, 4294901760
        %v2441 = vsub.f32 %v1799, %v2440
        %2442 = vmatprep.subr.mxu0 %v2441
        %v2443 = vand.u32 %v1798, 4294901760
        %v2444 = vsub.f32 %v1798, %v2443
        %2445 = vmatpush1.msra.mxu0 %v2444
        %v2446 = vand.u32 %v1801, 4294901760
        %v2447 = vsub.f32 %v1801, %v2446
        %2448 = vmatprep.subr.mxu0 %v2447
        %v2449 = vand.u32 %v1800, 4294901760
        %v2450 = vsub.f32 %v1800, %v2449
        %2451 = vmatpush1.msra.mxu0 %v2450
        %v2452 = vand.u32 %v1803, 4294901760
        %v2453 = vsub.f32 %v1803, %v2452
        %2454 = vmatprep.subr.mxu0 %v2453
        %v2455 = vand.u32 %v1802, 4294901760
        %v2456 = vsub.f32 %v1802, %v2455
        %2457 = vmatpush1.msra.mxu0 %v2456
        %v2458 = vand.u32 %v1805, 4294901760
        %v2459 = vsub.f32 %v1805, %v2458
        %2460 = vmatprep.subr.mxu0 %v2459
        %v2461 = vand.u32 %v1804, 4294901760
        %v2462 = vsub.f32 %v1804, %v2461
        %2463 = vmatpush1.msra.mxu0 %v2462
        %v2464 = vand.u32 %v1807, 4294901760
        %v2465 = vsub.f32 %v1807, %v2464
        %2466 = vmatprep.subr.mxu0 %v2465
        %v2467 = vand.u32 %v1806, 4294901760
        %v2468 = vsub.f32 %v1806, %v2467
        %2469 = vmatpush1.msra.mxu0 %v2468
        %v2470 = vand.u32 %v1809, 4294901760
        %v2471 = vsub.f32 %v1809, %v2470
        %2472 = vmatprep.subr.mxu0 %v2471
        %v2473 = vand.u32 %v1808, 4294901760
        %v2474 = vsub.f32 %v1808, %v2473
        %2475 = vmatpush1.msra.mxu0 %v2474
        %v2476 = vand.u32 %v1811, 4294901760
        %v2477 = vsub.f32 %v1811, %v2476
        %2478 = vmatprep.subr.mxu0 %v2477
        %v2479 = vand.u32 %v1810, 4294901760
        %v2480 = vsub.f32 %v1810, %v2479
        %2481 = vmatpush1.msra.mxu0 %v2480
        %v2482 = vand.u32 %v1813, 4294901760
        %v2483 = vsub.f32 %v1813, %v2482
        %2484 = vmatprep.subr.mxu0 %v2483
        %v2485 = vand.u32 %v1812, 4294901760
        %v2486 = vsub.f32 %v1812, %v2485
        %2487 = vmatpush1.msra.mxu0 %v2486
        %v2488 = vand.u32 %v1815, 4294901760
        %v2489 = vsub.f32 %v1815, %v2488
        %2490 = vmatprep.subr.mxu0 %v2489
        %v2491 = vand.u32 %v1814, 4294901760
        %v2492 = vsub.f32 %v1814, %v2491
        %2493 = vmatpush1.msra.mxu0 %v2492
        %v2494 = vand.u32 %v1817, 4294901760
        %v2495 = vsub.f32 %v1817, %v2494
        %2496 = vmatprep.subr.mxu0 %v2495
        %v2497 = vand.u32 %v1816, 4294901760
        %v2498 = vsub.f32 %v1816, %v2497
        %2499 = vmatpush1.msra.mxu0 %v2498
        %v2500 = vand.u32 %v1819, 4294901760
        %v2501 = vsub.f32 %v1819, %v2500
        %2502 = vmatprep.subr.mxu0 %v2501
        %v2503 = vand.u32 %v1818, 4294901760
        %v2504 = vsub.f32 %v1818, %v2503
        %2505 = vmatpush1.msra.mxu0 %v2504
        %v2506 = vand.u32 %v1821, 4294901760
        %v2507 = vsub.f32 %v1821, %v2506
        %2508 = vmatprep.subr.mxu0 %v2507
        %v2509 = vand.u32 %v1820, 4294901760
        %v2510 = vsub.f32 %v1820, %v2509
        %2511 = vmatpush1.msra.mxu0 %v2510
        %v2512 = vand.u32 %v1823, 4294901760
        %v2513 = vsub.f32 %v1823, %v2512
        %2514 = vmatprep.subr.mxu0 %v2513
        %v2515 = vand.u32 %v1822, 4294901760
        %v2516 = vsub.f32 %v1822, %v2515
        %2517 = vmatpush1.msra.mxu0 %v2516
        %v2518 = vand.u32 %v1825, 4294901760
        %v2519 = vsub.f32 %v1825, %v2518
        %2520 = vmatprep.subr.mxu0 %v2519
        %v2521 = vand.u32 %v1824, 4294901760
        %v2522 = vsub.f32 %v1824, %v2521
        %2523 = vmatpush1.msra.mxu0 %v2522
        %v2524 = vand.u32 %v1827, 4294901760
        %v2525 = vsub.f32 %v1827, %v2524
        %2526 = vmatprep.subr.mxu0 %v2525
        %v2527 = vand.u32 %v1826, 4294901760
        %v2528 = vsub.f32 %v1826, %v2527
        %2529 = vmatpush1.msra.mxu0 %v2528
        %v2530 = vand.u32 %v1829, 4294901760
        %v2531 = vsub.f32 %v1829, %v2530
        %2532 = vmatprep.subr.mxu0 %v2531
        %v2533 = vand.u32 %v1828, 4294901760
        %v2534 = vsub.f32 %v1828, %v2533
        %2535 = vmatpush1.msra.mxu0 %v2534
        %v2536 = vand.u32 %v1831, 4294901760
        %v2537 = vsub.f32 %v1831, %v2536
        %2538 = vmatprep.subr.mxu0 %v2537
        %v2539 = vand.u32 %v1830, 4294901760
        %v2540 = vsub.f32 %v1830, %v2539
        %2541 = vmatpush1.msra.mxu0 %v2540
        %v2542 = vand.u32 %v1833, 4294901760
        %v2543 = vsub.f32 %v1833, %v2542
        %2544 = vmatprep.subr.mxu0 %v2543
        %v2545 = vand.u32 %v1832, 4294901760
        %v2546 = vsub.f32 %v1832, %v2545
        %2547 = vmatpush1.msra.mxu0 %v2546
        %v2548 = vand.u32 %v1835, 4294901760
        %v2549 = vsub.f32 %v1835, %v2548
        %2550 = vmatprep.subr.mxu0 %v2549
        %v2551 = vand.u32 %v1834, 4294901760
        %v2552 = vsub.f32 %v1834, %v2551
        %2553 = vmatpush1.msra.mxu0 %v2552
        %v2554 = vand.u32 %v1837, 4294901760
        %v2555 = vsub.f32 %v1837, %v2554
        %2556 = vmatprep.subr.mxu0 %v2555
        %v2557 = vand.u32 %v1836, 4294901760
        %v2558 = vsub.f32 %v1836, %v2557
        %2559 = vmatpush1.msra.mxu0 %v2558
        %v2560 = vand.u32 %v1839, 4294901760
        %v2561 = vsub.f32 %v1839, %v2560
        %2562 = vmatprep.subr.mxu0 %v2561
        %v2563 = vand.u32 %v1838, 4294901760
        %v2564 = vsub.f32 %v1838, %v2563
        %2565 = vmatpush1.msra.mxu0 %v2564
        %v2566 = vand.u32 %v1841, 4294901760
        %v2567 = vsub.f32 %v1841, %v2566
        %2568 = vmatprep.subr.mxu0 %v2567
        %v2569 = vand.u32 %v1840, 4294901760
        %v2570 = vsub.f32 %v1840, %v2569
        %2571 = vmatpush1.msra.mxu0 %v2570
        %v2572 = vand.u32 %v1843, 4294901760
        %v2573 = vsub.f32 %v1843, %v2572
        %2574 = vmatprep.subr.mxu0 %v2573
        %v2575 = vand.u32 %v1842, 4294901760
        %v2576 = vsub.f32 %v1842, %v2575
        %2577 = vmatpush1.msra.mxu0 %v2576
        %v2578 = vand.u32 %v1845, 4294901760
        %v2579 = vsub.f32 %v1845, %v2578
        %2580 = vmatprep.subr.mxu0 %v2579
        %v2581 = vand.u32 %v1844, 4294901760
        %v2582 = vsub.f32 %v1844, %v2581
        %2583 = vmatpush1.msra.mxu0 %v2582
        %v2584 = vand.u32 %v1847, 4294901760
        %v2585 = vsub.f32 %v1847, %v2584
        %2586 = vmatprep.subr.mxu0 %v2585
        %v2587 = vand.u32 %v1846, 4294901760
        %v2588 = vsub.f32 %v1846, %v2587
        %2589 = vmatpush1.msra.mxu0 %v2588
        %v2590 = vand.u32 %v1849, 4294901760
        %v2591 = vsub.f32 %v1849, %v2590
        %2592 = vmatprep.subr.mxu0 %v2591
        %v2593 = vand.u32 %v1848, 4294901760
        %v2594 = vsub.f32 %v1848, %v2593
        %2595 = vmatpush1.msra.mxu0 %v2594
        %v2596 = vand.u32 %v1851, 4294901760
        %v2597 = vsub.f32 %v1851, %v2596
        %2598 = vmatprep.subr.mxu0 %v2597
        %v2599 = vand.u32 %v1850, 4294901760
        %v2600 = vsub.f32 %v1850, %v2599
        %2601 = vmatpush1.msra.mxu0 %v2600
        %v2602 = vand.u32 %v1853, 4294901760
        %v2603 = vsub.f32 %v1853, %v2602
        %2604 = vmatprep.subr.mxu0 %v2603
        %v2605 = vand.u32 %v1852, 4294901760
        %v2606 = vsub.f32 %v1852, %v2605
        %2607 = vmatpush1.msra.mxu0 %v2606
        %v2608 = vand.u32 %v377, 4294901760
        %v2609 = vsub.f32 %v377, %v2608
        %2610 = vmatprep.mubr.f32.mxu0 %v2609
        %v2611 = vand.u32 %v376, 4294901760
        %v2612 = vsub.f32 %v376, %v2611
        %2613 = vmatmul.mubr.f32.gmra.mrb[0].mxu0 %v2612
        %v2614 = vpop.f32.mrb[0].mxu0
        %v2615 = vadd.f32 %v2404, %v2614
        %v2616 = vpop.f32.mrb[0].mxu0
        %v2617 = vadd.f32 %v2406, %v2616
        %v2618 = vand.u32 %v379, 4294901760
        %v2619 = vsub.f32 %v379, %v2618
        %2620 = vmatprep.mubr.f32.mxu0 %v2619
        %v2621 = vand.u32 %v378, 4294901760
        %v2622 = vsub.f32 %v378, %v2621
        %2623 = vmatmul.mubr.f32.gmra.mrb[0].mxu0 %v2622
        %v2624 = vpop.f32.mrb[0].mxu0
        %v2625 = vadd.f32 %v2412, %v2624
        %v2626 = vpop.f32.mrb[0].mxu0
        %v2627 = vadd.f32 %v2414, %v2626
        %2628 = vdwg.mxu0
        %v2629 = vand.u32 %v1791, 4294901760
        %2630 = vmatprep.subr.mxu0 %v2629
        %v2631 = vand.u32 %v1790, 4294901760
        %2632 = vmatpush1.msra.mxu0 %v2631
        %v2633 = vand.u32 %v1793, 4294901760
        %2634 = vmatprep.subr.mxu0 %v2633
        %v2635 = vand.u32 %v1792, 4294901760
        %2636 = vmatpush1.msra.mxu0 %v2635
        %v2637 = vand.u32 %v1795, 4294901760
        %2638 = vmatprep.subr.mxu0 %v2637
        %v2639 = vand.u32 %v1794, 4294901760
        %2640 = vmatpush1.msra.mxu0 %v2639
        %v2641 = vand.u32 %v1797, 4294901760
        %2642 = vmatprep.subr.mxu0 %v2641
        %v2643 = vand.u32 %v1796, 4294901760
        %2644 = vmatpush1.msra.mxu0 %v2643
        %v2645 = vand.u32 %v1799, 4294901760
        %2646 = vmatprep.subr.mxu0 %v2645
        %v2647 = vand.u32 %v1798, 4294901760
        %2648 = vmatpush1.msra.mxu0 %v2647
        %v2649 = vand.u32 %v1801, 4294901760
        %2650 = vmatprep.subr.mxu0 %v2649
        %v2651 = vand.u32 %v1800, 4294901760
        %2652 = vmatpush1.msra.mxu0 %v2651
        %v2653 = vand.u32 %v1803, 4294901760
        %2654 = vmatprep.subr.mxu0 %v2653
        %v2655 = vand.u32 %v1802, 4294901760
        %2656 = vmatpush1.msra.mxu0 %v2655
        %v2657 = vand.u32 %v1805, 4294901760
        %2658 = vmatprep.subr.mxu0 %v2657
        %v2659 = vand.u32 %v1804, 4294901760
        %2660 = vmatpush1.msra.mxu0 %v2659
        %v2661 = vand.u32 %v1807, 4294901760
        %2662 = vmatprep.subr.mxu0 %v2661
        %v2663 = vand.u32 %v1806, 4294901760
        %2664 = vmatpush1.msra.mxu0 %v2663
        %v2665 = vand.u32 %v1809, 4294901760
        %2666 = vmatprep.subr.mxu0 %v2665
        %v2667 = vand.u32 %v1808, 4294901760
        %2668 = vmatpush1.msra.mxu0 %v2667
        %v2669 = vand.u32 %v1811, 4294901760
        %2670 = vmatprep.subr.mxu0 %v2669
        %v2671 = vand.u32 %v1810, 4294901760
        %2672 = vmatpush1.msra.mxu0 %v2671
        %v2673 = vand.u32 %v1813, 4294901760
        %2674 = vmatprep.subr.mxu0 %v2673
        %v2675 = vand.u32 %v1812, 4294901760
        %2676 = vmatpush1.msra.mxu0 %v2675
        %v2677 = vand.u32 %v1815, 4294901760
        %2678 = vmatprep.subr.mxu0 %v2677
        %v2679 = vand.u32 %v1814, 4294901760
        %2680 = vmatpush1.msra.mxu0 %v2679
        %v2681 = vand.u32 %v1817, 4294901760
        %2682 = vmatprep.subr.mxu0 %v2681
        %v2683 = vand.u32 %v1816, 4294901760
        %2684 = vmatpush1.msra.mxu0 %v2683
        %v2685 = vand.u32 %v1819, 4294901760
        %2686 = vmatprep.subr.mxu0 %v2685
        %v2687 = vand.u32 %v1818, 4294901760
        %2688 = vmatpush1.msra.mxu0 %v2687
        %v2689 = vand.u32 %v1821, 4294901760
        %2690 = vmatprep.subr.mxu0 %v2689
        %v2691 = vand.u32 %v1820, 4294901760
        %2692 = vmatpush1.msra.mxu0 %v2691
        %v2693 = vand.u32 %v1823, 4294901760
        %2694 = vmatprep.subr.mxu0 %v2693
        %v2695 = vand.u32 %v1822, 4294901760
        %2696 = vmatpush1.msra.mxu0 %v2695
        %v2697 = vand.u32 %v1825, 4294901760
        %2698 = vmatprep.subr.mxu0 %v2697
        %v2699 = vand.u32 %v1824, 4294901760
        %2700 = vmatpush1.msra.mxu0 %v2699
        %v2701 = vand.u32 %v1827, 4294901760
        %2702 = vmatprep.subr.mxu0 %v2701
        %v2703 = vand.u32 %v1826, 4294901760
        %2704 = vmatpush1.msra.mxu0 %v2703
        %v2705 = vand.u32 %v1829, 4294901760
        %2706 = vmatprep.subr.mxu0 %v2705
        %v2707 = vand.u32 %v1828, 4294901760
        %2708 = vmatpush1.msra.mxu0 %v2707
        %v2709 = vand.u32 %v1831, 4294901760
        %2710 = vmatprep.subr.mxu0 %v2709
        %v2711 = vand.u32 %v1830, 4294901760
        %2712 = vmatpush1.msra.mxu0 %v2711
        %v2713 = vand.u32 %v1833, 4294901760
        %2714 = vmatprep.subr.mxu0 %v2713
        %v2715 = vand.u32 %v1832, 4294901760
        %2716 = vmatpush1.msra.mxu0 %v2715
        %v2717 = vand.u32 %v1835, 4294901760
        %2718 = vmatprep.subr.mxu0 %v2717
        %v2719 = vand.u32 %v1834, 4294901760
        %2720 = vmatpush1.msra.mxu0 %v2719
        %v2721 = vand.u32 %v1837, 4294901760
        %2722 = vmatprep.subr.mxu0 %v2721
        %v2723 = vand.u32 %v1836, 4294901760
        %2724 = vmatpush1.msra.mxu0 %v2723
        %v2725 = vand.u32 %v1839, 4294901760
        %2726 = vmatprep.subr.mxu0 %v2725
        %v2727 = vand.u32 %v1838, 4294901760
        %2728 = vmatpush1.msra.mxu0 %v2727
        %v2729 = vand.u32 %v1841, 4294901760
        %2730 = vmatprep.subr.mxu0 %v2729
        %v2731 = vand.u32 %v1840, 4294901760
        %2732 = vmatpush1.msra.mxu0 %v2731
        %v2733 = vand.u32 %v1843, 4294901760
        %2734 = vmatprep.subr.mxu0 %v2733
        %v2735 = vand.u32 %v1842, 4294901760
        %2736 = vmatpush1.msra.mxu0 %v2735
        %v2737 = vand.u32 %v1845, 4294901760
        %2738 = vmatprep.subr.mxu0 %v2737
        %v2739 = vand.u32 %v1844, 4294901760
        %2740 = vmatpush1.msra.mxu0 %v2739
        %v2741 = vand.u32 %v1847, 4294901760
        %2742 = vmatprep.subr.mxu0 %v2741
        %v2743 = vand.u32 %v1846, 4294901760
        %2744 = vmatpush1.msra.mxu0 %v2743
        %v2745 = vand.u32 %v1849, 4294901760
        %2746 = vmatprep.subr.mxu0 %v2745
        %v2747 = vand.u32 %v1848, 4294901760
        %2748 = vmatpush1.msra.mxu0 %v2747
        %v2749 = vand.u32 %v1851, 4294901760
        %2750 = vmatprep.subr.mxu0 %v2749
        %v2751 = vand.u32 %v1850, 4294901760
        %2752 = vmatpush1.msra.mxu0 %v2751
        %v2753 = vand.u32 %v1853, 4294901760
        %2754 = vmatprep.subr.mxu0 %v2753
        %v2755 = vand.u32 %v1852, 4294901760
        %2756 = vmatpush1.msra.mxu0 %v2755
        %v2757 = vand.u32 %v377, 4294901760
        %v2758 = vsub.f32 %v377, %v2757
        %v2759 = vand.u32 %v2758, 4294901760
        %2760 = vmatprep.mubr.f32.mxu0 %v2759
        %v2761 = vand.u32 %v376, 4294901760
        %v2762 = vsub.f32 %v376, %v2761
        %v2763 = vand.u32 %v2762, 4294901760
        %2764 = vmatmul.mubr.f32.gmra.mrb[0].mxu0 %v2763
        %v2765 = vpop.f32.mrb[0].mxu0
        %v2766 = vadd.f32 %v2615, %v2765
        %v2767 = vpop.f32.mrb[0].mxu0
        %v2768 = vadd.f32 %v2617, %v2767
        %v2769 = vand.u32 %v379, 4294901760
        %v2770 = vsub.f32 %v379, %v2769
        %v2771 = vand.u32 %v2770, 4294901760
        %2772 = vmatprep.mubr.f32.mxu0 %v2771
        %v2773 = vand.u32 %v378, 4294901760
        %v2774 = vsub.f32 %v378, %v2773
        %v2775 = vand.u32 %v2774, 4294901760
        %2776 = vmatmul.mubr.f32.gmra.mrb[0].mxu0 %v2775
        %v2777 = vpop.f32.mrb[0].mxu0
        %v2778 = vadd.f32 %v2625, %v2777
        %v2779 = vpop.f32.mrb[0].mxu0
        %v2780 = vadd.f32 %v2627, %v2779
        %2781 = vdwg.mxu0
        %v2782 = vand.u32 %v1791, 4294901760
        %v2783 = vsub.f32 %v1791, %v2782
        %v2784 = vand.u32 %v2783, 4294901760
        %2785 = vmatprep.subr.mxu0 %v2784
        %v2786 = vand.u32 %v1790, 4294901760
        %v2787 = vsub.f32 %v1790, %v2786
        %v2788 = vand.u32 %v2787, 4294901760
        %2789 = vmatpush1.msra.mxu0 %v2788
        %v2790 = vand.u32 %v1793, 4294901760
        %v2791 = vsub.f32 %v1793, %v2790
        %v2792 = vand.u32 %v2791, 4294901760
        %2793 = vmatprep.subr.mxu0 %v2792
        %v2794 = vand.u32 %v1792, 4294901760
        %v2795 = vsub.f32 %v1792, %v2794
        %v2796 = vand.u32 %v2795, 4294901760
        %2797 = vmatpush1.msra.mxu0 %v2796
        %v2798 = vand.u32 %v1795, 4294901760
        %v2799 = vsub.f32 %v1795, %v2798
        %v2800 = vand.u32 %v2799, 4294901760
        %2801 = vmatprep.subr.mxu0 %v2800
        %v2802 = vand.u32 %v1794, 4294901760
        %v2803 = vsub.f32 %v1794, %v2802
        %v2804 = vand.u32 %v2803, 4294901760
        %2805 = vmatpush1.msra.mxu0 %v2804
        %v2806 = vand.u32 %v1797, 4294901760
        %v2807 = vsub.f32 %v1797, %v2806
        %v2808 = vand.u32 %v2807, 4294901760
        %2809 = vmatprep.subr.mxu0 %v2808
        %v2810 = vand.u32 %v1796, 4294901760
        %v2811 = vsub.f32 %v1796, %v2810
        %v2812 = vand.u32 %v2811, 4294901760
        %2813 = vmatpush1.msra.mxu0 %v2812
        %v2814 = vand.u32 %v1799, 4294901760
        %v2815 = vsub.f32 %v1799, %v2814
        %v2816 = vand.u32 %v2815, 4294901760
        %2817 = vmatprep.subr.mxu0 %v2816
        %v2818 = vand.u32 %v1798, 4294901760
        %v2819 = vsub.f32 %v1798, %v2818
        %v2820 = vand.u32 %v2819, 4294901760
        %2821 = vmatpush1.msra.mxu0 %v2820
        %v2822 = vand.u32 %v1801, 4294901760
        %v2823 = vsub.f32 %v1801, %v2822
        %v2824 = vand.u32 %v2823, 4294901760
        %2825 = vmatprep.subr.mxu0 %v2824
        %v2826 = vand.u32 %v1800, 4294901760
        %v2827 = vsub.f32 %v1800, %v2826
        %v2828 = vand.u32 %v2827, 4294901760
        %2829 = vmatpush1.msra.mxu0 %v2828
        %v2830 = vand.u32 %v1803, 4294901760
        %v2831 = vsub.f32 %v1803, %v2830
        %v2832 = vand.u32 %v2831, 4294901760
        %2833 = vmatprep.subr.mxu0 %v2832
        %v2834 = vand.u32 %v1802, 4294901760
        %v2835 = vsub.f32 %v1802, %v2834
        %v2836 = vand.u32 %v2835, 4294901760
        %2837 = vmatpush1.msra.mxu0 %v2836
        %v2838 = vand.u32 %v1805, 4294901760
        %v2839 = vsub.f32 %v1805, %v2838
        %v2840 = vand.u32 %v2839, 4294901760
        %2841 = vmatprep.subr.mxu0 %v2840
        %v2842 = vand.u32 %v1804, 4294901760
        %v2843 = vsub.f32 %v1804, %v2842
        %v2844 = vand.u32 %v2843, 4294901760
        %2845 = vmatpush1.msra.mxu0 %v2844
        %v2846 = vand.u32 %v1807, 4294901760
        %v2847 = vsub.f32 %v1807, %v2846
        %v2848 = vand.u32 %v2847, 4294901760
        %2849 = vmatprep.subr.mxu0 %v2848
        %v2850 = vand.u32 %v1806, 4294901760
        %v2851 = vsub.f32 %v1806, %v2850
        %v2852 = vand.u32 %v2851, 4294901760
        %2853 = vmatpush1.msra.mxu0 %v2852
        %v2854 = vand.u32 %v1809, 4294901760
        %v2855 = vsub.f32 %v1809, %v2854
        %v2856 = vand.u32 %v2855, 4294901760
        %2857 = vmatprep.subr.mxu0 %v2856
        %v2858 = vand.u32 %v1808, 4294901760
        %v2859 = vsub.f32 %v1808, %v2858
        %v2860 = vand.u32 %v2859, 4294901760
        %2861 = vmatpush1.msra.mxu0 %v2860
        %v2862 = vand.u32 %v1811, 4294901760
        %v2863 = vsub.f32 %v1811, %v2862
        %v2864 = vand.u32 %v2863, 4294901760
        %2865 = vmatprep.subr.mxu0 %v2864
        %v2866 = vand.u32 %v1810, 4294901760
        %v2867 = vsub.f32 %v1810, %v2866
        %v2868 = vand.u32 %v2867, 4294901760
        %2869 = vmatpush1.msra.mxu0 %v2868
        %v2870 = vand.u32 %v1813, 4294901760
        %v2871 = vsub.f32 %v1813, %v2870
        %v2872 = vand.u32 %v2871, 4294901760
        %2873 = vmatprep.subr.mxu0 %v2872
        %v2874 = vand.u32 %v1812, 4294901760
        %v2875 = vsub.f32 %v1812, %v2874
        %v2876 = vand.u32 %v2875, 4294901760
        %2877 = vmatpush1.msra.mxu0 %v2876
        %v2878 = vand.u32 %v1815, 4294901760
        %v2879 = vsub.f32 %v1815, %v2878
        %v2880 = vand.u32 %v2879, 4294901760
        %2881 = vmatprep.subr.mxu0 %v2880
        %v2882 = vand.u32 %v1814, 4294901760
        %v2883 = vsub.f32 %v1814, %v2882
        %v2884 = vand.u32 %v2883, 4294901760
        %2885 = vmatpush1.msra.mxu0 %v2884
        %v2886 = vand.u32 %v1817, 4294901760
        %v2887 = vsub.f32 %v1817, %v2886
        %v2888 = vand.u32 %v2887, 4294901760
        %2889 = vmatprep.subr.mxu0 %v2888
        %v2890 = vand.u32 %v1816, 4294901760
        %v2891 = vsub.f32 %v1816, %v2890
        %v2892 = vand.u32 %v2891, 4294901760
        %2893 = vmatpush1.msra.mxu0 %v2892
        %v2894 = vand.u32 %v1819, 4294901760
        %v2895 = vsub.f32 %v1819, %v2894
        %v2896 = vand.u32 %v2895, 4294901760
        %2897 = vmatprep.subr.mxu0 %v2896
        %v2898 = vand.u32 %v1818, 4294901760
        %v2899 = vsub.f32 %v1818, %v2898
        %v2900 = vand.u32 %v2899, 4294901760
        %2901 = vmatpush1.msra.mxu0 %v2900
        %v2902 = vand.u32 %v1821, 4294901760
        %v2903 = vsub.f32 %v1821, %v2902
        %v2904 = vand.u32 %v2903, 4294901760
        %2905 = vmatprep.subr.mxu0 %v2904
        %v2906 = vand.u32 %v1820, 4294901760
        %v2907 = vsub.f32 %v1820, %v2906
        %v2908 = vand.u32 %v2907, 4294901760
        %2909 = vmatpush1.msra.mxu0 %v2908
        %v2910 = vand.u32 %v1823, 4294901760
        %v2911 = vsub.f32 %v1823, %v2910
        %v2912 = vand.u32 %v2911, 4294901760
        %2913 = vmatprep.subr.mxu0 %v2912
        %v2914 = vand.u32 %v1822, 4294901760
        %v2915 = vsub.f32 %v1822, %v2914
        %v2916 = vand.u32 %v2915, 4294901760
        %2917 = vmatpush1.msra.mxu0 %v2916
        %v2918 = vand.u32 %v1825, 4294901760
        %v2919 = vsub.f32 %v1825, %v2918
        %v2920 = vand.u32 %v2919, 4294901760
        %2921 = vmatprep.subr.mxu0 %v2920
        %v2922 = vand.u32 %v1824, 4294901760
        %v2923 = vsub.f32 %v1824, %v2922
        %v2924 = vand.u32 %v2923, 4294901760
        %2925 = vmatpush1.msra.mxu0 %v2924
        %v2926 = vand.u32 %v1827, 4294901760
        %v2927 = vsub.f32 %v1827, %v2926
        %v2928 = vand.u32 %v2927, 4294901760
        %2929 = vmatprep.subr.mxu0 %v2928
        %v2930 = vand.u32 %v1826, 4294901760
        %v2931 = vsub.f32 %v1826, %v2930
        %v2932 = vand.u32 %v2931, 4294901760
        %2933 = vmatpush1.msra.mxu0 %v2932
        %v2934 = vand.u32 %v1829, 4294901760
        %v2935 = vsub.f32 %v1829, %v2934
        %v2936 = vand.u32 %v2935, 4294901760
        %2937 = vmatprep.subr.mxu0 %v2936
        %v2938 = vand.u32 %v1828, 4294901760
        %v2939 = vsub.f32 %v1828, %v2938
        %v2940 = vand.u32 %v2939, 4294901760
        %2941 = vmatpush1.msra.mxu0 %v2940
        %v2942 = vand.u32 %v1831, 4294901760
        %v2943 = vsub.f32 %v1831, %v2942
        %v2944 = vand.u32 %v2943, 4294901760
        %2945 = vmatprep.subr.mxu0 %v2944
        %v2946 = vand.u32 %v1830, 4294901760
        %v2947 = vsub.f32 %v1830, %v2946
        %v2948 = vand.u32 %v2947, 4294901760
        %2949 = vmatpush1.msra.mxu0 %v2948
        %v2950 = vand.u32 %v1833, 4294901760
        %v2951 = vsub.f32 %v1833, %v2950
        %v2952 = vand.u32 %v2951, 4294901760
        %2953 = vmatprep.subr.mxu0 %v2952
        %v2954 = vand.u32 %v1832, 4294901760
        %v2955 = vsub.f32 %v1832, %v2954
        %v2956 = vand.u32 %v2955, 4294901760
        %2957 = vmatpush1.msra.mxu0 %v2956
        %v2958 = vand.u32 %v1835, 4294901760
        %v2959 = vsub.f32 %v1835, %v2958
        %v2960 = vand.u32 %v2959, 4294901760
        %2961 = vmatprep.subr.mxu0 %v2960
        %v2962 = vand.u32 %v1834, 4294901760
        %v2963 = vsub.f32 %v1834, %v2962
        %v2964 = vand.u32 %v2963, 4294901760
        %2965 = vmatpush1.msra.mxu0 %v2964
        %v2966 = vand.u32 %v1837, 4294901760
        %v2967 = vsub.f32 %v1837, %v2966
        %v2968 = vand.u32 %v2967, 4294901760
        %2969 = vmatprep.subr.mxu0 %v2968
        %v2970 = vand.u32 %v1836, 4294901760
        %v2971 = vsub.f32 %v1836, %v2970
        %v2972 = vand.u32 %v2971, 4294901760
        %2973 = vmatpush1.msra.mxu0 %v2972
        %v2974 = vand.u32 %v1839, 4294901760
        %v2975 = vsub.f32 %v1839, %v2974
        %v2976 = vand.u32 %v2975, 4294901760
        %2977 = vmatprep.subr.mxu0 %v2976
        %v2978 = vand.u32 %v1838, 4294901760
        %v2979 = vsub.f32 %v1838, %v2978
        %v2980 = vand.u32 %v2979, 4294901760
        %2981 = vmatpush1.msra.mxu0 %v2980
        %v2982 = vand.u32 %v1841, 4294901760
        %v2983 = vsub.f32 %v1841, %v2982
        %v2984 = vand.u32 %v2983, 4294901760
        %2985 = vmatprep.subr.mxu0 %v2984
        %v2986 = vand.u32 %v1840, 4294901760
        %v2987 = vsub.f32 %v1840, %v2986
        %v2988 = vand.u32 %v2987, 4294901760
        %2989 = vmatpush1.msra.mxu0 %v2988
        %v2990 = vand.u32 %v1843, 4294901760
        %v2991 = vsub.f32 %v1843, %v2990
        %v2992 = vand.u32 %v2991, 4294901760
        %2993 = vmatprep.subr.mxu0 %v2992
        %v2994 = vand.u32 %v1842, 4294901760
        %v2995 = vsub.f32 %v1842, %v2994
        %v2996 = vand.u32 %v2995, 4294901760
        %2997 = vmatpush1.msra.mxu0 %v2996
        %v2998 = vand.u32 %v1845, 4294901760
        %v2999 = vsub.f32 %v1845, %v2998
        %v3000 = vand.u32 %v2999, 4294901760
        %3001 = vmatprep.subr.mxu0 %v3000
        %v3002 = vand.u32 %v1844, 4294901760
        %v3003 = vsub.f32 %v1844, %v3002
        %v3004 = vand.u32 %v3003, 4294901760
        %3005 = vmatpush1.msra.mxu0 %v3004
        %v3006 = vand.u32 %v1847, 4294901760
        %v3007 = vsub.f32 %v1847, %v3006
        %v3008 = vand.u32 %v3007, 4294901760
        %3009 = vmatprep.subr.mxu0 %v3008
        %v3010 = vand.u32 %v1846, 4294901760
        %v3011 = vsub.f32 %v1846, %v3010
        %v3012 = vand.u32 %v3011, 4294901760
        %3013 = vmatpush1.msra.mxu0 %v3012
        %v3014 = vand.u32 %v1849, 4294901760
        %v3015 = vsub.f32 %v1849, %v3014
        %v3016 = vand.u32 %v3015, 4294901760
        %3017 = vmatprep.subr.mxu0 %v3016
        %v3018 = vand.u32 %v1848, 4294901760
        %v3019 = vsub.f32 %v1848, %v3018
        %v3020 = vand.u32 %v3019, 4294901760
        %3021 = vmatpush1.msra.mxu0 %v3020
        %v3022 = vand.u32 %v1851, 4294901760
        %v3023 = vsub.f32 %v1851, %v3022
        %v3024 = vand.u32 %v3023, 4294901760
        %3025 = vmatprep.subr.mxu0 %v3024
        %v3026 = vand.u32 %v1850, 4294901760
        %v3027 = vsub.f32 %v1850, %v3026
        %v3028 = vand.u32 %v3027, 4294901760
        %3029 = vmatpush1.msra.mxu0 %v3028
        %v3030 = vand.u32 %v1853, 4294901760
        %v3031 = vsub.f32 %v1853, %v3030
        %v3032 = vand.u32 %v3031, 4294901760
        %3033 = vmatprep.subr.mxu0 %v3032
        %v3034 = vand.u32 %v1852, 4294901760
        %v3035 = vsub.f32 %v1852, %v3034
        %v3036 = vand.u32 %v3035, 4294901760
        %3037 = vmatpush1.msra.mxu0 %v3036
        %v3038 = vand.u32 %v377, 4294901760
        %3039 = vmatprep.mubr.f32.mxu0 %v3038
        %v3040 = vand.u32 %v376, 4294901760
        %3041 = vmatmul.mubr.f32.gmra.mrb[0].mxu0 %v3040
        %v3042 = vpop.f32.mrb[0].mxu0
        %v3043 = vadd.f32 %v2766, %v3042
        %v3044 = vpop.f32.mrb[0].mxu0
        %v3045 = vadd.f32 %v2768, %v3044
        %v3046 = vand.u32 %v379, 4294901760
        %3047 = vmatprep.mubr.f32.mxu0 %v3046
        %v3048 = vand.u32 %v378, 4294901760
        %3049 = vmatmul.mubr.f32.gmra.mrb[0].mxu0 %v3048
        %v3050 = vpop.f32.mrb[0].mxu0
        %v3051 = vadd.f32 %v2778, %v3050
        %v3052 = vpop.f32.mrb[0].mxu0
        %v3053 = vadd.f32 %v2780, %v3052
        %3054 = vdwg.mxu0
        %v3055 = vand.u32 %v1791, 4294901760
        %3056 = vmatprep.subr.mxu0 %v3055
        %v3057 = vand.u32 %v1790, 4294901760
        %3058 = vmatpush1.msra.mxu0 %v3057
        %v3059 = vand.u32 %v1793, 4294901760
        %3060 = vmatprep.subr.mxu0 %v3059
        %v3061 = vand.u32 %v1792, 4294901760
        %3062 = vmatpush1.msra.mxu0 %v3061
        %v3063 = vand.u32 %v1795, 4294901760
        %3064 = vmatprep.subr.mxu0 %v3063
        %v3065 = vand.u32 %v1794, 4294901760
        %3066 = vmatpush1.msra.mxu0 %v3065
        %v3067 = vand.u32 %v1797, 4294901760
        %3068 = vmatprep.subr.mxu0 %v3067
        %v3069 = vand.u32 %v1796, 4294901760
        %3070 = vmatpush1.msra.mxu0 %v3069
        %v3071 = vand.u32 %v1799, 4294901760
        %3072 = vmatprep.subr.mxu0 %v3071
        %v3073 = vand.u32 %v1798, 4294901760
        %3074 = vmatpush1.msra.mxu0 %v3073
        %v3075 = vand.u32 %v1801, 4294901760
        %3076 = vmatprep.subr.mxu0 %v3075
        %v3077 = vand.u32 %v1800, 4294901760
        %3078 = vmatpush1.msra.mxu0 %v3077
        %v3079 = vand.u32 %v1803, 4294901760
        %3080 = vmatprep.subr.mxu0 %v3079
        %v3081 = vand.u32 %v1802, 4294901760
        %3082 = vmatpush1.msra.mxu0 %v3081
        %v3083 = vand.u32 %v1805, 4294901760
        %3084 = vmatprep.subr.mxu0 %v3083
        %v3085 = vand.u32 %v1804, 4294901760
        %3086 = vmatpush1.msra.mxu0 %v3085
        %v3087 = vand.u32 %v1807, 4294901760
        %3088 = vmatprep.subr.mxu0 %v3087
        %v3089 = vand.u32 %v1806, 4294901760
        %3090 = vmatpush1.msra.mxu0 %v3089
        %v3091 = vand.u32 %v1809, 4294901760
        %3092 = vmatprep.subr.mxu0 %v3091
        %v3093 = vand.u32 %v1808, 4294901760
        %3094 = vmatpush1.msra.mxu0 %v3093
        %v3095 = vand.u32 %v1811, 4294901760
        %3096 = vmatprep.subr.mxu0 %v3095
        %v3097 = vand.u32 %v1810, 4294901760
        %3098 = vmatpush1.msra.mxu0 %v3097
        %v3099 = vand.u32 %v1813, 4294901760
        %3100 = vmatprep.subr.mxu0 %v3099
        %v3101 = vand.u32 %v1812, 4294901760
        %3102 = vmatpush1.msra.mxu0 %v3101
        %v3103 = vand.u32 %v1815, 4294901760
        %3104 = vmatprep.subr.mxu0 %v3103
        %v3105 = vand.u32 %v1814, 4294901760
        %3106 = vmatpush1.msra.mxu0 %v3105
        %v3107 = vand.u32 %v1817, 4294901760
        %3108 = vmatprep.subr.mxu0 %v3107
        %v3109 = vand.u32 %v1816, 4294901760
        %3110 = vmatpush1.msra.mxu0 %v3109
        %v3111 = vand.u32 %v1819, 4294901760
        %3112 = vmatprep.subr.mxu0 %v3111
        %v3113 = vand.u32 %v1818, 4294901760
        %3114 = vmatpush1.msra.mxu0 %v3113
        %v3115 = vand.u32 %v1821, 4294901760
        %3116 = vmatprep.subr.mxu0 %v3115
        %v3117 = vand.u32 %v1820, 4294901760
        %3118 = vmatpush1.msra.mxu0 %v3117
        %v3119 = vand.u32 %v1823, 4294901760
        %3120 = vmatprep.subr.mxu0 %v3119
        %v3121 = vand.u32 %v1822, 4294901760
        %3122 = vmatpush1.msra.mxu0 %v3121
        %v3123 = vand.u32 %v1825, 4294901760
        %3124 = vmatprep.subr.mxu0 %v3123
        %v3125 = vand.u32 %v1824, 4294901760
        %3126 = vmatpush1.msra.mxu0 %v3125
        %v3127 = vand.u32 %v1827, 4294901760
        %3128 = vmatprep.subr.mxu0 %v3127
        %v3129 = vand.u32 %v1826, 4294901760
        %3130 = vmatpush1.msra.mxu0 %v3129
        %v3131 = vand.u32 %v1829, 4294901760
        %3132 = vmatprep.subr.mxu0 %v3131
        %v3133 = vand.u32 %v1828, 4294901760
        %3134 = vmatpush1.msra.mxu0 %v3133
        %v3135 = vand.u32 %v1831, 4294901760
        %3136 = vmatprep.subr.mxu0 %v3135
        %v3137 = vand.u32 %v1830, 4294901760
        %3138 = vmatpush1.msra.mxu0 %v3137
        %v3139 = vand.u32 %v1833, 4294901760
        %3140 = vmatprep.subr.mxu0 %v3139
        %v3141 = vand.u32 %v1832, 4294901760
        %3142 = vmatpush1.msra.mxu0 %v3141
        %v3143 = vand.u32 %v1835, 4294901760
        %3144 = vmatprep.subr.mxu0 %v3143
        %v3145 = vand.u32 %v1834, 4294901760
        %3146 = vmatpush1.msra.mxu0 %v3145
        %v3147 = vand.u32 %v1837, 4294901760
        %3148 = vmatprep.subr.mxu0 %v3147
        %v3149 = vand.u32 %v1836, 4294901760
        %3150 = vmatpush1.msra.mxu0 %v3149
        %v3151 = vand.u32 %v1839, 4294901760
        %3152 = vmatprep.subr.mxu0 %v3151
        %v3153 = vand.u32 %v1838, 4294901760
        %3154 = vmatpush1.msra.mxu0 %v3153
        %v3155 = vand.u32 %v1841, 4294901760
        %3156 = vmatprep.subr.mxu0 %v3155
        %v3157 = vand.u32 %v1840, 4294901760
        %3158 = vmatpush1.msra.mxu0 %v3157
        %v3159 = vand.u32 %v1843, 4294901760
        %3160 = vmatprep.subr.mxu0 %v3159
        %v3161 = vand.u32 %v1842, 4294901760
        %3162 = vmatpush1.msra.mxu0 %v3161
        %v3163 = vand.u32 %v1845, 4294901760
        %3164 = vmatprep.subr.mxu0 %v3163
        %v3165 = vand.u32 %v1844, 4294901760
        %3166 = vmatpush1.msra.mxu0 %v3165
        %v3167 = vand.u32 %v1847, 4294901760
        %3168 = vmatprep.subr.mxu0 %v3167
        %v3169 = vand.u32 %v1846, 4294901760
        %3170 = vmatpush1.msra.mxu0 %v3169
        %v3171 = vand.u32 %v1849, 4294901760
        %3172 = vmatprep.subr.mxu0 %v3171
        %v3173 = vand.u32 %v1848, 4294901760
        %3174 = vmatpush1.msra.mxu0 %v3173
        %v3175 = vand.u32 %v1851, 4294901760
        %3176 = vmatprep.subr.mxu0 %v3175
        %v3177 = vand.u32 %v1850, 4294901760
        %3178 = vmatpush1.msra.mxu0 %v3177
        %v3179 = vand.u32 %v1853, 4294901760
        %3180 = vmatprep.subr.mxu0 %v3179
        %v3181 = vand.u32 %v1852, 4294901760
        %3182 = vmatpush1.msra.mxu0 %v3181
        %v3183 = vand.u32 %v377, 4294901760
        %3184 = vmatprep.mubr.f32.mxu0 %v3183
        %v3185 = vand.u32 %v376, 4294901760
        %3186 = vmatmul.mubr.f32.gmra.mrb[0].mxu0 %v3185
        %v3187 = vpop.f32.mrb[0].mxu0
        %v3188 = vadd.f32 %v3043, %v3187
        %v3189 = vpop.f32.mrb[0].mxu0
        %v3190 = vadd.f32 %v3045, %v3189
        %v3191 = vand.u32 %v379, 4294901760
        %3192 = vmatprep.mubr.f32.mxu0 %v3191
        %v3193 = vand.u32 %v378, 4294901760
        %3194 = vmatmul.mubr.f32.gmra.mrb[0].mxu0 %v3193
        %v3195 = vpop.f32.mrb[0].mxu0
        %v3196 = vadd.f32 %v3051, %v3195
        %v3197 = vpop.f32.mrb[0].mxu0
        %v3198 = vadd.f32 %v3053, %v3197
        %3199 = vdwg.mxu0
        %v3200 = vxor.u32 %v1778, 2147483648
        %v3201 = vxor.u32 %v1780, 2147483648
        %v3202 = vxor.u32 %v1786, 2147483648
        %v3203 = vxor.u32 %v1788, 2147483648
        %v3204 = vmul.f32 %v3200, 1.442695
        %v3205 = vpow.pop %v3204
        %v3206 = vmul.f32 %v3201, 1.442695
        %v3207 = vpow.pop %v3206
        %v3208 = vmul.f32 %v3202, 1.442695
        %v3209 = vpow.pop %v3208
        %v3210 = vmul.f32 %v3203, 1.442695
        %v3211 = vpow.pop %v3210
        %v3212 = vadd.f32 %v3205, 1.0
        %v3213 = vadd.f32 %v3207, 1.0
        %v3214 = vadd.f32 %v3209, 1.0
        %v3215 = vadd.f32 %v3211, 1.0
        %v3216 = vrcp.pop %v3212
        %v3217 = vmul.f32 1.0, %v3216
        %v3218 = vrcp.pop %v3213
        %v3219 = vmul.f32 1.0, %v3218
        %v3220 = vrcp.pop %v3214
        %v3221 = vmul.f32 1.0, %v3220
        %v3222 = vrcp.pop %v3215
        %v3223 = vmul.f32 1.0, %v3222
        %v3224 = vmul.f32 %v1778, %v3217
        %v3225 = vmul.f32 %v1780, %v3219
        %v3226 = vmul.f32 %v1786, %v3221
        %v3227 = vmul.f32 %v1788, %v3223
        %v3228 = vmul.f32 %v3224, %v3188
        %v3229 = vmul.f32 %v3225, %v3190
        %v3230 = vmul.f32 %v3226, %v3196
        %v3231 = vmul.f32 %v3227, %v3198
        %v3232 = vld [vmem:[#allocation2] sm:$0xff]
        %v3233 = vld [vmem:[#allocation2 + $0x8] sm:$0xff]
        %v3234 = vld [vmem:[#allocation2 + $0x10] sm:$0xff]
        %v3235 = vld [vmem:[#allocation2 + $0x18] sm:$0xff]
        %v3236 = vld [vmem:[%s310] sm:$0xff]
        %v3237 = vld [vmem:[%s310 + $0x8] sm:$0xff]
        %v3238 = vld [vmem:[%s310 + $0x10] sm:$0xff]
        %v3239 = vld [vmem:[%s310 + $0x18] sm:$0xff]
        %v3240 = vld [vmem:[%s310 + $0x20] sm:$0xff]
        %v3241 = vld [vmem:[%s310 + $0x28] sm:$0xff]
        %v3242 = vld [vmem:[%s310 + $0x30] sm:$0xff]
        %v3243 = vld [vmem:[%s310 + $0x38] sm:$0xff]
        %v3244 = vld [vmem:[%s310 + $0x40] sm:$0xff]
        %v3245 = vld [vmem:[%s310 + $0x48] sm:$0xff]
        %v3246 = vld [vmem:[%s310 + $0x50] sm:$0xff]
        %v3247 = vld [vmem:[%s310 + $0x58] sm:$0xff]
        %v3248 = vld [vmem:[%s310 + $0x60] sm:$0xff]
        %v3249 = vld [vmem:[%s310 + $0x68] sm:$0xff]
        %v3250 = vld [vmem:[%s310 + $0x70] sm:$0xff]
        %v3251 = vld [vmem:[%s310 + $0x78] sm:$0xff]
        %v3252 = vld [vmem:[%s310 + $0x80] sm:$0xff]
        %v3253 = vld [vmem:[%s310 + $0x88] sm:$0xff]
        %v3254 = vld [vmem:[%s310 + $0x90] sm:$0xff]
        %v3255 = vld [vmem:[%s310 + $0x98] sm:$0xff]
        %v3256 = vld [vmem:[%s310 + $0xa0] sm:$0xff]
        %v3257 = vld [vmem:[%s310 + $0xa8] sm:$0xff]
        %v3258 = vld [vmem:[%s310 + $0xb0] sm:$0xff]
        %v3259 = vld [vmem:[%s310 + $0xb8] sm:$0xff]
        %v3260 = vld [vmem:[%s310 + $0xc0] sm:$0xff]
        %v3261 = vld [vmem:[%s310 + $0xc8] sm:$0xff]
        %v3262 = vld [vmem:[%s310 + $0xd0] sm:$0xff]
        %v3263 = vld [vmem:[%s310 + $0xd8] sm:$0xff]
        %v3264 = vld [vmem:[%s310 + $0xe0] sm:$0xff]
        %v3265 = vld [vmem:[%s310 + $0xe8] sm:$0xff]
        %v3266 = vld [vmem:[%s310 + $0xf0] sm:$0xff]
        %v3267 = vld [vmem:[%s310 + $0xf8] sm:$0xff]
        %v3268 = vld [vmem:[%s310 + $0x100] sm:$0xff]
        %v3269 = vld [vmem:[%s310 + $0x108] sm:$0xff]
        %v3270 = vld [vmem:[%s310 + $0x110] sm:$0xff]
        %v3271 = vld [vmem:[%s310 + $0x118] sm:$0xff]
        %v3272 = vld [vmem:[%s310 + $0x120] sm:$0xff]
        %v3273 = vld [vmem:[%s310 + $0x128] sm:$0xff]
        %v3274 = vld [vmem:[%s310 + $0x130] sm:$0xff]
        %v3275 = vld [vmem:[%s310 + $0x138] sm:$0xff]
        %v3276 = vld [vmem:[%s310 + $0x140] sm:$0xff]
        %v3277 = vld [vmem:[%s310 + $0x148] sm:$0xff]
        %v3278 = vld [vmem:[%s310 + $0x150] sm:$0xff]
        %v3279 = vld [vmem:[%s310 + $0x158] sm:$0xff]
        %v3280 = vld [vmem:[%s310 + $0x160] sm:$0xff]
        %v3281 = vld [vmem:[%s310 + $0x168] sm:$0xff]
        %v3282 = vld [vmem:[%s310 + $0x170] sm:$0xff]
        %v3283 = vld [vmem:[%s310 + $0x178] sm:$0xff]
        %v3284 = vld [vmem:[%s310 + $0x180] sm:$0xff]
        %v3285 = vld [vmem:[%s310 + $0x188] sm:$0xff]
        %v3286 = vld [vmem:[%s310 + $0x190] sm:$0xff]
        %v3287 = vld [vmem:[%s310 + $0x198] sm:$0xff]
        %v3288 = vld [vmem:[%s310 + $0x1a0] sm:$0xff]
        %v3289 = vld [vmem:[%s310 + $0x1a8] sm:$0xff]
        %v3290 = vld [vmem:[%s310 + $0x1b0] sm:$0xff]
        %v3291 = vld [vmem:[%s310 + $0x1b8] sm:$0xff]
        %v3292 = vld [vmem:[%s310 + $0x1c0] sm:$0xff]
        %v3293 = vld [vmem:[%s310 + $0x1c8] sm:$0xff]
        %v3294 = vld [vmem:[%s310 + $0x1d0] sm:$0xff]
        %v3295 = vld [vmem:[%s310 + $0x1d8] sm:$0xff]
        %v3296 = vld [vmem:[%s310 + $0x1e0] sm:$0xff]
        %v3297 = vld [vmem:[%s310 + $0x1e8] sm:$0xff]
        %v3298 = vld [vmem:[%s310 + $0x1f0] sm:$0xff]
        %v3299 = vld [vmem:[%s310 + $0x1f8] sm:$0xff]
        %v3300 = vand.u32 %v3237, 4294901760
        %3301 = vmatprep.subr.mxu0 %v3300
        %v3302 = vand.u32 %v3236, 4294901760
        %3303 = vmatpush1.msra.mxu0 %v3302
        %v3304 = vand.u32 %v3239, 4294901760
        %3305 = vmatprep.subr.mxu0 %v3304
        %v3306 = vand.u32 %v3238, 4294901760
        %3307 = vmatpush1.msra.mxu0 %v3306
        %v3308 = vand.u32 %v3241, 4294901760
        %3309 = vmatprep.subr.mxu0 %v3308
        %v3310 = vand.u32 %v3240, 4294901760
        %3311 = vmatpush1.msra.mxu0 %v3310
        %v3312 = vand.u32 %v3243, 4294901760
        %3313 = vmatprep.subr.mxu0 %v3312
        %v3314 = vand.u32 %v3242, 4294901760
        %3315 = vmatpush1.msra.mxu0 %v3314
        %v3316 = vand.u32 %v3245, 4294901760
        %3317 = vmatprep.subr.mxu0 %v3316
        %v3318 = vand.u32 %v3244, 4294901760
        %3319 = vmatpush1.msra.mxu0 %v3318
        %v3320 = vand.u32 %v3247, 4294901760
        %3321 = vmatprep.subr.mxu0 %v3320
        %v3322 = vand.u32 %v3246, 4294901760
        %3323 = vmatpush1.msra.mxu0 %v3322
        %v3324 = vand.u32 %v3249, 4294901760
        %3325 = vmatprep.subr.mxu0 %v3324
        %v3326 = vand.u32 %v3248, 4294901760
        %3327 = vmatpush1.msra.mxu0 %v3326
        %v3328 = vand.u32 %v3251, 4294901760
        %3329 = vmatprep.subr.mxu0 %v3328
        %v3330 = vand.u32 %v3250, 4294901760
        %3331 = vmatpush1.msra.mxu0 %v3330
        %v3332 = vand.u32 %v3253, 4294901760
        %3333 = vmatprep.subr.mxu0 %v3332
        %v3334 = vand.u32 %v3252, 4294901760
        %3335 = vmatpush1.msra.mxu0 %v3334
        %v3336 = vand.u32 %v3255, 4294901760
        %3337 = vmatprep.subr.mxu0 %v3336
        %v3338 = vand.u32 %v3254, 4294901760
        %3339 = vmatpush1.msra.mxu0 %v3338
        %v3340 = vand.u32 %v3257, 4294901760
        %3341 = vmatprep.subr.mxu0 %v3340
        %v3342 = vand.u32 %v3256, 4294901760
        %3343 = vmatpush1.msra.mxu0 %v3342
        %v3344 = vand.u32 %v3259, 4294901760
        %3345 = vmatprep.subr.mxu0 %v3344
        %v3346 = vand.u32 %v3258, 4294901760
        %3347 = vmatpush1.msra.mxu0 %v3346
        %v3348 = vand.u32 %v3261, 4294901760
        %3349 = vmatprep.subr.mxu0 %v3348
        %v3350 = vand.u32 %v3260, 4294901760
        %3351 = vmatpush1.msra.mxu0 %v3350
        %v3352 = vand.u32 %v3263, 4294901760
        %3353 = vmatprep.subr.mxu0 %v3352
        %v3354 = vand.u32 %v3262, 4294901760
        %3355 = vmatpush1.msra.mxu0 %v3354
        %v3356 = vand.u32 %v3265, 4294901760
        %3357 = vmatprep.subr.mxu0 %v3356
        %v3358 = vand.u32 %v3264, 4294901760
        %3359 = vmatpush1.msra.mxu0 %v3358
        %v3360 = vand.u32 %v3267, 4294901760
        %3361 = vmatprep.subr.mxu0 %v3360
        %v3362 = vand.u32 %v3266, 4294901760
        %3363 = vmatpush1.msra.mxu0 %v3362
        %v3364 = vand.u32 %v3269, 4294901760
        %3365 = vmatprep.subr.mxu0 %v3364
        %v3366 = vand.u32 %v3268, 4294901760
        %3367 = vmatpush1.msra.mxu0 %v3366
        %v3368 = vand.u32 %v3271, 4294901760
        %3369 = vmatprep.subr.mxu0 %v3368
        %v3370 = vand.u32 %v3270, 4294901760
        %3371 = vmatpush1.msra.mxu0 %v3370
        %v3372 = vand.u32 %v3273, 4294901760
        %3373 = vmatprep.subr.mxu0 %v3372
        %v3374 = vand.u32 %v3272, 4294901760
        %3375 = vmatpush1.msra.mxu0 %v3374
        %v3376 = vand.u32 %v3275, 4294901760
        %3377 = vmatprep.subr.mxu0 %v3376
        %v3378 = vand.u32 %v3274, 4294901760
        %3379 = vmatpush1.msra.mxu0 %v3378
        %v3380 = vand.u32 %v3277, 4294901760
        %3381 = vmatprep.subr.mxu0 %v3380
        %v3382 = vand.u32 %v3276, 4294901760
        %3383 = vmatpush1.msra.mxu0 %v3382
        %v3384 = vand.u32 %v3279, 4294901760
        %3385 = vmatprep.subr.mxu0 %v3384
        %v3386 = vand.u32 %v3278, 4294901760
        %3387 = vmatpush1.msra.mxu0 %v3386
        %v3388 = vand.u32 %v3281, 4294901760
        %3389 = vmatprep.subr.mxu0 %v3388
        %v3390 = vand.u32 %v3280, 4294901760
        %3391 = vmatpush1.msra.mxu0 %v3390
        %v3392 = vand.u32 %v3283, 4294901760
        %3393 = vmatprep.subr.mxu0 %v3392
        %v3394 = vand.u32 %v3282, 4294901760
        %3395 = vmatpush1.msra.mxu0 %v3394
        %v3396 = vand.u32 %v3285, 4294901760
        %3397 = vmatprep.subr.mxu0 %v3396
        %v3398 = vand.u32 %v3284, 4294901760
        %3399 = vmatpush1.msra.mxu0 %v3398
        %v3400 = vand.u32 %v3287, 4294901760
        %3401 = vmatprep.subr.mxu0 %v3400
        %v3402 = vand.u32 %v3286, 4294901760
        %3403 = vmatpush1.msra.mxu0 %v3402
        %v3404 = vand.u32 %v3289, 4294901760
        %3405 = vmatprep.subr.mxu0 %v3404
        %v3406 = vand.u32 %v3288, 4294901760
        %3407 = vmatpush1.msra.mxu0 %v3406
        %v3408 = vand.u32 %v3291, 4294901760
        %3409 = vmatprep.subr.mxu0 %v3408
        %v3410 = vand.u32 %v3290, 4294901760
        %3411 = vmatpush1.msra.mxu0 %v3410
        %v3412 = vand.u32 %v3293, 4294901760
        %3413 = vmatprep.subr.mxu0 %v3412
        %v3414 = vand.u32 %v3292, 4294901760
        %3415 = vmatpush1.msra.mxu0 %v3414
        %v3416 = vand.u32 %v3295, 4294901760
        %3417 = vmatprep.subr.mxu0 %v3416
        %v3418 = vand.u32 %v3294, 4294901760
        %3419 = vmatpush1.msra.mxu0 %v3418
        %v3420 = vand.u32 %v3297, 4294901760
        %3421 = vmatprep.subr.mxu0 %v3420
        %v3422 = vand.u32 %v3296, 4294901760
        %3423 = vmatpush1.msra.mxu0 %v3422
        %v3424 = vand.u32 %v3299, 4294901760
        %3425 = vmatprep.subr.mxu0 %v3424
        %v3426 = vand.u32 %v3298, 4294901760
        %3427 = vmatpush1.msra.mxu0 %v3426
        %v3428 = vand.u32 %v3229, 4294901760
        %v3429 = vsub.f32 %v3229, %v3428
        %v3430 = vand.u32 %v3429, 4294901760
        %v3431 = vsub.f32 %v3429, %v3430
        %v3432 = vand.u32 %v3431, 4294901760
        %3433 = vmatprep.mubr.f32.mxu0 %v3432
        %v3434 = vand.u32 %v3228, 4294901760
        %v3435 = vsub.f32 %v3228, %v3434
        %v3436 = vand.u32 %v3435, 4294901760
        %v3437 = vsub.f32 %v3435, %v3436
        %v3438 = vand.u32 %v3437, 4294901760
        %3439 = vmatmul.mubr.f32.gmra.mrb[0].mxu0 %v3438
        %v3440 = vpop.f32.mrb[0].mxu0
        %v3441 = vadd.f32 0.0, %v3440
        %v3442 = vpop.f32.mrb[0].mxu0
        %v3443 = vadd.f32 0.0, %v3442
        %v3444 = vand.u32 %v3231, 4294901760
        %v3445 = vsub.f32 %v3231, %v3444
        %v3446 = vand.u32 %v3445, 4294901760
        %v3447 = vsub.f32 %v3445, %v3446
        %v3448 = vand.u32 %v3447, 4294901760
        %3449 = vmatprep.mubr.f32.mxu0 %v3448
        %v3450 = vand.u32 %v3230, 4294901760
        %v3451 = vsub.f32 %v3230, %v3450
        %v3452 = vand.u32 %v3451, 4294901760
        %v3453 = vsub.f32 %v3451, %v3452
        %v3454 = vand.u32 %v3453, 4294901760
        %3455 = vmatmul.mubr.f32.gmra.mrb[0].mxu0 %v3454
        %v3456 = vpop.f32.mrb[0].mxu0
        %v3457 = vadd.f32 0.0, %v3456
        %v3458 = vpop.f32.mrb[0].mxu0
        %v3459 = vadd.f32 0.0, %v3458
        %3460 = vdwg.mxu0
        %v3461 = vand.u32 %v3237, 4294901760
        %v3462 = vsub.f32 %v3237, %v3461
        %v3463 = vand.u32 %v3462, 4294901760
        %v3464 = vsub.f32 %v3462, %v3463
        %v3465 = vand.u32 %v3464, 4294901760
        %3466 = vmatprep.subr.mxu0 %v3465
        %v3467 = vand.u32 %v3236, 4294901760
        %v3468 = vsub.f32 %v3236, %v3467
        %v3469 = vand.u32 %v3468, 4294901760
        %v3470 = vsub.f32 %v3468, %v3469
        %v3471 = vand.u32 %v3470, 4294901760
        %3472 = vmatpush1.msra.mxu0 %v3471
        %v3473 = vand.u32 %v3239, 4294901760
        %v3474 = vsub.f32 %v3239, %v3473
        %v3475 = vand.u32 %v3474, 4294901760
        %v3476 = vsub.f32 %v3474, %v3475
        %v3477 = vand.u32 %v3476, 4294901760
        %3478 = vmatprep.subr.mxu0 %v3477
        %v3479 = vand.u32 %v3238, 4294901760
        %v3480 = vsub.f32 %v3238, %v3479
        %v3481 = vand.u32 %v3480, 4294901760
        %v3482 = vsub.f32 %v3480, %v3481
        %v3483 = vand.u32 %v3482, 4294901760
        %3484 = vmatpush1.msra.mxu0 %v3483
        %v3485 = vand.u32 %v3241, 4294901760
        %v3486 = vsub.f32 %v3241, %v3485
        %v3487 = vand.u32 %v3486, 4294901760
        %v3488 = vsub.f32 %v3486, %v3487
        %v3489 = vand.u32 %v3488, 4294901760
        %3490 = vmatprep.subr.mxu0 %v3489
        %v3491 = vand.u32 %v3240, 4294901760
        %v3492 = vsub.f32 %v3240, %v3491
        %v3493 = vand.u32 %v3492, 4294901760
        %v3494 = vsub.f32 %v3492, %v3493
        %v3495 = vand.u32 %v3494, 4294901760
        %3496 = vmatpush1.msra.mxu0 %v3495
        %v3497 = vand.u32 %v3243, 4294901760
        %v3498 = vsub.f32 %v3243, %v3497
        %v3499 = vand.u32 %v3498, 4294901760
        %v3500 = vsub.f32 %v3498, %v3499
        %v3501 = vand.u32 %v3500, 4294901760
        %3502 = vmatprep.subr.mxu0 %v3501
        %v3503 = vand.u32 %v3242, 4294901760
        %v3504 = vsub.f32 %v3242, %v3503
        %v3505 = vand.u32 %v3504, 4294901760
        %v3506 = vsub.f32 %v3504, %v3505
        %v3507 = vand.u32 %v3506, 4294901760
        %3508 = vmatpush1.msra.mxu0 %v3507
        %v3509 = vand.u32 %v3245, 4294901760
        %v3510 = vsub.f32 %v3245, %v3509
        %v3511 = vand.u32 %v3510, 4294901760
        %v3512 = vsub.f32 %v3510, %v3511
        %v3513 = vand.u32 %v3512, 4294901760
        %3514 = vmatprep.subr.mxu0 %v3513
        %v3515 = vand.u32 %v3244, 4294901760
        %v3516 = vsub.f32 %v3244, %v3515
        %v3517 = vand.u32 %v3516, 4294901760
        %v3518 = vsub.f32 %v3516, %v3517
        %v3519 = vand.u32 %v3518, 4294901760
        %3520 = vmatpush1.msra.mxu0 %v3519
        %v3521 = vand.u32 %v3247, 4294901760
        %v3522 = vsub.f32 %v3247, %v3521
        %v3523 = vand.u32 %v3522, 4294901760
        %v3524 = vsub.f32 %v3522, %v3523
        %v3525 = vand.u32 %v3524, 4294901760
        %3526 = vmatprep.subr.mxu0 %v3525
        %v3527 = vand.u32 %v3246, 4294901760
        %v3528 = vsub.f32 %v3246, %v3527
        %v3529 = vand.u32 %v3528, 4294901760
        %v3530 = vsub.f32 %v3528, %v3529
        %v3531 = vand.u32 %v3530, 4294901760
        %3532 = vmatpush1.msra.mxu0 %v3531
        %v3533 = vand.u32 %v3249, 4294901760
        %v3534 = vsub.f32 %v3249, %v3533
        %v3535 = vand.u32 %v3534, 4294901760
        %v3536 = vsub.f32 %v3534, %v3535
        %v3537 = vand.u32 %v3536, 4294901760
        %3538 = vmatprep.subr.mxu0 %v3537
        %v3539 = vand.u32 %v3248, 4294901760
        %v3540 = vsub.f32 %v3248, %v3539
        %v3541 = vand.u32 %v3540, 4294901760
        %v3542 = vsub.f32 %v3540, %v3541
        %v3543 = vand.u32 %v3542, 4294901760
        %3544 = vmatpush1.msra.mxu0 %v3543
        %v3545 = vand.u32 %v3251, 4294901760
        %v3546 = vsub.f32 %v3251, %v3545
        %v3547 = vand.u32 %v3546, 4294901760
        %v3548 = vsub.f32 %v3546, %v3547
        %v3549 = vand.u32 %v3548, 4294901760
        %3550 = vmatprep.subr.mxu0 %v3549
        %v3551 = vand.u32 %v3250, 4294901760
        %v3552 = vsub.f32 %v3250, %v3551
        %v3553 = vand.u32 %v3552, 4294901760
        %v3554 = vsub.f32 %v3552, %v3553
        %v3555 = vand.u32 %v3554, 4294901760
        %3556 = vmatpush1.msra.mxu0 %v3555
        %v3557 = vand.u32 %v3253, 4294901760
        %v3558 = vsub.f32 %v3253, %v3557
        %v3559 = vand.u32 %v3558, 4294901760
        %v3560 = vsub.f32 %v3558, %v3559
        %v3561 = vand.u32 %v3560, 4294901760
        %3562 = vmatprep.subr.mxu0 %v3561
        %v3563 = vand.u32 %v3252, 4294901760
        %v3564 = vsub.f32 %v3252, %v3563
        %v3565 = vand.u32 %v3564, 4294901760
        %v3566 = vsub.f32 %v3564, %v3565
        %v3567 = vand.u32 %v3566, 4294901760
        %3568 = vmatpush1.msra.mxu0 %v3567
        %v3569 = vand.u32 %v3255, 4294901760
        %v3570 = vsub.f32 %v3255, %v3569
        %v3571 = vand.u32 %v3570, 4294901760
        %v3572 = vsub.f32 %v3570, %v3571
        %v3573 = vand.u32 %v3572, 4294901760
        %3574 = vmatprep.subr.mxu0 %v3573
        %v3575 = vand.u32 %v3254, 4294901760
        %v3576 = vsub.f32 %v3254, %v3575
        %v3577 = vand.u32 %v3576, 4294901760
        %v3578 = vsub.f32 %v3576, %v3577
        %v3579 = vand.u32 %v3578, 4294901760
        %3580 = vmatpush1.msra.mxu0 %v3579
        %v3581 = vand.u32 %v3257, 4294901760
        %v3582 = vsub.f32 %v3257, %v3581
        %v3583 = vand.u32 %v3582, 4294901760
        %v3584 = vsub.f32 %v3582, %v3583
        %v3585 = vand.u32 %v3584, 4294901760
        %3586 = vmatprep.subr.mxu0 %v3585
        %v3587 = vand.u32 %v3256, 4294901760
        %v3588 = vsub.f32 %v3256, %v3587
        %v3589 = vand.u32 %v3588, 4294901760
        %v3590 = vsub.f32 %v3588, %v3589
        %v3591 = vand.u32 %v3590, 4294901760
        %3592 = vmatpush1.msra.mxu0 %v3591
        %v3593 = vand.u32 %v3259, 4294901760
        %v3594 = vsub.f32 %v3259, %v3593
        %v3595 = vand.u32 %v3594, 4294901760
        %v3596 = vsub.f32 %v3594, %v3595
        %v3597 = vand.u32 %v3596, 4294901760
        %3598 = vmatprep.subr.mxu0 %v3597
        %v3599 = vand.u32 %v3258, 4294901760
        %v3600 = vsub.f32 %v3258, %v3599
        %v3601 = vand.u32 %v3600, 4294901760
        %v3602 = vsub.f32 %v3600, %v3601
        %v3603 = vand.u32 %v3602, 4294901760
        %3604 = vmatpush1.msra.mxu0 %v3603
        %v3605 = vand.u32 %v3261, 4294901760
        %v3606 = vsub.f32 %v3261, %v3605
        %v3607 = vand.u32 %v3606, 4294901760
        %v3608 = vsub.f32 %v3606, %v3607
        %v3609 = vand.u32 %v3608, 4294901760
        %3610 = vmatprep.subr.mxu0 %v3609
        %v3611 = vand.u32 %v3260, 4294901760
        %v3612 = vsub.f32 %v3260, %v3611
        %v3613 = vand.u32 %v3612, 4294901760
        %v3614 = vsub.f32 %v3612, %v3613
        %v3615 = vand.u32 %v3614, 4294901760
        %3616 = vmatpush1.msra.mxu0 %v3615
        %v3617 = vand.u32 %v3263, 4294901760
        %v3618 = vsub.f32 %v3263, %v3617
        %v3619 = vand.u32 %v3618, 4294901760
        %v3620 = vsub.f32 %v3618, %v3619
        %v3621 = vand.u32 %v3620, 4294901760
        %3622 = vmatprep.subr.mxu0 %v3621
        %v3623 = vand.u32 %v3262, 4294901760
        %v3624 = vsub.f32 %v3262, %v3623
        %v3625 = vand.u32 %v3624, 4294901760
        %v3626 = vsub.f32 %v3624, %v3625
        %v3627 = vand.u32 %v3626, 4294901760
        %3628 = vmatpush1.msra.mxu0 %v3627
        %v3629 = vand.u32 %v3265, 4294901760
        %v3630 = vsub.f32 %v3265, %v3629
        %v3631 = vand.u32 %v3630, 4294901760
        %v3632 = vsub.f32 %v3630, %v3631
        %v3633 = vand.u32 %v3632, 4294901760
        %3634 = vmatprep.subr.mxu0 %v3633
        %v3635 = vand.u32 %v3264, 4294901760
        %v3636 = vsub.f32 %v3264, %v3635
        %v3637 = vand.u32 %v3636, 4294901760
        %v3638 = vsub.f32 %v3636, %v3637
        %v3639 = vand.u32 %v3638, 4294901760
        %3640 = vmatpush1.msra.mxu0 %v3639
        %v3641 = vand.u32 %v3267, 4294901760
        %v3642 = vsub.f32 %v3267, %v3641
        %v3643 = vand.u32 %v3642, 4294901760
        %v3644 = vsub.f32 %v3642, %v3643
        %v3645 = vand.u32 %v3644, 4294901760
        %3646 = vmatprep.subr.mxu0 %v3645
        %v3647 = vand.u32 %v3266, 4294901760
        %v3648 = vsub.f32 %v3266, %v3647
        %v3649 = vand.u32 %v3648, 4294901760
        %v3650 = vsub.f32 %v3648, %v3649
        %v3651 = vand.u32 %v3650, 4294901760
        %3652 = vmatpush1.msra.mxu0 %v3651
        %v3653 = vand.u32 %v3269, 4294901760
        %v3654 = vsub.f32 %v3269, %v3653
        %v3655 = vand.u32 %v3654, 4294901760
        %v3656 = vsub.f32 %v3654, %v3655
        %v3657 = vand.u32 %v3656, 4294901760
        %3658 = vmatprep.subr.mxu0 %v3657
        %v3659 = vand.u32 %v3268, 4294901760
        %v3660 = vsub.f32 %v3268, %v3659
        %v3661 = vand.u32 %v3660, 4294901760
        %v3662 = vsub.f32 %v3660, %v3661
        %v3663 = vand.u32 %v3662, 4294901760
        %3664 = vmatpush1.msra.mxu0 %v3663
        %v3665 = vand.u32 %v3271, 4294901760
        %v3666 = vsub.f32 %v3271, %v3665
        %v3667 = vand.u32 %v3666, 4294901760
        %v3668 = vsub.f32 %v3666, %v3667
        %v3669 = vand.u32 %v3668, 4294901760
        %3670 = vmatprep.subr.mxu0 %v3669
        %v3671 = vand.u32 %v3270, 4294901760
        %v3672 = vsub.f32 %v3270, %v3671
        %v3673 = vand.u32 %v3672, 4294901760
        %v3674 = vsub.f32 %v3672, %v3673
        %v3675 = vand.u32 %v3674, 4294901760
        %3676 = vmatpush1.msra.mxu0 %v3675
        %v3677 = vand.u32 %v3273, 4294901760
        %v3678 = vsub.f32 %v3273, %v3677
        %v3679 = vand.u32 %v3678, 4294901760
        %v3680 = vsub.f32 %v3678, %v3679
        %v3681 = vand.u32 %v3680, 4294901760
        %3682 = vmatprep.subr.mxu0 %v3681
        %v3683 = vand.u32 %v3272, 4294901760
        %v3684 = vsub.f32 %v3272, %v3683
        %v3685 = vand.u32 %v3684, 4294901760
        %v3686 = vsub.f32 %v3684, %v3685
        %v3687 = vand.u32 %v3686, 4294901760
        %3688 = vmatpush1.msra.mxu0 %v3687
        %v3689 = vand.u32 %v3275, 4294901760
        %v3690 = vsub.f32 %v3275, %v3689
        %v3691 = vand.u32 %v3690, 4294901760
        %v3692 = vsub.f32 %v3690, %v3691
        %v3693 = vand.u32 %v3692, 4294901760
        %3694 = vmatprep.subr.mxu0 %v3693
        %v3695 = vand.u32 %v3274, 4294901760
        %v3696 = vsub.f32 %v3274, %v3695
        %v3697 = vand.u32 %v3696, 4294901760
        %v3698 = vsub.f32 %v3696, %v3697
        %v3699 = vand.u32 %v3698, 4294901760
        %3700 = vmatpush1.msra.mxu0 %v3699
        %v3701 = vand.u32 %v3277, 4294901760
        %v3702 = vsub.f32 %v3277, %v3701
        %v3703 = vand.u32 %v3702, 4294901760
        %v3704 = vsub.f32 %v3702, %v3703
        %v3705 = vand.u32 %v3704, 4294901760
        %3706 = vmatprep.subr.mxu0 %v3705
        %v3707 = vand.u32 %v3276, 4294901760
        %v3708 = vsub.f32 %v3276, %v3707
        %v3709 = vand.u32 %v3708, 4294901760
        %v3710 = vsub.f32 %v3708, %v3709
        %v3711 = vand.u32 %v3710, 4294901760
        %3712 = vmatpush1.msra.mxu0 %v3711
        %v3713 = vand.u32 %v3279, 4294901760
        %v3714 = vsub.f32 %v3279, %v3713
        %v3715 = vand.u32 %v3714, 4294901760
        %v3716 = vsub.f32 %v3714, %v3715
        %v3717 = vand.u32 %v3716, 4294901760
        %3718 = vmatprep.subr.mxu0 %v3717
        %v3719 = vand.u32 %v3278, 4294901760
        %v3720 = vsub.f32 %v3278, %v3719
        %v3721 = vand.u32 %v3720, 4294901760
        %v3722 = vsub.f32 %v3720, %v3721
        %v3723 = vand.u32 %v3722, 4294901760
        %3724 = vmatpush1.msra.mxu0 %v3723
        %v3725 = vand.u32 %v3281, 4294901760
        %v3726 = vsub.f32 %v3281, %v3725
        %v3727 = vand.u32 %v3726, 4294901760
        %v3728 = vsub.f32 %v3726, %v3727
        %v3729 = vand.u32 %v3728, 4294901760
        %3730 = vmatprep.subr.mxu0 %v3729
        %v3731 = vand.u32 %v3280, 4294901760
        %v3732 = vsub.f32 %v3280, %v3731
        %v3733 = vand.u32 %v3732, 4294901760
        %v3734 = vsub.f32 %v3732, %v3733
        %v3735 = vand.u32 %v3734, 4294901760
        %3736 = vmatpush1.msra.mxu0 %v3735
        %v3737 = vand.u32 %v3283, 4294901760
        %v3738 = vsub.f32 %v3283, %v3737
        %v3739 = vand.u32 %v3738, 4294901760
        %v3740 = vsub.f32 %v3738, %v3739
        %v3741 = vand.u32 %v3740, 4294901760
        %3742 = vmatprep.subr.mxu0 %v3741
        %v3743 = vand.u32 %v3282, 4294901760
        %v3744 = vsub.f32 %v3282, %v3743
        %v3745 = vand.u32 %v3744, 4294901760
        %v3746 = vsub.f32 %v3744, %v3745
        %v3747 = vand.u32 %v3746, 4294901760
        %3748 = vmatpush1.msra.mxu0 %v3747
        %v3749 = vand.u32 %v3285, 4294901760
        %v3750 = vsub.f32 %v3285, %v3749
        %v3751 = vand.u32 %v3750, 4294901760
        %v3752 = vsub.f32 %v3750, %v3751
        %v3753 = vand.u32 %v3752, 4294901760
        %3754 = vmatprep.subr.mxu0 %v3753
        %v3755 = vand.u32 %v3284, 4294901760
        %v3756 = vsub.f32 %v3284, %v3755
        %v3757 = vand.u32 %v3756, 4294901760
        %v3758 = vsub.f32 %v3756, %v3757
        %v3759 = vand.u32 %v3758, 4294901760
        %3760 = vmatpush1.msra.mxu0 %v3759
        %v3761 = vand.u32 %v3287, 4294901760
        %v3762 = vsub.f32 %v3287, %v3761
        %v3763 = vand.u32 %v3762, 4294901760
        %v3764 = vsub.f32 %v3762, %v3763
        %v3765 = vand.u32 %v3764, 4294901760
        %3766 = vmatprep.subr.mxu0 %v3765
        %v3767 = vand.u32 %v3286, 4294901760
        %v3768 = vsub.f32 %v3286, %v3767
        %v3769 = vand.u32 %v3768, 4294901760
        %v3770 = vsub.f32 %v3768, %v3769
        %v3771 = vand.u32 %v3770, 4294901760
        %3772 = vmatpush1.msra.mxu0 %v3771
        %v3773 = vand.u32 %v3289, 4294901760
        %v3774 = vsub.f32 %v3289, %v3773
        %v3775 = vand.u32 %v3774, 4294901760
        %v3776 = vsub.f32 %v3774, %v3775
        %v3777 = vand.u32 %v3776, 4294901760
        %3778 = vmatprep.subr.mxu0 %v3777
        %v3779 = vand.u32 %v3288, 4294901760
        %v3780 = vsub.f32 %v3288, %v3779
        %v3781 = vand.u32 %v3780, 4294901760
        %v3782 = vsub.f32 %v3780, %v3781
        %v3783 = vand.u32 %v3782, 4294901760
        %3784 = vmatpush1.msra.mxu0 %v3783
        %v3785 = vand.u32 %v3291, 4294901760
        %v3786 = vsub.f32 %v3291, %v3785
        %v3787 = vand.u32 %v3786, 4294901760
        %v3788 = vsub.f32 %v3786, %v3787
        %v3789 = vand.u32 %v3788, 4294901760
        %3790 = vmatprep.subr.mxu0 %v3789
        %v3791 = vand.u32 %v3290, 4294901760
        %v3792 = vsub.f32 %v3290, %v3791
        %v3793 = vand.u32 %v3792, 4294901760
        %v3794 = vsub.f32 %v3792, %v3793
        %v3795 = vand.u32 %v3794, 4294901760
        %3796 = vmatpush1.msra.mxu0 %v3795
        %v3797 = vand.u32 %v3293, 4294901760
        %v3798 = vsub.f32 %v3293, %v3797
        %v3799 = vand.u32 %v3798, 4294901760
        %v3800 = vsub.f32 %v3798, %v3799
        %v3801 = vand.u32 %v3800, 4294901760
        %3802 = vmatprep.subr.mxu0 %v3801
        %v3803 = vand.u32 %v3292, 4294901760
        %v3804 = vsub.f32 %v3292, %v3803
        %v3805 = vand.u32 %v3804, 4294901760
        %v3806 = vsub.f32 %v3804, %v3805
        %v3807 = vand.u32 %v3806, 4294901760
        %3808 = vmatpush1.msra.mxu0 %v3807
        %v3809 = vand.u32 %v3295, 4294901760
        %v3810 = vsub.f32 %v3295, %v3809
        %v3811 = vand.u32 %v3810, 4294901760
        %v3812 = vsub.f32 %v3810, %v3811
        %v3813 = vand.u32 %v3812, 4294901760
        %3814 = vmatprep.subr.mxu0 %v3813
        %v3815 = vand.u32 %v3294, 4294901760
        %v3816 = vsub.f32 %v3294, %v3815
        %v3817 = vand.u32 %v3816, 4294901760
        %v3818 = vsub.f32 %v3816, %v3817
        %v3819 = vand.u32 %v3818, 4294901760
        %3820 = vmatpush1.msra.mxu0 %v3819
        %v3821 = vand.u32 %v3297, 4294901760
        %v3822 = vsub.f32 %v3297, %v3821
        %v3823 = vand.u32 %v3822, 4294901760
        %v3824 = vsub.f32 %v3822, %v3823
        %v3825 = vand.u32 %v3824, 4294901760
        %3826 = vmatprep.subr.mxu0 %v3825
        %v3827 = vand.u32 %v3296, 4294901760
        %v3828 = vsub.f32 %v3296, %v3827
        %v3829 = vand.u32 %v3828, 4294901760
        %v3830 = vsub.f32 %v3828, %v3829
        %v3831 = vand.u32 %v3830, 4294901760
        %3832 = vmatpush1.msra.mxu0 %v3831
        %v3833 = vand.u32 %v3299, 4294901760
        %v3834 = vsub.f32 %v3299, %v3833
        %v3835 = vand.u32 %v3834, 4294901760
        %v3836 = vsub.f32 %v3834, %v3835
        %v3837 = vand.u32 %v3836, 4294901760
        %3838 = vmatprep.subr.mxu0 %v3837
        %v3839 = vand.u32 %v3298, 4294901760
        %v3840 = vsub.f32 %v3298, %v3839
        %v3841 = vand.u32 %v3840, 4294901760
        %v3842 = vsub.f32 %v3840, %v3841
        %v3843 = vand.u32 %v3842, 4294901760
        %3844 = vmatpush1.msra.mxu0 %v3843
        %v3845 = vand.u32 %v3229, 4294901760
        %3846 = vmatprep.mubr.f32.mxu0 %v3845
        %v3847 = vand.u32 %v3228, 4294901760
        %3848 = vmatmul.mubr.f32.gmra.mrb[0].mxu0 %v3847
        %v3849 = vpop.f32.mrb[0].mxu0
        %v3850 = vadd.f32 %v3441, %v3849
        %v3851 = vpop.f32.mrb[0].mxu0
        %v3852 = vadd.f32 %v3443, %v3851
        %v3853 = vand.u32 %v3231, 4294901760
        %3854 = vmatprep.mubr.f32.mxu0 %v3853
        %v3855 = vand.u32 %v3230, 4294901760
        %3856 = vmatmul.mubr.f32.gmra.mrb[0].mxu0 %v3855
        %v3857 = vpop.f32.mrb[0].mxu0
        %v3858 = vadd.f32 %v3457, %v3857
        %v3859 = vpop.f32.mrb[0].mxu0
        %v3860 = vadd.f32 %v3459, %v3859
        %3861 = vdwg.mxu0
        %v3862 = vand.u32 %v3237, 4294901760
        %v3863 = vsub.f32 %v3237, %v3862
        %3864 = vmatprep.subr.mxu0 %v3863
        %v3865 = vand.u32 %v3236, 4294901760
        %v3866 = vsub.f32 %v3236, %v3865
        %3867 = vmatpush1.msra.mxu0 %v3866
        %v3868 = vand.u32 %v3239, 4294901760
        %v3869 = vsub.f32 %v3239, %v3868
        %3870 = vmatprep.subr.mxu0 %v3869
        %v3871 = vand.u32 %v3238, 4294901760
        %v3872 = vsub.f32 %v3238, %v3871
        %3873 = vmatpush1.msra.mxu0 %v3872
        %v3874 = vand.u32 %v3241, 4294901760
        %v3875 = vsub.f32 %v3241, %v3874
        %3876 = vmatprep.subr.mxu0 %v3875
        %v3877 = vand.u32 %v3240, 4294901760
        %v3878 = vsub.f32 %v3240, %v3877
        %3879 = vmatpush1.msra.mxu0 %v3878
        %v3880 = vand.u32 %v3243, 4294901760
        %v3881 = vsub.f32 %v3243, %v3880
        %3882 = vmatprep.subr.mxu0 %v3881
        %v3883 = vand.u32 %v3242, 4294901760
        %v3884 = vsub.f32 %v3242, %v3883
        %3885 = vmatpush1.msra.mxu0 %v3884
        %v3886 = vand.u32 %v3245, 4294901760
        %v3887 = vsub.f32 %v3245, %v3886
        %3888 = vmatprep.subr.mxu0 %v3887
        %v3889 = vand.u32 %v3244, 4294901760
        %v3890 = vsub.f32 %v3244, %v3889
        %3891 = vmatpush1.msra.mxu0 %v3890
        %v3892 = vand.u32 %v3247, 4294901760
        %v3893 = vsub.f32 %v3247, %v3892
        %3894 = vmatprep.subr.mxu0 %v3893
        %v3895 = vand.u32 %v3246, 4294901760
        %v3896 = vsub.f32 %v3246, %v3895
        %3897 = vmatpush1.msra.mxu0 %v3896
        %v3898 = vand.u32 %v3249, 4294901760
        %v3899 = vsub.f32 %v3249, %v3898
        %3900 = vmatprep.subr.mxu0 %v3899
        %v3901 = vand.u32 %v3248, 4294901760
        %v3902 = vsub.f32 %v3248, %v3901
        %3903 = vmatpush1.msra.mxu0 %v3902
        %v3904 = vand.u32 %v3251, 4294901760
        %v3905 = vsub.f32 %v3251, %v3904
        %3906 = vmatprep.subr.mxu0 %v3905
        %v3907 = vand.u32 %v3250, 4294901760
        %v3908 = vsub.f32 %v3250, %v3907
        %3909 = vmatpush1.msra.mxu0 %v3908
        %v3910 = vand.u32 %v3253, 4294901760
        %v3911 = vsub.f32 %v3253, %v3910
        %3912 = vmatprep.subr.mxu0 %v3911
        %v3913 = vand.u32 %v3252, 4294901760
        %v3914 = vsub.f32 %v3252, %v3913
        %3915 = vmatpush1.msra.mxu0 %v3914
        %v3916 = vand.u32 %v3255, 4294901760
        %v3917 = vsub.f32 %v3255, %v3916
        %3918 = vmatprep.subr.mxu0 %v3917
        %v3919 = vand.u32 %v3254, 4294901760
        %v3920 = vsub.f32 %v3254, %v3919
        %3921 = vmatpush1.msra.mxu0 %v3920
        %v3922 = vand.u32 %v3257, 4294901760
        %v3923 = vsub.f32 %v3257, %v3922
        %3924 = vmatprep.subr.mxu0 %v3923
        %v3925 = vand.u32 %v3256, 4294901760
        %v3926 = vsub.f32 %v3256, %v3925
        %3927 = vmatpush1.msra.mxu0 %v3926
        %v3928 = vand.u32 %v3259, 4294901760
        %v3929 = vsub.f32 %v3259, %v3928
        %3930 = vmatprep.subr.mxu0 %v3929
        %v3931 = vand.u32 %v3258, 4294901760
        %v3932 = vsub.f32 %v3258, %v3931
        %3933 = vmatpush1.msra.mxu0 %v3932
        %v3934 = vand.u32 %v3261, 4294901760
        %v3935 = vsub.f32 %v3261, %v3934
        %3936 = vmatprep.subr.mxu0 %v3935
        %v3937 = vand.u32 %v3260, 4294901760
        %v3938 = vsub.f32 %v3260, %v3937
        %3939 = vmatpush1.msra.mxu0 %v3938
        %v3940 = vand.u32 %v3263, 4294901760
        %v3941 = vsub.f32 %v3263, %v3940
        %3942 = vmatprep.subr.mxu0 %v3941
        %v3943 = vand.u32 %v3262, 4294901760
        %v3944 = vsub.f32 %v3262, %v3943
        %3945 = vmatpush1.msra.mxu0 %v3944
        %v3946 = vand.u32 %v3265, 4294901760
        %v3947 = vsub.f32 %v3265, %v3946
        %3948 = vmatprep.subr.mxu0 %v3947
        %v3949 = vand.u32 %v3264, 4294901760
        %v3950 = vsub.f32 %v3264, %v3949
        %3951 = vmatpush1.msra.mxu0 %v3950
        %v3952 = vand.u32 %v3267, 4294901760
        %v3953 = vsub.f32 %v3267, %v3952
        %3954 = vmatprep.subr.mxu0 %v3953
        %v3955 = vand.u32 %v3266, 4294901760
        %v3956 = vsub.f32 %v3266, %v3955
        %3957 = vmatpush1.msra.mxu0 %v3956
        %v3958 = vand.u32 %v3269, 4294901760
        %v3959 = vsub.f32 %v3269, %v3958
        %3960 = vmatprep.subr.mxu0 %v3959
        %v3961 = vand.u32 %v3268, 4294901760
        %v3962 = vsub.f32 %v3268, %v3961
        %3963 = vmatpush1.msra.mxu0 %v3962
        %v3964 = vand.u32 %v3271, 4294901760
        %v3965 = vsub.f32 %v3271, %v3964
        %3966 = vmatprep.subr.mxu0 %v3965
        %v3967 = vand.u32 %v3270, 4294901760
        %v3968 = vsub.f32 %v3270, %v3967
        %3969 = vmatpush1.msra.mxu0 %v3968
        %v3970 = vand.u32 %v3273, 4294901760
        %v3971 = vsub.f32 %v3273, %v3970
        %3972 = vmatprep.subr.mxu0 %v3971
        %v3973 = vand.u32 %v3272, 4294901760
        %v3974 = vsub.f32 %v3272, %v3973
        %3975 = vmatpush1.msra.mxu0 %v3974
        %v3976 = vand.u32 %v3275, 4294901760
        %v3977 = vsub.f32 %v3275, %v3976
        %3978 = vmatprep.subr.mxu0 %v3977
        %v3979 = vand.u32 %v3274, 4294901760
        %v3980 = vsub.f32 %v3274, %v3979
        %3981 = vmatpush1.msra.mxu0 %v3980
        %v3982 = vand.u32 %v3277, 4294901760
        %v3983 = vsub.f32 %v3277, %v3982
        %3984 = vmatprep.subr.mxu0 %v3983
        %v3985 = vand.u32 %v3276, 4294901760
        %v3986 = vsub.f32 %v3276, %v3985
        %3987 = vmatpush1.msra.mxu0 %v3986
        %v3988 = vand.u32 %v3279, 4294901760
        %v3989 = vsub.f32 %v3279, %v3988
        %3990 = vmatprep.subr.mxu0 %v3989
        %v3991 = vand.u32 %v3278, 4294901760
        %v3992 = vsub.f32 %v3278, %v3991
        %3993 = vmatpush1.msra.mxu0 %v3992
        %v3994 = vand.u32 %v3281, 4294901760
        %v3995 = vsub.f32 %v3281, %v3994
        %3996 = vmatprep.subr.mxu0 %v3995
        %v3997 = vand.u32 %v3280, 4294901760
        %v3998 = vsub.f32 %v3280, %v3997
        %3999 = vmatpush1.msra.mxu0 %v3998
        %v4000 = vand.u32 %v3283, 4294901760
        %v4001 = vsub.f32 %v3283, %v4000
        %4002 = vmatprep.subr.mxu0 %v4001
        %v4003 = vand.u32 %v3282, 4294901760
        %v4004 = vsub.f32 %v3282, %v4003
        %4005 = vmatpush1.msra.mxu0 %v4004
        %v4006 = vand.u32 %v3285, 4294901760
        %v4007 = vsub.f32 %v3285, %v4006
        %4008 = vmatprep.subr.mxu0 %v4007
        %v4009 = vand.u32 %v3284, 4294901760
        %v4010 = vsub.f32 %v3284, %v4009
        %4011 = vmatpush1.msra.mxu0 %v4010
        %v4012 = vand.u32 %v3287, 4294901760
        %v4013 = vsub.f32 %v3287, %v4012
        %4014 = vmatprep.subr.mxu0 %v4013
        %v4015 = vand.u32 %v3286, 4294901760
        %v4016 = vsub.f32 %v3286, %v4015
        %4017 = vmatpush1.msra.mxu0 %v4016
        %v4018 = vand.u32 %v3289, 4294901760
        %v4019 = vsub.f32 %v3289, %v4018
        %4020 = vmatprep.subr.mxu0 %v4019
        %v4021 = vand.u32 %v3288, 4294901760
        %v4022 = vsub.f32 %v3288, %v4021
        %4023 = vmatpush1.msra.mxu0 %v4022
        %v4024 = vand.u32 %v3291, 4294901760
        %v4025 = vsub.f32 %v3291, %v4024
        %4026 = vmatprep.subr.mxu0 %v4025
        %v4027 = vand.u32 %v3290, 4294901760
        %v4028 = vsub.f32 %v3290, %v4027
        %4029 = vmatpush1.msra.mxu0 %v4028
        %v4030 = vand.u32 %v3293, 4294901760
        %v4031 = vsub.f32 %v3293, %v4030
        %4032 = vmatprep.subr.mxu0 %v4031
        %v4033 = vand.u32 %v3292, 4294901760
        %v4034 = vsub.f32 %v3292, %v4033
        %4035 = vmatpush1.msra.mxu0 %v4034
        %v4036 = vand.u32 %v3295, 4294901760
        %v4037 = vsub.f32 %v3295, %v4036
        %4038 = vmatprep.subr.mxu0 %v4037
        %v4039 = vand.u32 %v3294, 4294901760
        %v4040 = vsub.f32 %v3294, %v4039
        %4041 = vmatpush1.msra.mxu0 %v4040
        %v4042 = vand.u32 %v3297, 4294901760
        %v4043 = vsub.f32 %v3297, %v4042
        %4044 = vmatprep.subr.mxu0 %v4043
        %v4045 = vand.u32 %v3296, 4294901760
        %v4046 = vsub.f32 %v3296, %v4045
        %4047 = vmatpush1.msra.mxu0 %v4046
        %v4048 = vand.u32 %v3299, 4294901760
        %v4049 = vsub.f32 %v3299, %v4048
        %4050 = vmatprep.subr.mxu0 %v4049
        %v4051 = vand.u32 %v3298, 4294901760
        %v4052 = vsub.f32 %v3298, %v4051
        %4053 = vmatpush1.msra.mxu0 %v4052
        %v4054 = vand.u32 %v3229, 4294901760
        %v4055 = vsub.f32 %v3229, %v4054
        %4056 = vmatprep.mubr.f32.mxu0 %v4055
        %v4057 = vand.u32 %v3228, 4294901760
        %v4058 = vsub.f32 %v3228, %v4057
        %4059 = vmatmul.mubr.f32.gmra.mrb[0].mxu0 %v4058
        %v4060 = vpop.f32.mrb[0].mxu0
        %v4061 = vadd.f32 %v3850, %v4060
        %v4062 = vpop.f32.mrb[0].mxu0
        %v4063 = vadd.f32 %v3852, %v4062
        %v4064 = vand.u32 %v3231, 4294901760
        %v4065 = vsub.f32 %v3231, %v4064
        %4066 = vmatprep.mubr.f32.mxu0 %v4065
        %v4067 = vand.u32 %v3230, 4294901760
        %v4068 = vsub.f32 %v3230, %v4067
        %4069 = vmatmul.mubr.f32.gmra.mrb[0].mxu0 %v4068
        %v4070 = vpop.f32.mrb[0].mxu0
        %v4071 = vadd.f32 %v3858, %v4070
        %v4072 = vpop.f32.mrb[0].mxu0
        %v4073 = vadd.f32 %v3860, %v4072
        %4074 = vdwg.mxu0
        %v4075 = vand.u32 %v3237, 4294901760
        %4076 = vmatprep.subr.mxu0 %v4075
        %v4077 = vand.u32 %v3236, 4294901760
        %4078 = vmatpush1.msra.mxu0 %v4077
        %v4079 = vand.u32 %v3239, 4294901760
        %4080 = vmatprep.subr.mxu0 %v4079
        %v4081 = vand.u32 %v3238, 4294901760
        %4082 = vmatpush1.msra.mxu0 %v4081
        %v4083 = vand.u32 %v3241, 4294901760
        %4084 = vmatprep.subr.mxu0 %v4083
        %v4085 = vand.u32 %v3240, 4294901760
        %4086 = vmatpush1.msra.mxu0 %v4085
        %v4087 = vand.u32 %v3243, 4294901760
        %4088 = vmatprep.subr.mxu0 %v4087
        %v4089 = vand.u32 %v3242, 4294901760
        %4090 = vmatpush1.msra.mxu0 %v4089
        %v4091 = vand.u32 %v3245, 4294901760
        %4092 = vmatprep.subr.mxu0 %v4091
        %v4093 = vand.u32 %v3244, 4294901760
        %4094 = vmatpush1.msra.mxu0 %v4093
        %v4095 = vand.u32 %v3247, 4294901760
        %4096 = vmatprep.subr.mxu0 %v4095
        %v4097 = vand.u32 %v3246, 4294901760
        %4098 = vmatpush1.msra.mxu0 %v4097
        %v4099 = vand.u32 %v3249, 4294901760
        %4100 = vmatprep.subr.mxu0 %v4099
        %v4101 = vand.u32 %v3248, 4294901760
        %4102 = vmatpush1.msra.mxu0 %v4101
        %v4103 = vand.u32 %v3251, 4294901760
        %4104 = vmatprep.subr.mxu0 %v4103
        %v4105 = vand.u32 %v3250, 4294901760
        %4106 = vmatpush1.msra.mxu0 %v4105
        %v4107 = vand.u32 %v3253, 4294901760
        %4108 = vmatprep.subr.mxu0 %v4107
        %v4109 = vand.u32 %v3252, 4294901760
        %4110 = vmatpush1.msra.mxu0 %v4109
        %v4111 = vand.u32 %v3255, 4294901760
        %4112 = vmatprep.subr.mxu0 %v4111
        %v4113 = vand.u32 %v3254, 4294901760
        %4114 = vmatpush1.msra.mxu0 %v4113
        %v4115 = vand.u32 %v3257, 4294901760
        %4116 = vmatprep.subr.mxu0 %v4115
        %v4117 = vand.u32 %v3256, 4294901760
        %4118 = vmatpush1.msra.mxu0 %v4117
        %v4119 = vand.u32 %v3259, 4294901760
        %4120 = vmatprep.subr.mxu0 %v4119
        %v4121 = vand.u32 %v3258, 4294901760
        %4122 = vmatpush1.msra.mxu0 %v4121
        %v4123 = vand.u32 %v3261, 4294901760
        %4124 = vmatprep.subr.mxu0 %v4123
        %v4125 = vand.u32 %v3260, 4294901760
        %4126 = vmatpush1.msra.mxu0 %v4125
        %v4127 = vand.u32 %v3263, 4294901760
        %4128 = vmatprep.subr.mxu0 %v4127
        %v4129 = vand.u32 %v3262, 4294901760
        %4130 = vmatpush1.msra.mxu0 %v4129
        %v4131 = vand.u32 %v3265, 4294901760
        %4132 = vmatprep.subr.mxu0 %v4131
        %v4133 = vand.u32 %v3264, 4294901760
        %4134 = vmatpush1.msra.mxu0 %v4133
        %v4135 = vand.u32 %v3267, 4294901760
        %4136 = vmatprep.subr.mxu0 %v4135
        %v4137 = vand.u32 %v3266, 4294901760
        %4138 = vmatpush1.msra.mxu0 %v4137
        %v4139 = vand.u32 %v3269, 4294901760
        %4140 = vmatprep.subr.mxu0 %v4139
        %v4141 = vand.u32 %v3268, 4294901760
        %4142 = vmatpush1.msra.mxu0 %v4141
        %v4143 = vand.u32 %v3271, 4294901760
        %4144 = vmatprep.subr.mxu0 %v4143
        %v4145 = vand.u32 %v3270, 4294901760
        %4146 = vmatpush1.msra.mxu0 %v4145
        %v4147 = vand.u32 %v3273, 4294901760
        %4148 = vmatprep.subr.mxu0 %v4147
        %v4149 = vand.u32 %v3272, 4294901760
        %4150 = vmatpush1.msra.mxu0 %v4149
        %v4151 = vand.u32 %v3275, 4294901760
        %4152 = vmatprep.subr.mxu0 %v4151
        %v4153 = vand.u32 %v3274, 4294901760
        %4154 = vmatpush1.msra.mxu0 %v4153
        %v4155 = vand.u32 %v3277, 4294901760
        %4156 = vmatprep.subr.mxu0 %v4155
        %v4157 = vand.u32 %v3276, 4294901760
        %4158 = vmatpush1.msra.mxu0 %v4157
        %v4159 = vand.u32 %v3279, 4294901760
        %4160 = vmatprep.subr.mxu0 %v4159
        %v4161 = vand.u32 %v3278, 4294901760
        %4162 = vmatpush1.msra.mxu0 %v4161
        %v4163 = vand.u32 %v3281, 4294901760
        %4164 = vmatprep.subr.mxu0 %v4163
        %v4165 = vand.u32 %v3280, 4294901760
        %4166 = vmatpush1.msra.mxu0 %v4165
        %v4167 = vand.u32 %v3283, 4294901760
        %4168 = vmatprep.subr.mxu0 %v4167
        %v4169 = vand.u32 %v3282, 4294901760
        %4170 = vmatpush1.msra.mxu0 %v4169
        %v4171 = vand.u32 %v3285, 4294901760
        %4172 = vmatprep.subr.mxu0 %v4171
        %v4173 = vand.u32 %v3284, 4294901760
        %4174 = vmatpush1.msra.mxu0 %v4173
        %v4175 = vand.u32 %v3287, 4294901760
        %4176 = vmatprep.subr.mxu0 %v4175
        %v4177 = vand.u32 %v3286, 4294901760
        %4178 = vmatpush1.msra.mxu0 %v4177
        %v4179 = vand.u32 %v3289, 4294901760
        %4180 = vmatprep.subr.mxu0 %v4179
        %v4181 = vand.u32 %v3288, 4294901760
        %4182 = vmatpush1.msra.mxu0 %v4181
        %v4183 = vand.u32 %v3291, 4294901760
        %4184 = vmatprep.subr.mxu0 %v4183
        %v4185 = vand.u32 %v3290, 4294901760
        %4186 = vmatpush1.msra.mxu0 %v4185
        %v4187 = vand.u32 %v3293, 4294901760
        %4188 = vmatprep.subr.mxu0 %v4187
        %v4189 = vand.u32 %v3292, 4294901760
        %4190 = vmatpush1.msra.mxu0 %v4189
        %v4191 = vand.u32 %v3295, 4294901760
        %4192 = vmatprep.subr.mxu0 %v4191
        %v4193 = vand.u32 %v3294, 4294901760
        %4194 = vmatpush1.msra.mxu0 %v4193
        %v4195 = vand.u32 %v3297, 4294901760
        %4196 = vmatprep.subr.mxu0 %v4195
        %v4197 = vand.u32 %v3296, 4294901760
        %4198 = vmatpush1.msra.mxu0 %v4197
        %v4199 = vand.u32 %v3299, 4294901760
        %4200 = vmatprep.subr.mxu0 %v4199
        %v4201 = vand.u32 %v3298, 4294901760
        %4202 = vmatpush1.msra.mxu0 %v4201
        %v4203 = vand.u32 %v3229, 4294901760
        %v4204 = vsub.f32 %v3229, %v4203
        %v4205 = vand.u32 %v4204, 4294901760
        %4206 = vmatprep.mubr.f32.mxu0 %v4205
        %v4207 = vand.u32 %v3228, 4294901760
        %v4208 = vsub.f32 %v3228, %v4207
        %v4209 = vand.u32 %v4208, 4294901760
        %4210 = vmatmul.mubr.f32.gmra.mrb[0].mxu0 %v4209
        %v4211 = vpop.f32.mrb[0].mxu0
        %v4212 = vadd.f32 %v4061, %v4211
        %v4213 = vpop.f32.mrb[0].mxu0
        %v4214 = vadd.f32 %v4063, %v4213
        %v4215 = vand.u32 %v3231, 4294901760
        %v4216 = vsub.f32 %v3231, %v4215
        %v4217 = vand.u32 %v4216, 4294901760
        %4218 = vmatprep.mubr.f32.mxu0 %v4217
        %v4219 = vand.u32 %v3230, 4294901760
        %v4220 = vsub.f32 %v3230, %v4219
        %v4221 = vand.u32 %v4220, 4294901760
        %4222 = vmatmul.mubr.f32.gmra.mrb[0].mxu0 %v4221
        %v4223 = vpop.f32.mrb[0].mxu0
        %v4224 = vadd.f32 %v4071, %v4223
        %v4225 = vpop.f32.mrb[0].mxu0
        %v4226 = vadd.f32 %v4073, %v4225
        %4227 = vdwg.mxu0
        %v4228 = vand.u32 %v3237, 4294901760
        %v4229 = vsub.f32 %v3237, %v4228
        %v4230 = vand.u32 %v4229, 4294901760
        %4231 = vmatprep.subr.mxu0 %v4230
        %v4232 = vand.u32 %v3236, 4294901760
        %v4233 = vsub.f32 %v3236, %v4232
        %v4234 = vand.u32 %v4233, 4294901760
        %4235 = vmatpush1.msra.mxu0 %v4234
        %v4236 = vand.u32 %v3239, 4294901760
        %v4237 = vsub.f32 %v3239, %v4236
        %v4238 = vand.u32 %v4237, 4294901760
        %4239 = vmatprep.subr.mxu0 %v4238
        %v4240 = vand.u32 %v3238, 4294901760
        %v4241 = vsub.f32 %v3238, %v4240
        %v4242 = vand.u32 %v4241, 4294901760
        %4243 = vmatpush1.msra.mxu0 %v4242
        %v4244 = vand.u32 %v3241, 4294901760
        %v4245 = vsub.f32 %v3241, %v4244
        %v4246 = vand.u32 %v4245, 4294901760
        %4247 = vmatprep.subr.mxu0 %v4246
        %v4248 = vand.u32 %v3240, 4294901760
        %v4249 = vsub.f32 %v3240, %v4248
        %v4250 = vand.u32 %v4249, 4294901760
        %4251 = vmatpush1.msra.mxu0 %v4250
        %v4252 = vand.u32 %v3243, 4294901760
        %v4253 = vsub.f32 %v3243, %v4252
        %v4254 = vand.u32 %v4253, 4294901760
        %4255 = vmatprep.subr.mxu0 %v4254
        %v4256 = vand.u32 %v3242, 4294901760
        %v4257 = vsub.f32 %v3242, %v4256
        %v4258 = vand.u32 %v4257, 4294901760
        %4259 = vmatpush1.msra.mxu0 %v4258
        %v4260 = vand.u32 %v3245, 4294901760
        %v4261 = vsub.f32 %v3245, %v4260
        %v4262 = vand.u32 %v4261, 4294901760
        %4263 = vmatprep.subr.mxu0 %v4262
        %v4264 = vand.u32 %v3244, 4294901760
        %v4265 = vsub.f32 %v3244, %v4264
        %v4266 = vand.u32 %v4265, 4294901760
        %4267 = vmatpush1.msra.mxu0 %v4266
        %v4268 = vand.u32 %v3247, 4294901760
        %v4269 = vsub.f32 %v3247, %v4268
        %v4270 = vand.u32 %v4269, 4294901760
        %4271 = vmatprep.subr.mxu0 %v4270
        %v4272 = vand.u32 %v3246, 4294901760
        %v4273 = vsub.f32 %v3246, %v4272
        %v4274 = vand.u32 %v4273, 4294901760
        %4275 = vmatpush1.msra.mxu0 %v4274
        %v4276 = vand.u32 %v3249, 4294901760
        %v4277 = vsub.f32 %v3249, %v4276
        %v4278 = vand.u32 %v4277, 4294901760
        %4279 = vmatprep.subr.mxu0 %v4278
        %v4280 = vand.u32 %v3248, 4294901760
        %v4281 = vsub.f32 %v3248, %v4280
        %v4282 = vand.u32 %v4281, 4294901760
        %4283 = vmatpush1.msra.mxu0 %v4282
        %v4284 = vand.u32 %v3251, 4294901760
        %v4285 = vsub.f32 %v3251, %v4284
        %v4286 = vand.u32 %v4285, 4294901760
        %4287 = vmatprep.subr.mxu0 %v4286
        %v4288 = vand.u32 %v3250, 4294901760
        %v4289 = vsub.f32 %v3250, %v4288
        %v4290 = vand.u32 %v4289, 4294901760
        %4291 = vmatpush1.msra.mxu0 %v4290
        %v4292 = vand.u32 %v3253, 4294901760
        %v4293 = vsub.f32 %v3253, %v4292
        %v4294 = vand.u32 %v4293, 4294901760
        %4295 = vmatprep.subr.mxu0 %v4294
        %v4296 = vand.u32 %v3252, 4294901760
        %v4297 = vsub.f32 %v3252, %v4296
        %v4298 = vand.u32 %v4297, 4294901760
        %4299 = vmatpush1.msra.mxu0 %v4298
        %v4300 = vand.u32 %v3255, 4294901760
        %v4301 = vsub.f32 %v3255, %v4300
        %v4302 = vand.u32 %v4301, 4294901760
        %4303 = vmatprep.subr.mxu0 %v4302
        %v4304 = vand.u32 %v3254, 4294901760
        %v4305 = vsub.f32 %v3254, %v4304
        %v4306 = vand.u32 %v4305, 4294901760
        %4307 = vmatpush1.msra.mxu0 %v4306
        %v4308 = vand.u32 %v3257, 4294901760
        %v4309 = vsub.f32 %v3257, %v4308
        %v4310 = vand.u32 %v4309, 4294901760
        %4311 = vmatprep.subr.mxu0 %v4310
        %v4312 = vand.u32 %v3256, 4294901760
        %v4313 = vsub.f32 %v3256, %v4312
        %v4314 = vand.u32 %v4313, 4294901760
        %4315 = vmatpush1.msra.mxu0 %v4314
        %v4316 = vand.u32 %v3259, 4294901760
        %v4317 = vsub.f32 %v3259, %v4316
        %v4318 = vand.u32 %v4317, 4294901760
        %4319 = vmatprep.subr.mxu0 %v4318
        %v4320 = vand.u32 %v3258, 4294901760
        %v4321 = vsub.f32 %v3258, %v4320
        %v4322 = vand.u32 %v4321, 4294901760
        %4323 = vmatpush1.msra.mxu0 %v4322
        %v4324 = vand.u32 %v3261, 4294901760
        %v4325 = vsub.f32 %v3261, %v4324
        %v4326 = vand.u32 %v4325, 4294901760
        %4327 = vmatprep.subr.mxu0 %v4326
        %v4328 = vand.u32 %v3260, 4294901760
        %v4329 = vsub.f32 %v3260, %v4328
        %v4330 = vand.u32 %v4329, 4294901760
        %4331 = vmatpush1.msra.mxu0 %v4330
        %v4332 = vand.u32 %v3263, 4294901760
        %v4333 = vsub.f32 %v3263, %v4332
        %v4334 = vand.u32 %v4333, 4294901760
        %4335 = vmatprep.subr.mxu0 %v4334
        %v4336 = vand.u32 %v3262, 4294901760
        %v4337 = vsub.f32 %v3262, %v4336
        %v4338 = vand.u32 %v4337, 4294901760
        %4339 = vmatpush1.msra.mxu0 %v4338
        %v4340 = vand.u32 %v3265, 4294901760
        %v4341 = vsub.f32 %v3265, %v4340
        %v4342 = vand.u32 %v4341, 4294901760
        %4343 = vmatprep.subr.mxu0 %v4342
        %v4344 = vand.u32 %v3264, 4294901760
        %v4345 = vsub.f32 %v3264, %v4344
        %v4346 = vand.u32 %v4345, 4294901760
        %4347 = vmatpush1.msra.mxu0 %v4346
        %v4348 = vand.u32 %v3267, 4294901760
        %v4349 = vsub.f32 %v3267, %v4348
        %v4350 = vand.u32 %v4349, 4294901760
        %4351 = vmatprep.subr.mxu0 %v4350
        %v4352 = vand.u32 %v3266, 4294901760
        %v4353 = vsub.f32 %v3266, %v4352
        %v4354 = vand.u32 %v4353, 4294901760
        %4355 = vmatpush1.msra.mxu0 %v4354
        %v4356 = vand.u32 %v3269, 4294901760
        %v4357 = vsub.f32 %v3269, %v4356
        %v4358 = vand.u32 %v4357, 4294901760
        %4359 = vmatprep.subr.mxu0 %v4358
        %v4360 = vand.u32 %v3268, 4294901760
        %v4361 = vsub.f32 %v3268, %v4360
        %v4362 = vand.u32 %v4361, 4294901760
        %4363 = vmatpush1.msra.mxu0 %v4362
        %v4364 = vand.u32 %v3271, 4294901760
        %v4365 = vsub.f32 %v3271, %v4364
        %v4366 = vand.u32 %v4365, 4294901760
        %4367 = vmatprep.subr.mxu0 %v4366
        %v4368 = vand.u32 %v3270, 4294901760
        %v4369 = vsub.f32 %v3270, %v4368
        %v4370 = vand.u32 %v4369, 4294901760
        %4371 = vmatpush1.msra.mxu0 %v4370
        %v4372 = vand.u32 %v3273, 4294901760
        %v4373 = vsub.f32 %v3273, %v4372
        %v4374 = vand.u32 %v4373, 4294901760
        %4375 = vmatprep.subr.mxu0 %v4374
        %v4376 = vand.u32 %v3272, 4294901760
        %v4377 = vsub.f32 %v3272, %v4376
        %v4378 = vand.u32 %v4377, 4294901760
        %4379 = vmatpush1.msra.mxu0 %v4378
        %v4380 = vand.u32 %v3275, 4294901760
        %v4381 = vsub.f32 %v3275, %v4380
        %v4382 = vand.u32 %v4381, 4294901760
        %4383 = vmatprep.subr.mxu0 %v4382
        %v4384 = vand.u32 %v3274, 4294901760
        %v4385 = vsub.f32 %v3274, %v4384
        %v4386 = vand.u32 %v4385, 4294901760
        %4387 = vmatpush1.msra.mxu0 %v4386
        %v4388 = vand.u32 %v3277, 4294901760
        %v4389 = vsub.f32 %v3277, %v4388
        %v4390 = vand.u32 %v4389, 4294901760
        %4391 = vmatprep.subr.mxu0 %v4390
        %v4392 = vand.u32 %v3276, 4294901760
        %v4393 = vsub.f32 %v3276, %v4392
        %v4394 = vand.u32 %v4393, 4294901760
        %4395 = vmatpush1.msra.mxu0 %v4394
        %v4396 = vand.u32 %v3279, 4294901760
        %v4397 = vsub.f32 %v3279, %v4396
        %v4398 = vand.u32 %v4397, 4294901760
        %4399 = vmatprep.subr.mxu0 %v4398
        %v4400 = vand.u32 %v3278, 4294901760
        %v4401 = vsub.f32 %v3278, %v4400
        %v4402 = vand.u32 %v4401, 4294901760
        %4403 = vmatpush1.msra.mxu0 %v4402
        %v4404 = vand.u32 %v3281, 4294901760
        %v4405 = vsub.f32 %v3281, %v4404
        %v4406 = vand.u32 %v4405, 4294901760
        %4407 = vmatprep.subr.mxu0 %v4406
        %v4408 = vand.u32 %v3280, 4294901760
        %v4409 = vsub.f32 %v3280, %v4408
        %v4410 = vand.u32 %v4409, 4294901760
        %4411 = vmatpush1.msra.mxu0 %v4410
        %v4412 = vand.u32 %v3283, 4294901760
        %v4413 = vsub.f32 %v3283, %v4412
        %v4414 = vand.u32 %v4413, 4294901760
        %4415 = vmatprep.subr.mxu0 %v4414
        %v4416 = vand.u32 %v3282, 4294901760
        %v4417 = vsub.f32 %v3282, %v4416
        %v4418 = vand.u32 %v4417, 4294901760
        %4419 = vmatpush1.msra.mxu0 %v4418
        %v4420 = vand.u32 %v3285, 4294901760
        %v4421 = vsub.f32 %v3285, %v4420
        %v4422 = vand.u32 %v4421, 4294901760
        %4423 = vmatprep.subr.mxu0 %v4422
        %v4424 = vand.u32 %v3284, 4294901760
        %v4425 = vsub.f32 %v3284, %v4424
        %v4426 = vand.u32 %v4425, 4294901760
        %4427 = vmatpush1.msra.mxu0 %v4426
        %v4428 = vand.u32 %v3287, 4294901760
        %v4429 = vsub.f32 %v3287, %v4428
        %v4430 = vand.u32 %v4429, 4294901760
        %4431 = vmatprep.subr.mxu0 %v4430
        %v4432 = vand.u32 %v3286, 4294901760
        %v4433 = vsub.f32 %v3286, %v4432
        %v4434 = vand.u32 %v4433, 4294901760
        %4435 = vmatpush1.msra.mxu0 %v4434
        %v4436 = vand.u32 %v3289, 4294901760
        %v4437 = vsub.f32 %v3289, %v4436
        %v4438 = vand.u32 %v4437, 4294901760
        %4439 = vmatprep.subr.mxu0 %v4438
        %v4440 = vand.u32 %v3288, 4294901760
        %v4441 = vsub.f32 %v3288, %v4440
        %v4442 = vand.u32 %v4441, 4294901760
        %4443 = vmatpush1.msra.mxu0 %v4442
        %v4444 = vand.u32 %v3291, 4294901760
        %v4445 = vsub.f32 %v3291, %v4444
        %v4446 = vand.u32 %v4445, 4294901760
        %4447 = vmatprep.subr.mxu0 %v4446
        %v4448 = vand.u32 %v3290, 4294901760
        %v4449 = vsub.f32 %v3290, %v4448
        %v4450 = vand.u32 %v4449, 4294901760
        %4451 = vmatpush1.msra.mxu0 %v4450
        %v4452 = vand.u32 %v3293, 4294901760
        %v4453 = vsub.f32 %v3293, %v4452
        %v4454 = vand.u32 %v4453, 4294901760
        %4455 = vmatprep.subr.mxu0 %v4454
        %v4456 = vand.u32 %v3292, 4294901760
        %v4457 = vsub.f32 %v3292, %v4456
        %v4458 = vand.u32 %v4457, 4294901760
        %4459 = vmatpush1.msra.mxu0 %v4458
        %v4460 = vand.u32 %v3295, 4294901760
        %v4461 = vsub.f32 %v3295, %v4460
        %v4462 = vand.u32 %v4461, 4294901760
        %4463 = vmatprep.subr.mxu0 %v4462
        %v4464 = vand.u32 %v3294, 4294901760
        %v4465 = vsub.f32 %v3294, %v4464
        %v4466 = vand.u32 %v4465, 4294901760
        %4467 = vmatpush1.msra.mxu0 %v4466
        %v4468 = vand.u32 %v3297, 4294901760
        %v4469 = vsub.f32 %v3297, %v4468
        %v4470 = vand.u32 %v4469, 4294901760
        %4471 = vmatprep.subr.mxu0 %v4470
        %v4472 = vand.u32 %v3296, 4294901760
        %v4473 = vsub.f32 %v3296, %v4472
        %v4474 = vand.u32 %v4473, 4294901760
        %4475 = vmatpush1.msra.mxu0 %v4474
        %v4476 = vand.u32 %v3299, 4294901760
        %v4477 = vsub.f32 %v3299, %v4476
        %v4478 = vand.u32 %v4477, 4294901760
        %4479 = vmatprep.subr.mxu0 %v4478
        %v4480 = vand.u32 %v3298, 4294901760
        %v4481 = vsub.f32 %v3298, %v4480
        %v4482 = vand.u32 %v4481, 4294901760
        %4483 = vmatpush1.msra.mxu0 %v4482
        %v4484 = vand.u32 %v3229, 4294901760
        %4485 = vmatprep.mubr.f32.mxu0 %v4484
        %v4486 = vand.u32 %v3228, 4294901760
        %4487 = vmatmul.mubr.f32.gmra.mrb[0].mxu0 %v4486
        %v4488 = vpop.f32.mrb[0].mxu0
        %v4489 = vadd.f32 %v4212, %v4488
        %v4490 = vpop.f32.mrb[0].mxu0
        %v4491 = vadd.f32 %v4214, %v4490
        %v4492 = vand.u32 %v3231, 4294901760
        %4493 = vmatprep.mubr.f32.mxu0 %v4492
        %v4494 = vand.u32 %v3230, 4294901760
        %4495 = vmatmul.mubr.f32.gmra.mrb[0].mxu0 %v4494
        %v4496 = vpop.f32.mrb[0].mxu0
        %v4497 = vadd.f32 %v4224, %v4496
        %v4498 = vpop.f32.mrb[0].mxu0
        %v4499 = vadd.f32 %v4226, %v4498
        %4500 = vdwg.mxu0
        %v4501 = vand.u32 %v3237, 4294901760
        %4502 = vmatprep.subr.mxu0 %v4501
        %v4503 = vand.u32 %v3236, 4294901760
        %4504 = vmatpush1.msra.mxu0 %v4503
        %v4505 = vand.u32 %v3239, 4294901760
        %4506 = vmatprep.subr.mxu0 %v4505
        %v4507 = vand.u32 %v3238, 4294901760
        %4508 = vmatpush1.msra.mxu0 %v4507
        %v4509 = vand.u32 %v3241, 4294901760
        %4510 = vmatprep.subr.mxu0 %v4509
        %v4511 = vand.u32 %v3240, 4294901760
        %4512 = vmatpush1.msra.mxu0 %v4511
        %v4513 = vand.u32 %v3243, 4294901760
        %4514 = vmatprep.subr.mxu0 %v4513
        %v4515 = vand.u32 %v3242, 4294901760
        %4516 = vmatpush1.msra.mxu0 %v4515
        %v4517 = vand.u32 %v3245, 4294901760
        %4518 = vmatprep.subr.mxu0 %v4517
        %v4519 = vand.u32 %v3244, 4294901760
        %4520 = vmatpush1.msra.mxu0 %v4519
        %v4521 = vand.u32 %v3247, 4294901760
        %4522 = vmatprep.subr.mxu0 %v4521
        %v4523 = vand.u32 %v3246, 4294901760
        %4524 = vmatpush1.msra.mxu0 %v4523
        %v4525 = vand.u32 %v3249, 4294901760
        %4526 = vmatprep.subr.mxu0 %v4525
        %v4527 = vand.u32 %v3248, 4294901760
        %4528 = vmatpush1.msra.mxu0 %v4527
        %v4529 = vand.u32 %v3251, 4294901760
        %4530 = vmatprep.subr.mxu0 %v4529
        %v4531 = vand.u32 %v3250, 4294901760
        %4532 = vmatpush1.msra.mxu0 %v4531
        %v4533 = vand.u32 %v3253, 4294901760
        %4534 = vmatprep.subr.mxu0 %v4533
        %v4535 = vand.u32 %v3252, 4294901760
        %4536 = vmatpush1.msra.mxu0 %v4535
        %v4537 = vand.u32 %v3255, 4294901760
        %4538 = vmatprep.subr.mxu0 %v4537
        %v4539 = vand.u32 %v3254, 4294901760
        %4540 = vmatpush1.msra.mxu0 %v4539
        %v4541 = vand.u32 %v3257, 4294901760
        %4542 = vmatprep.subr.mxu0 %v4541
        %v4543 = vand.u32 %v3256, 4294901760
        %4544 = vmatpush1.msra.mxu0 %v4543
        %v4545 = vand.u32 %v3259, 4294901760
        %4546 = vmatprep.subr.mxu0 %v4545
        %v4547 = vand.u32 %v3258, 4294901760
        %4548 = vmatpush1.msra.mxu0 %v4547
        %v4549 = vand.u32 %v3261, 4294901760
        %4550 = vmatprep.subr.mxu0 %v4549
        %v4551 = vand.u32 %v3260, 4294901760
        %4552 = vmatpush1.msra.mxu0 %v4551
        %v4553 = vand.u32 %v3263, 4294901760
        %4554 = vmatprep.subr.mxu0 %v4553
        %v4555 = vand.u32 %v3262, 4294901760
        %4556 = vmatpush1.msra.mxu0 %v4555
        %v4557 = vand.u32 %v3265, 4294901760
        %4558 = vmatprep.subr.mxu0 %v4557
        %v4559 = vand.u32 %v3264, 4294901760
        %4560 = vmatpush1.msra.mxu0 %v4559
        %v4561 = vand.u32 %v3267, 4294901760
        %4562 = vmatprep.subr.mxu0 %v4561
        %v4563 = vand.u32 %v3266, 4294901760
        %4564 = vmatpush1.msra.mxu0 %v4563
        %v4565 = vand.u32 %v3269, 4294901760
        %4566 = vmatprep.subr.mxu0 %v4565
        %v4567 = vand.u32 %v3268, 4294901760
        %4568 = vmatpush1.msra.mxu0 %v4567
        %v4569 = vand.u32 %v3271, 4294901760
        %4570 = vmatprep.subr.mxu0 %v4569
        %v4571 = vand.u32 %v3270, 4294901760
        %4572 = vmatpush1.msra.mxu0 %v4571
        %v4573 = vand.u32 %v3273, 4294901760
        %4574 = vmatprep.subr.mxu0 %v4573
        %v4575 = vand.u32 %v3272, 4294901760
        %4576 = vmatpush1.msra.mxu0 %v4575
        %v4577 = vand.u32 %v3275, 4294901760
        %4578 = vmatprep.subr.mxu0 %v4577
        %v4579 = vand.u32 %v3274, 4294901760
        %4580 = vmatpush1.msra.mxu0 %v4579
        %v4581 = vand.u32 %v3277, 4294901760
        %4582 = vmatprep.subr.mxu0 %v4581
        %v4583 = vand.u32 %v3276, 4294901760
        %4584 = vmatpush1.msra.mxu0 %v4583
        %v4585 = vand.u32 %v3279, 4294901760
        %4586 = vmatprep.subr.mxu0 %v4585
        %v4587 = vand.u32 %v3278, 4294901760
        %4588 = vmatpush1.msra.mxu0 %v4587
        %v4589 = vand.u32 %v3281, 4294901760
        %4590 = vmatprep.subr.mxu0 %v4589
        %v4591 = vand.u32 %v3280, 4294901760
        %4592 = vmatpush1.msra.mxu0 %v4591
        %v4593 = vand.u32 %v3283, 4294901760
        %4594 = vmatprep.subr.mxu0 %v4593
        %v4595 = vand.u32 %v3282, 4294901760
        %4596 = vmatpush1.msra.mxu0 %v4595
        %v4597 = vand.u32 %v3285, 4294901760
        %4598 = vmatprep.subr.mxu0 %v4597
        %v4599 = vand.u32 %v3284, 4294901760
        %4600 = vmatpush1.msra.mxu0 %v4599
        %v4601 = vand.u32 %v3287, 4294901760
        %4602 = vmatprep.subr.mxu0 %v4601
        %v4603 = vand.u32 %v3286, 4294901760
        %4604 = vmatpush1.msra.mxu0 %v4603
        %v4605 = vand.u32 %v3289, 4294901760
        %4606 = vmatprep.subr.mxu0 %v4605
        %v4607 = vand.u32 %v3288, 4294901760
        %4608 = vmatpush1.msra.mxu0 %v4607
        %v4609 = vand.u32 %v3291, 4294901760
        %4610 = vmatprep.subr.mxu0 %v4609
        %v4611 = vand.u32 %v3290, 4294901760
        %4612 = vmatpush1.msra.mxu0 %v4611
        %v4613 = vand.u32 %v3293, 4294901760
        %4614 = vmatprep.subr.mxu0 %v4613
        %v4615 = vand.u32 %v3292, 4294901760
        %4616 = vmatpush1.msra.mxu0 %v4615
        %v4617 = vand.u32 %v3295, 4294901760
        %4618 = vmatprep.subr.mxu0 %v4617
        %v4619 = vand.u32 %v3294, 4294901760
        %4620 = vmatpush1.msra.mxu0 %v4619
        %v4621 = vand.u32 %v3297, 4294901760
        %4622 = vmatprep.subr.mxu0 %v4621
        %v4623 = vand.u32 %v3296, 4294901760
        %4624 = vmatpush1.msra.mxu0 %v4623
        %v4625 = vand.u32 %v3299, 4294901760
        %4626 = vmatprep.subr.mxu0 %v4625
        %v4627 = vand.u32 %v3298, 4294901760
        %4628 = vmatpush1.msra.mxu0 %v4627
        %v4629 = vand.u32 %v3229, 4294901760
        %4630 = vmatprep.mubr.f32.mxu0 %v4629
        %v4631 = vand.u32 %v3228, 4294901760
        %4632 = vmatmul.mubr.f32.gmra.mrb[0].mxu0 %v4631
        %v4633 = vpop.f32.mrb[0].mxu0
        %v4634 = vadd.f32 %v4489, %v4633
        %v4635 = vpop.f32.mrb[0].mxu0
        %v4636 = vadd.f32 %v4491, %v4635
        %v4637 = vand.u32 %v3231, 4294901760
        %4638 = vmatprep.mubr.f32.mxu0 %v4637
        %v4639 = vand.u32 %v3230, 4294901760
        %4640 = vmatmul.mubr.f32.gmra.mrb[0].mxu0 %v4639
        %v4641 = vpop.f32.mrb[0].mxu0
        %v4642 = vadd.f32 %v4497, %v4641
        %v4643 = vpop.f32.mrb[0].mxu0
        %v4644 = vadd.f32 %v4499, %v4643
        %4645 = vdwg.mxu0
        %v4646 = vadd.f32 %v3232, %v4634
        %v4647 = vadd.f32 %v3233, %v4636
        %v4648 = vadd.f32 %v3234, %v4642
        %v4649 = vadd.f32 %v3235, %v4644
        %4650 = vst [vmem:[#allocation2] sm:$0xff] %v4646
        %4651 = vst [vmem:[#allocation2 + $0x8] sm:$0xff] %v4647
        %4652 = vst [vmem:[#allocation2 + $0x10] sm:$0xff] %v4648
        %4653 = vst [vmem:[#allocation2 + $0x18] sm:$0xff] %v4649
        // Predicated region
        $region57: #{_mlp_call.1} parent=35 // pred_check
          %p4654 = pneg %p368
        $region58: #{_mlp_call.1} parent=35 // pred_check_branch
          %4656 = sbr.rel (%p4654) target = $region60
        $region59: #{_mlp_call.1} parent=35 // pred_region
          %v4657 = vld [vmem:[#allocation2] sm:$0xff]
          %v4658 = vld [vmem:[#allocation2 + $0x8] sm:$0xff]
          %v4659 = vld [vmem:[#allocation2 + $0x10] sm:$0xff]
          %v4660 = vld [vmem:[#allocation2 + $0x18] sm:$0xff]
          %4661 = vst [vmem:[%s366] sm:$0xff] %v4657
          %4662 = vst [vmem:[%s366 + $0x8] sm:$0xff] %v4658
          %4663 = vst [vmem:[%s366 + $0x10] sm:$0xff] %v4659
          %4664 = vst [vmem:[%s366 + $0x18] sm:$0xff] %v4660
        $region60: #{_mlp_call.1} parent=35 // pred_fallthru
          _
        %s4665 = smul.u32 2, %s28
        %p4666 = scmp.lt.s32.totalorder %s27, 1
        %s4667 = scalar_select %p4666, %s27, 1
        %p4668 = scmp.lt.s32.totalorder %s4665, 1
        %s4669 = scalar_select %p4668, %s4665, 1
        %s4670 = smul.addr %s4669, 2
        %s4671 = smul.addr %s4667, 4
        %s4672 = sadd.s32 %s4670, %s4671
        %s4673 = smul.addr %s4672, 8
        %s4674 = scalar_lea.vmem %s4, %s4673
        // Predicated region
        $region61: #{_mlp_call.1} parent=35 // pred_check
          %p4675 = pneg %p171
        $region62: #{_mlp_call.1} parent=35 // pred_check_branch
          %4677 = sbr.rel (%p4675) target = $region64
        $region63: #{_mlp_call.1} parent=35 // pred_region
          %s4678 = smul.u32 2, %s28
        $region64: #{_mlp_call.1} parent=35 // pred_fallthru
          _
      $region36: #{_mlp_call.1} parent=5 // pred_fallthru
        _
      %p4679 = scmp.le.s32.totalorder 2, %s17
      // Predicated region
      $region65: #{_mlp_call.1} parent=5 // pred_check
        %p4680 = pneg %p4679
      $region66: #{_mlp_call.1} parent=5 // pred_check_branch
        %4682 = sbr.rel (%p4680) target = $region68
      $region67: #{_mlp_call.1} parent=5 // pred_region
        %s4683 = ssub.s32 %s17, 2
        // Predicated region
        $region69: #{_mlp_call.1} parent=67 // pred_check
          %p4684 = pneg %p177
        $region70: #{_mlp_call.1} parent=67 // pred_check_branch
          %4686 = sbr.rel (%p4684) target = $region72
        $region71: #{_mlp_call.1} parent=67 // pred_region
          %s4687 = smul.u32 2, %s31
          %p4688 = scmp.lt.s32.totalorder %s30, 1
          %s4689 = scalar_select %p4688, %s30, 1
          %p4690 = scmp.lt.s32.totalorder %s4687, 1
          %s4691 = scalar_select %p4690, %s4687, 1
          %s4692 = smul.addr %s4691, 2
          %s4693 = smul.addr %s4689, 4
          %s4694 = sadd.s32 %s4692, %s4693
          %s4695 = smul.addr %s4694, 8
          %s4696 = scalar_lea.vmem %s4, %s4695
        $region72: #{_mlp_call.1} parent=67 // pred_fallthru
          _
      $region68: #{_mlp_call.1} parent=5 // pred_fallthru
        _
    $region6: #{_mlp_call.1} parent=1 // loop_footer
      %s21 = sadd.s32 1, %s17
    $region7: #{_mlp_call.1} parent=1 // loop_footer_branch
      %16 = sbr.rel target = $region3
    $region8: #{_mlp_call.1} parent=1 // loop_exit
      _
    %4697 = vsyncpa [#allocation4], 1
    %s4698 = scalar_lea.sflag [#allocation4], 1
    %4699 = vsyncpa %s4698, 1
    %4700 = vsyncpa [#allocation6], 1
    %s4701 = scalar_lea.sflag [#allocation6], 1
    %4702 = vsyncpa %s4701, 1
    %4703 = vsyncpa [#allocation9], 1
    %s4704 = scalar_lea.sflag [#allocation9], 1
    %4705 = vsyncpa %s4704, 1

</llo_original>
